<compile_context>
chip_gen: v7x
topology: tpu7x:2x2x1
jax: 0.10.0
libtpu: 0.0.40
codegen_flags: <defaults>
</compile_context>

<pallas_src>
import functools
import math

import jax
import jax.numpy as jnp
from jax import lax
from jax.experimental import pallas as pl
from jax.experimental.pallas import tpu as pltpu


def _dwconv_kernel(x_ref, p_ref, o_ref, *, gs):
    """One (batch, channel-tile) block of the grouped 3x3 conv.

    x_ref: (1, H, W, CT) NHWC input block
    p_ref: (P, CT) packed params; rows [d, kh, kw] -> di*9 + kh*3 + kw, last row = bias
    o_ref: (1, H, W, CT) output block
    """
    x = x_ref[0]                              # (H, W, CT)
    H, W, CT = x.shape
    nd = 2 * gs - 1                           # channel offsets d in [-(gs-1), gs-1]

    # Index along the W (sublane) axis, used to zero the wrapped column of rolls.
    w_idx = lax.broadcasted_iota(jnp.int32, (H, W, CT), 1)

    # Start from the bias (lane-resident row broadcast across H and W).
    acc = jnp.zeros((H, W, CT), jnp.float32) + p_ref[nd * 9][None, None, :]

    zero_row = jnp.zeros((1, W, CT), jnp.float32)

    for kh in range(3):
        dh = kh - 1
        for kw in range(3):
            dw = kw - 1

            # ---- within-group channel mix for this tap (lane rolls, VPU mads) ----
            # mixed[..., co] = sum_d wd[d,kh,kw,co] * x[..., co + d]
            # wd is zero whenever co+d falls outside co's group, so circular
            # wrap of the roll never contributes.
            mixed = jnp.zeros((H, W, CT), jnp.float32)
            for di in range(nd):
                d = di - (gs - 1)
                wrow = p_ref[di * 9 + kh * 3 + kw][None, None, :]     # (1, 1, CT)
                xd = x if d == 0 else pltpu.roll(x, shift=(-d) % CT, axis=2)
                mixed = mixed + wrow * xd

            # ---- spatial shift along W (sublane roll + boundary mask) ----
            if dw != 0:
                mixed = pltpu.roll(mixed, shift=(-dw) % W, axis=1)
                if dw > 0:
                    mixed = jnp.where(w_idx >= W - dw, 0.0, mixed)
                else:
                    mixed = jnp.where(w_idx < -dw, 0.0, mixed)

            # ---- spatial shift along H (leading axis: slice + concat, free) ----
            if dh > 0:
                mixed = jnp.concatenate([mixed[dh:], zero_row], axis=0)
            elif dh < 0:
                mixed = jnp.concatenate([zero_row, mixed[:dh]], axis=0)

            acc = acc + mixed

    o_ref[0] = acc


def _pack_params(weight, bias, gs):
    """Pack Conv2d weight (C, gs, 3, 3) + bias (C,) into one lane-dense (P, C) array.

    Row di*9 + kh*3 + kw holds, for every output channel co,
        weight[co, (co % gs) + d, kh, kw]   with d = di - (gs - 1),
    zero-padded when (co % gs) + d is outside [0, gs). The last row is the bias.
    """
    C = weight.shape[0]
    nd = 2 * gs - 1
    co = jnp.arange(C)
    r = co % gs
    rows = []
    for d in range(-(gs - 1), gs):
        i = r + d
        valid = (i >= 0) & (i < gs)
        i_cl = jnp.clip(i, 0, gs - 1)
        wd = weight[co, i_cl]                                  # (C, 3, 3)
        wd = jnp.where(valid[:, None, None], wd, 0.0)
        rows.append(wd)
    wd = jnp.stack(rows, axis=0)                               # (nd, C, 3, 3)
    wd = jnp.transpose(wd, (0, 2, 3, 1)).reshape(nd * 9, C)    # (nd*9, C)
    return jnp.concatenate([wd, bias[None, :]], axis=0).astype(jnp.float32)


def _pick_channel_tile(C, gs, H, W, target_block_bytes=8 * 1024 * 1024):
    """Largest channel tile that divides C, keeps whole conv groups together,
    is lane-aligned (multiple of 128 unless it is the full C), and keeps one
    (H, W, tile) f32 block under the byte budget."""
    if C % 128 != 0:
        return C
    step = (128 * gs) // math.gcd(128, gs)        # lcm(128, gs)
    if C % step != 0:
        return C
    budget = max(step, (target_block_bytes // (H * W * 4)) // step * step)
    best = step
    ct = step
    while ct <= min(C, budget):
        if C % ct == 0:
            best = ct
        ct += step
    return best


def dwconv_forward(x, weight, bias, *, group_num, channel_tile=None):
    """DWConv forward: grouped 3x3 conv, stride 1, padding 1, bias.

    x:      (B, C, H, W) float32 (NCHW, PyTorch layout)
    weight: (C, group_num, 3, 3) float32  (Conv2d weight, groups = C // group_num)
    bias:   (C,) float32
    returns (B, C, H, W) float32
    """
    B, C, H, W = x.shape
    gs = int(group_num)
    assert C % gs == 0, "channels must be divisible by group_num"
    assert weight.shape == (C, gs, 3, 3)
    assert bias.shape == (C,)

    ct = channel_tile if channel_tile is not None else _pick_channel_tile(C, gs, H, W)
    assert C % ct == 0 and ct % gs == 0
    assert ct == C or ct % 128 == 0, "channel tile must be a multiple of 128 or the full C"

    params = _pack_params(weight, bias, gs)             # (P, C)
    P = params.shape[0]

    # Wrapper-side layout plumbing: channels -> lane axis (lane-dense in/out).
    x_nhwc = jnp.transpose(x, (0, 2, 3, 1))             # (B, H, W, C)

    block_bytes = H * W * ct * 4
    vmem_limit = int(min(100 * 1024 * 1024, max(32 * 1024 * 1024, 6 * block_bytes)))

    out_nhwc = pl.pallas_call(
        functools.partial(_dwconv_kernel, gs=gs),
        out_shape=jax.ShapeDtypeStruct((B, H, W, C), jnp.float32),
        grid=(B, C // ct),
        in_specs=[
            pl.BlockSpec((1, H, W, ct), lambda b, c: (b, 0, 0, c)),
            pl.BlockSpec((P, ct), lambda b, c: (0, c)),
        ],
        out_specs=pl.BlockSpec((1, H, W, ct), lambda b, c: (b, 0, 0, c)),
        compiler_params=pltpu.CompilerParams(
            dimension_semantics=("parallel", "parallel"),
            vmem_limit_bytes=vmem_limit,
        ),
    )(x_nhwc, params)

    return jnp.transpose(out_nhwc, (0, 3, 1, 2))


def reference(x, weight, bias, group_num):
    """Pure-JAX reference mirroring nn.Conv2d(C, C, 3, 1, 1, groups=C//group_num)."""
    B, C, H, W = x.shape
    gs = group_num
    xp = jnp.pad(x, ((0, 0), (0, 0), (1, 1), (1, 1)))
    co = jnp.arange(C)
    base = (co // gs) * gs
    out = jnp.zeros((B, C, H, W), jnp.float32) + bias[None, :, None, None]
    for kh in range(3):
        for kw in range(3):
            win = xp[:, :, kh:kh + H, kw:kw + W]
            for i in range(gs):
                out = out + weight[:, i, kh, kw][None, :, None, None] * win[:, base + i]
    return out


if __name__ == "__main__":
    key = jax.random.PRNGKey(0)
    kx, kwt, kb = jax.random.split(key, 3)

    B, C, H, W = 2, 256, 16, 16
    group_num = 4                                # groups = C // group_num = 64
    x = jax.random.normal(kx, (B, C, H, W), jnp.float32)
    weight = 0.2 * jax.random.normal(kwt, (C, group_num, 3, 3), jnp.float32)
    bias = 0.1 * jax.random.normal(kb, (C,), jnp.float32)

    # channel_tile=128 -> grid (B, 2): exercises the channel-tiled, lane-dense path.
    out = jax.block_until_ready(
        dwconv_forward(x, weight, bias, group_num=group_num, channel_tile=128))

    ref = reference(x, weight, bias, group_num)
    assert out.shape == (B, C, H, W)
    err = float(jnp.max(jnp.abs(out - ref)))
    assert bool(jnp.allclose(out, ref, atol=1e-5, rtol=1e-5)), err

    print("KERNEL_OK")
</pallas_src>

<mosaic_0001>
module attributes {stable_mosaic.version = 11 : i64} {
  func.func @_dwconv_kernel(%arg0: i32, %arg1: i32, %arg2: memref<1x16x16x128xf32, #tpu.memory_space<vmem>>, %arg3: memref<64x128xf32, #tpu.memory_space<vmem>>, %arg4: memref<1x16x16x128xf32, #tpu.memory_space<vmem>>) attributes {dimension_semantics = [#tpu.dimension_semantics<parallel>, #tpu.dimension_semantics<parallel>], iteration_bounds = array<i64: 2, 2>, scalar_prefetch = 0 : i64, scratch_operands = 0 : i64, tpu.core_type = #tpu.core_type<tc>, window_params = [{transform_indices = @transform_0, window_bounds = array<i64: 1, 16, 16, 128>}, {transform_indices = @transform_1, window_bounds = array<i64: 64, 128>}, {transform_indices = @transform_2, window_bounds = array<i64: 1, 16, 16, 128>}]} {
    %c0 = arith.constant 0 : index
    %c0_0 = arith.constant 0 : index
    %c0_1 = arith.constant 0 : index
    %c0_2 = arith.constant 0 : index
    %0 = vector.load %arg2[%c0, %c0_0, %c0_1, %c0_2] : memref<1x16x16x128xf32, #tpu.memory_space<vmem>>, vector<1x16x16x128xf32>
    %1 = vector.shape_cast %0 : vector<1x16x16x128xf32> to vector<16x16x128xf32>
    %2 = tpu.iota {dimensions = array<i32: 1>} : vector<16x16x128xi32>
    %cst = arith.constant 0.000000e+00 : f32
    %3 = vector.broadcast %cst : f32 to vector<16x16x128xf32>
    %c63 = arith.constant 63 : index
    %c0_3 = arith.constant 0 : index
    %4 = vector.load %arg3[%c63, %c0_3] : memref<64x128xf32, #tpu.memory_space<vmem>>, vector<1x128xf32>
    %5 = vector.shape_cast %4 : vector<1x128xf32> to vector<128xf32>
    %6 = vector.shape_cast %5 : vector<128xf32> to vector<1x1x128xf32>
    %7 = vector.broadcast %6 : vector<1x1x128xf32> to vector<16x16x128xf32>
    %8 = arith.addf %3, %7 : vector<16x16x128xf32>
    %cst_4 = arith.constant 0.000000e+00 : f32
    %9 = vector.broadcast %cst_4 : f32 to vector<1x16x128xf32>
    %cst_5 = arith.constant 0.000000e+00 : f32
    %10 = vector.broadcast %cst_5 : f32 to vector<16x16x128xf32>
    %c0_6 = arith.constant 0 : index
    %c0_7 = arith.constant 0 : index
    %11 = vector.load %arg3[%c0_6, %c0_7] : memref<64x128xf32, #tpu.memory_space<vmem>>, vector<1x128xf32>
    %12 = vector.shape_cast %11 : vector<1x128xf32> to vector<128xf32>
    %13 = vector.shape_cast %12 : vector<128xf32> to vector<1x1x128xf32>
    %c3_i32 = arith.constant 3 : i32
    %14 = tpu.dynamic_rotate %1 by %c3_i32 dim 2 : vector<16x16x128xf32>, i32 -> vector<16x16x128xf32>
    %15 = vector.broadcast %13 : vector<1x1x128xf32> to vector<16x16x128xf32>
    %16 = arith.mulf %15, %14 : vector<16x16x128xf32>
    %17 = arith.addf %10, %16 : vector<16x16x128xf32>
    %c9 = arith.constant 9 : index
    %c0_8 = arith.constant 0 : index
    %18 = vector.load %arg3[%c9, %c0_8] : memref<64x128xf32, #tpu.memory_space<vmem>>, vector<1x128xf32>
    %19 = vector.shape_cast %18 : vector<1x128xf32> to vector<128xf32>
    %20 = vector.shape_cast %19 : vector<128xf32> to vector<1x1x128xf32>
    %c2_i32 = arith.constant 2 : i32
    %21 = tpu.dynamic_rotate %1 by %c2_i32 dim 2 : vector<16x16x128xf32>, i32 -> vector<16x16x128xf32>
    %22 = vector.broadcast %20 : vector<1x1x128xf32> to vector<16x16x128xf32>
    %23 = arith.mulf %22, %21 : vector<16x16x128xf32>
    %24 = arith.addf %17, %23 : vector<16x16x128xf32>
    %c18 = arith.constant 18 : index
    %c0_9 = arith.constant 0 : index
    %25 = vector.load %arg3[%c18, %c0_9] : memref<64x128xf32, #tpu.memory_space<vmem>>, vector<1x128xf32>
    %26 = vector.shape_cast %25 : vector<1x128xf32> to vector<128xf32>
    %27 = vector.shape_cast %26 : vector<128xf32> to vector<1x1x128xf32>
    %c1_i32 = arith.constant 1 : i32
    %28 = tpu.dynamic_rotate %1 by %c1_i32 dim 2 : vector<16x16x128xf32>, i32 -> vector<16x16x128xf32>
    %29 = vector.broadcast %27 : vector<1x1x128xf32> to vector<16x16x128xf32>
    %30 = arith.mulf %29, %28 : vector<16x16x128xf32>
    %31 = arith.addf %24, %30 : vector<16x16x128xf32>
    %c27 = arith.constant 27 : index
    %c0_10 = arith.constant 0 : index
    %32 = vector.load %arg3[%c27, %c0_10] : memref<64x128xf32, #tpu.memory_space<vmem>>, vector<1x128xf32>
    %33 = vector.shape_cast %32 : vector<1x128xf32> to vector<128xf32>
    %34 = vector.shape_cast %33 : vector<128xf32> to vector<1x1x128xf32>
    %35 = vector.broadcast %34 : vector<1x1x128xf32> to vector<16x16x128xf32>
    %36 = arith.mulf %35, %1 : vector<16x16x128xf32>
    %37 = arith.addf %31, %36 : vector<16x16x128xf32>
    %c36 = arith.constant 36 : index
    %c0_11 = arith.constant 0 : index
    %38 = vector.load %arg3[%c36, %c0_11] : memref<64x128xf32, #tpu.memory_space<vmem>>, vector<1x128xf32>
    %39 = vector.shape_cast %38 : vector<1x128xf32> to vector<128xf32>
    %40 = vector.shape_cast %39 : vector<128xf32> to vector<1x1x128xf32>
    %c127_i32 = arith.constant 127 : i32
    %41 = tpu.dynamic_rotate %1 by %c127_i32 dim 2 : vector<16x16x128xf32>, i32 -> vector<16x16x128xf32>
    %42 = vector.broadcast %40 : vector<1x1x128xf32> to vector<16x16x128xf32>
    %43 = arith.mulf %42, %41 : vector<16x16x128xf32>
    %44 = arith.addf %37, %43 : vector<16x16x128xf32>
    %c45 = arith.constant 45 : index
    %c0_12 = arith.constant 0 : index
    %45 = vector.load %arg3[%c45, %c0_12] : memref<64x128xf32, #tpu.memory_space<vmem>>, vector<1x128xf32>
    %46 = vector.shape_cast %45 : vector<1x128xf32> to vector<128xf32>
    %47 = vector.shape_cast %46 : vector<128xf32> to vector<1x1x128xf32>
    %c126_i32 = arith.constant 126 : i32
    %48 = tpu.dynamic_rotate %1 by %c126_i32 dim 2 : vector<16x16x128xf32>, i32 -> vector<16x16x128xf32>
    %49 = vector.broadcast %47 : vector<1x1x128xf32> to vector<16x16x128xf32>
    %50 = arith.mulf %49, %48 : vector<16x16x128xf32>
    %51 = arith.addf %44, %50 : vector<16x16x128xf32>
    %c54 = arith.constant 54 : index
    %c0_13 = arith.constant 0 : index
    %52 = vector.load %arg3[%c54, %c0_13] : memref<64x128xf32, #tpu.memory_space<vmem>>, vector<1x128xf32>
    %53 = vector.shape_cast %52 : vector<1x128xf32> to vector<128xf32>
    %54 = vector.shape_cast %53 : vector<128xf32> to vector<1x1x128xf32>
    %c125_i32 = arith.constant 125 : i32
    %55 = tpu.dynamic_rotate %1 by %c125_i32 dim 2 : vector<16x16x128xf32>, i32 -> vector<16x16x128xf32>
    %56 = vector.broadcast %54 : vector<1x1x128xf32> to vector<16x16x128xf32>
    %57 = arith.mulf %56, %55 : vector<16x16x128xf32>
    %58 = arith.addf %51, %57 : vector<16x16x128xf32>
    %c1_i32_14 = arith.constant 1 : i32
    %59 = tpu.dynamic_rotate %58 by %c1_i32_14 dim 1 : vector<16x16x128xf32>, i32 -> vector<16x16x128xf32>
    %c1_i32_15 = arith.constant 1 : i32
    %60 = vector.broadcast %c1_i32_15 : i32 to vector<16x16x128xi32>
    %61 = arith.cmpi slt, %2, %60 : vector<16x16x128xi32>
    %cst_16 = arith.constant 0.000000e+00 : f32
    %62 = vector.broadcast %cst_16 : f32 to vector<16x16x128xf32>
    %63 = arith.select %61, %62, %59 : vector<16x16x128xi1>, vector<16x16x128xf32>
    %64 = vector.extract_strided_slice %63 {offsets = [0, 0, 0], sizes = [15, 16, 128], strides = [1, 1, 1]} : vector<16x16x128xf32> to vector<15x16x128xf32>
    %65 = tpu.concatenate %9, %64 in 0 : vector<1x16x128xf32>, vector<15x16x128xf32> -> vector<16x16x128xf32>
    %66 = arith.addf %8, %65 : vector<16x16x128xf32>
    %cst_17 = arith.constant 0.000000e+00 : f32
    %67 = vector.broadcast %cst_17 : f32 to vector<16x16x128xf32>
    %c1 = arith.constant 1 : index
    %c0_18 = arith.constant 0 : index
    %68 = vector.load %arg3[%c1, %c0_18] : memref<64x128xf32, #tpu.memory_space<vmem>>, vector<1x128xf32>
    %69 = vector.shape_cast %68 : vector<1x128xf32> to vector<128xf32>
    %70 = vector.shape_cast %69 : vector<128xf32> to vector<1x1x128xf32>
    %c3_i32_19 = arith.constant 3 : i32
    %71 = tpu.dynamic_rotate %1 by %c3_i32_19 dim 2 : vector<16x16x128xf32>, i32 -> vector<16x16x128xf32>
    %72 = vector.broadcast %70 : vector<1x1x128xf32> to vector<16x16x128xf32>
    %73 = arith.mulf %72, %71 : vector<16x16x128xf32>
    %74 = arith.addf %67, %73 : vector<16x16x128xf32>
    %c10 = arith.constant 10 : index
    %c0_20 = arith.constant 0 : index
    %75 = vector.load %arg3[%c10, %c0_20] : memref<64x128xf32, #tpu.memory_space<vmem>>, vector<1x128xf32>
    %76 = vector.shape_cast %75 : vector<1x128xf32> to vector<128xf32>
    %77 = vector.shape_cast %76 : vector<128xf32> to vector<1x1x128xf32>
    %c2_i32_21 = arith.constant 2 : i32
    %78 = tpu.dynamic_rotate %1 by %c2_i32_21 dim 2 : vector<16x16x128xf32>, i32 -> vector<16x16x128xf32>
    %79 = vector.broadcast %77 : vector<1x1x128xf32> to vector<16x16x128xf32>
    %80 = arith.mulf %79, %78 : vector<16x16x128xf32>
    %81 = arith.addf %74, %80 : vector<16x16x128xf32>
    %c19 = arith.constant 19 : index
    %c0_22 = arith.constant 0 : index
    %82 = vector.load %arg3[%c19, %c0_22] : memref<64x128xf32, #tpu.memory_space<vmem>>, vector<1x128xf32>
    %83 = vector.shape_cast %82 : vector<1x128xf32> to vector<128xf32>
    %84 = vector.shape_cast %83 : vector<128xf32> to vector<1x1x128xf32>
    %c1_i32_23 = arith.constant 1 : i32
    %85 = tpu.dynamic_rotate %1 by %c1_i32_23 dim 2 : vector<16x16x128xf32>, i32 -> vector<16x16x128xf32>
    %86 = vector.broadcast %84 : vector<1x1x128xf32> to vector<16x16x128xf32>
    %87 = arith.mulf %86, %85 : vector<16x16x128xf32>
    %88 = arith.addf %81, %87 : vector<16x16x128xf32>
    %c28 = arith.constant 28 : index
    %c0_24 = arith.constant 0 : index
    %89 = vector.load %arg3[%c28, %c0_24] : memref<64x128xf32, #tpu.memory_space<vmem>>, vector<1x128xf32>
    %90 = vector.shape_cast %89 : vector<1x128xf32> to vector<128xf32>
    %91 = vector.shape_cast %90 : vector<128xf32> to vector<1x1x128xf32>
    %92 = vector.broadcast %91 : vector<1x1x128xf32> to vector<16x16x128xf32>
    %93 = arith.mulf %92, %1 : vector<16x16x128xf32>
    %94 = arith.addf %88, %93 : vector<16x16x128xf32>
    %c37 = arith.constant 37 : index
    %c0_25 = arith.constant 0 : index
    %95 = vector.load %arg3[%c37, %c0_25] : memref<64x128xf32, #tpu.memory_space<vmem>>, vector<1x128xf32>
    %96 = vector.shape_cast %95 : vector<1x128xf32> to vector<128xf32>
    %97 = vector.shape_cast %96 : vector<128xf32> to vector<1x1x128xf32>
    %c127_i32_26 = arith.constant 127 : i32
    %98 = tpu.dynamic_rotate %1 by %c127_i32_26 dim 2 : vector<16x16x128xf32>, i32 -> vector<16x16x128xf32>
    %99 = vector.broadcast %97 : vector<1x1x128xf32> to vector<16x16x128xf32>
    %100 = arith.mulf %99, %98 : vector<16x16x128xf32>
    %101 = arith.addf %94, %100 : vector<16x16x128xf32>
    %c46 = arith.constant 46 : index
    %c0_27 = arith.constant 0 : index
    %102 = vector.load %arg3[%c46, %c0_27] : memref<64x128xf32, #tpu.memory_space<vmem>>, vector<1x128xf32>
    %103 = vector.shape_cast %102 : vector<1x128xf32> to vector<128xf32>
    %104 = vector.shape_cast %103 : vector<128xf32> to vector<1x1x128xf32>
    %c126_i32_28 = arith.constant 126 : i32
    %105 = tpu.dynamic_rotate %1 by %c126_i32_28 dim 2 : vector<16x16x128xf32>, i32 -> vector<16x16x128xf32>
    %106 = vector.broadcast %104 : vector<1x1x128xf32> to vector<16x16x128xf32>
    %107 = arith.mulf %106, %105 : vector<16x16x128xf32>
    %108 = arith.addf %101, %107 : vector<16x16x128xf32>
    %c55 = arith.constant 55 : index
    %c0_29 = arith.constant 0 : index
    %109 = vector.load %arg3[%c55, %c0_29] : memref<64x128xf32, #tpu.memory_space<vmem>>, vector<1x128xf32>
    %110 = vector.shape_cast %109 : vector<1x128xf32> to vector<128xf32>
    %111 = vector.shape_cast %110 : vector<128xf32> to vector<1x1x128xf32>
    %c125_i32_30 = arith.constant 125 : i32
    %112 = tpu.dynamic_rotate %1 by %c125_i32_30 dim 2 : vector<16x16x128xf32>, i32 -> vector<16x16x128xf32>
    %113 = vector.broadcast %111 : vector<1x1x128xf32> to vector<16x16x128xf32>
    %114 = arith.mulf %113, %112 : vector<16x16x128xf32>
    %115 = arith.addf %108, %114 : vector<16x16x128xf32>
    %116 = vector.extract_strided_slice %115 {offsets = [0, 0, 0], sizes = [15, 16, 128], strides = [1, 1, 1]} : vector<16x16x128xf32> to vector<15x16x128xf32>
    %117 = tpu.concatenate %9, %116 in 0 : vector<1x16x128xf32>, vector<15x16x128xf32> -> vector<16x16x128xf32>
    %118 = arith.addf %66, %117 : vector<16x16x128xf32>
    %cst_31 = arith.constant 0.000000e+00 : f32
    %119 = vector.broadcast %cst_31 : f32 to vector<16x16x128xf32>
    %c2 = arith.constant 2 : index
    %c0_32 = arith.constant 0 : index
    %120 = vector.load %arg3[%c2, %c0_32] : memref<64x128xf32, #tpu.memory_space<vmem>>, vector<1x128xf32>
    %121 = vector.shape_cast %120 : vector<1x128xf32> to vector<128xf32>
    %122 = vector.shape_cast %121 : vector<128xf32> to vector<1x1x128xf32>
    %c3_i32_33 = arith.constant 3 : i32
    %123 = tpu.dynamic_rotate %1 by %c3_i32_33 dim 2 : vector<16x16x128xf32>, i32 -> vector<16x16x128xf32>
    %124 = vector.broadcast %122 : vector<1x1x128xf32> to vector<16x16x128xf32>
    %125 = arith.mulf %124, %123 : vector<16x16x128xf32>
    %126 = arith.addf %119, %125 : vector<16x16x128xf32>
    %c11 = arith.constant 11 : index
    %c0_34 = arith.constant 0 : index
    %127 = vector.load %arg3[%c11, %c0_34] : memref<64x128xf32, #tpu.memory_space<vmem>>, vector<1x128xf32>
    %128 = vector.shape_cast %127 : vector<1x128xf32> to vector<128xf32>
    %129 = vector.shape_cast %128 : vector<128xf32> to vector<1x1x128xf32>
    %c2_i32_35 = arith.constant 2 : i32
    %130 = tpu.dynamic_rotate %1 by %c2_i32_35 dim 2 : vector<16x16x128xf32>, i32 -> vector<16x16x128xf32>
    %131 = vector.broadcast %129 : vector<1x1x128xf32> to vector<16x16x128xf32>
    %132 = arith.mulf %131, %130 : vector<16x16x128xf32>
    %133 = arith.addf %126, %132 : vector<16x16x128xf32>
    %c20 = arith.constant 20 : index
    %c0_36 = arith.constant 0 : index
    %134 = vector.load %arg3[%c20, %c0_36] : memref<64x128xf32, #tpu.memory_space<vmem>>, vector<1x128xf32>
    %135 = vector.shape_cast %134 : vector<1x128xf32> to vector<128xf32>
    %136 = vector.shape_cast %135 : vector<128xf32> to vector<1x1x128xf32>
    %c1_i32_37 = arith.constant 1 : i32
    %137 = tpu.dynamic_rotate %1 by %c1_i32_37 dim 2 : vector<16x16x128xf32>, i32 -> vector<16x16x128xf32>
    %138 = vector.broadcast %136 : vector<1x1x128xf32> to vector<16x16x128xf32>
    %139 = arith.mulf %138, %137 : vector<16x16x128xf32>
    %140 = arith.addf %133, %139 : vector<16x16x128xf32>
    %c29 = arith.constant 29 : index
    %c0_38 = arith.constant 0 : index
    %141 = vector.load %arg3[%c29, %c0_38] : memref<64x128xf32, #tpu.memory_space<vmem>>, vector<1x128xf32>
    %142 = vector.shape_cast %141 : vector<1x128xf32> to vector<128xf32>
    %143 = vector.shape_cast %142 : vector<128xf32> to vector<1x1x128xf32>
    %144 = vector.broadcast %143 : vector<1x1x128xf32> to vector<16x16x128xf32>
    %145 = arith.mulf %144, %1 : vector<16x16x128xf32>
    %146 = arith.addf %140, %145 : vector<16x16x128xf32>
    %c38 = arith.constant 38 : index
    %c0_39 = arith.constant 0 : index
    %147 = vector.load %arg3[%c38, %c0_39] : memref<64x128xf32, #tpu.memory_space<vmem>>, vector<1x128xf32>
    %148 = vector.shape_cast %147 : vector<1x128xf32> to vector<128xf32>
    %149 = vector.shape_cast %148 : vector<128xf32> to vector<1x1x128xf32>
    %c127_i32_40 = arith.constant 127 : i32
    %150 = tpu.dynamic_rotate %1 by %c127_i32_40 dim 2 : vector<16x16x128xf32>, i32 -> vector<16x16x128xf32>
    %151 = vector.broadcast %149 : vector<1x1x128xf32> to vector<16x16x128xf32>
    %152 = arith.mulf %151, %150 : vector<16x16x128xf32>
    %153 = arith.addf %146, %152 : vector<16x16x128xf32>
    %c47 = arith.constant 47 : index
    %c0_41 = arith.constant 0 : index
    %154 = vector.load %arg3[%c47, %c0_41] : memref<64x128xf32, #tpu.memory_space<vmem>>, vector<1x128xf32>
    %155 = vector.shape_cast %154 : vector<1x128xf32> to vector<128xf32>
    %156 = vector.shape_cast %155 : vector<128xf32> to vector<1x1x128xf32>
    %c126_i32_42 = arith.constant 126 : i32
    %157 = tpu.dynamic_rotate %1 by %c126_i32_42 dim 2 : vector<16x16x128xf32>, i32 -> vector<16x16x128xf32>
    %158 = vector.broadcast %156 : vector<1x1x128xf32> to vector<16x16x128xf32>
    %159 = arith.mulf %158, %157 : vector<16x16x128xf32>
    %160 = arith.addf %153, %159 : vector<16x16x128xf32>
    %c56 = arith.constant 56 : index
    %c0_43 = arith.constant 0 : index
    %161 = vector.load %arg3[%c56, %c0_43] : memref<64x128xf32, #tpu.memory_space<vmem>>, vector<1x128xf32>
    %162 = vector.shape_cast %161 : vector<1x128xf32> to vector<128xf32>
    %163 = vector.shape_cast %162 : vector<128xf32> to vector<1x1x128xf32>
    %c125_i32_44 = arith.constant 125 : i32
    %164 = tpu.dynamic_rotate %1 by %c125_i32_44 dim 2 : vector<16x16x128xf32>, i32 -> vector<16x16x128xf32>
    %165 = vector.broadcast %163 : vector<1x1x128xf32> to vector<16x16x128xf32>
    %166 = arith.mulf %165, %164 : vector<16x16x128xf32>
    %167 = arith.addf %160, %166 : vector<16x16x128xf32>
    %c15_i32 = arith.constant 15 : i32
    %168 = tpu.dynamic_rotate %167 by %c15_i32 dim 1 : vector<16x16x128xf32>, i32 -> vector<16x16x128xf32>
    %c15_i32_45 = arith.constant 15 : i32
    %169 = vector.broadcast %c15_i32_45 : i32 to vector<16x16x128xi32>
    %170 = arith.cmpi sge, %2, %169 : vector<16x16x128xi32>
    %cst_46 = arith.constant 0.000000e+00 : f32
    %171 = vector.broadcast %cst_46 : f32 to vector<16x16x128xf32>
    %172 = arith.select %170, %171, %168 : vector<16x16x128xi1>, vector<16x16x128xf32>
    %173 = vector.extract_strided_slice %172 {offsets = [0, 0, 0], sizes = [15, 16, 128], strides = [1, 1, 1]} : vector<16x16x128xf32> to vector<15x16x128xf32>
    %174 = tpu.concatenate %9, %173 in 0 : vector<1x16x128xf32>, vector<15x16x128xf32> -> vector<16x16x128xf32>
    %175 = arith.addf %118, %174 : vector<16x16x128xf32>
    %cst_47 = arith.constant 0.000000e+00 : f32
    %176 = vector.broadcast %cst_47 : f32 to vector<16x16x128xf32>
    %c3 = arith.constant 3 : index
    %c0_48 = arith.constant 0 : index
    %177 = vector.load %arg3[%c3, %c0_48] : memref<64x128xf32, #tpu.memory_space<vmem>>, vector<1x128xf32>
    %178 = vector.shape_cast %177 : vector<1x128xf32> to vector<128xf32>
    %179 = vector.shape_cast %178 : vector<128xf32> to vector<1x1x128xf32>
    %c3_i32_49 = arith.constant 3 : i32
    %180 = tpu.dynamic_rotate %1 by %c3_i32_49 dim 2 : vector<16x16x128xf32>, i32 -> vector<16x16x128xf32>
    %181 = vector.broadcast %179 : vector<1x1x128xf32> to vector<16x16x128xf32>
    %182 = arith.mulf %181, %180 : vector<16x16x128xf32>
    %183 = arith.addf %176, %182 : vector<16x16x128xf32>
    %c12 = arith.constant 12 : index
    %c0_50 = arith.constant 0 : index
    %184 = vector.load %arg3[%c12, %c0_50] : memref<64x128xf32, #tpu.memory_space<vmem>>, vector<1x128xf32>
    %185 = vector.shape_cast %184 : vector<1x128xf32> to vector<128xf32>
    %186 = vector.shape_cast %185 : vector<128xf32> to vector<1x1x128xf32>
    %c2_i32_51 = arith.constant 2 : i32
    %187 = tpu.dynamic_rotate %1 by %c2_i32_51 dim 2 : vector<16x16x128xf32>, i32 -> vector<16x16x128xf32>
    %188 = vector.broadcast %186 : vector<1x1x128xf32> to vector<16x16x128xf32>
    %189 = arith.mulf %188, %187 : vector<16x16x128xf32>
    %190 = arith.addf %183, %189 : vector<16x16x128xf32>
    %c21 = arith.constant 21 : index
    %c0_52 = arith.constant 0 : index
    %191 = vector.load %arg3[%c21, %c0_52] : memref<64x128xf32, #tpu.memory_space<vmem>>, vector<1x128xf32>
    %192 = vector.shape_cast %191 : vector<1x128xf32> to vector<128xf32>
    %193 = vector.shape_cast %192 : vector<128xf32> to vector<1x1x128xf32>
    %c1_i32_53 = arith.constant 1 : i32
    %194 = tpu.dynamic_rotate %1 by %c1_i32_53 dim 2 : vector<16x16x128xf32>, i32 -> vector<16x16x128xf32>
    %195 = vector.broadcast %193 : vector<1x1x128xf32> to vector<16x16x128xf32>
    %196 = arith.mulf %195, %194 : vector<16x16x128xf32>
    %197 = arith.addf %190, %196 : vector<16x16x128xf32>
    %c30 = arith.constant 30 : index
    %c0_54 = arith.constant 0 : index
    %198 = vector.load %arg3[%c30, %c0_54] : memref<64x128xf32, #tpu.memory_space<vmem>>, vector<1x128xf32>
    %199 = vector.shape_cast %198 : vector<1x128xf32> to vector<128xf32>
    %200 = vector.shape_cast %199 : vector<128xf32> to vector<1x1x128xf32>
    %201 = vector.broadcast %200 : vector<1x1x128xf32> to vector<16x16x128xf32>
    %202 = arith.mulf %201, %1 : vector<16x16x128xf32>
    %203 = arith.addf %197, %202 : vector<16x16x128xf32>
    %c39 = arith.constant 39 : index
    %c0_55 = arith.constant 0 : index
    %204 = vector.load %arg3[%c39, %c0_55] : memref<64x128xf32, #tpu.memory_space<vmem>>, vector<1x128xf32>
    %205 = vector.shape_cast %204 : vector<1x128xf32> to vector<128xf32>
    %206 = vector.shape_cast %205 : vector<128xf32> to vector<1x1x128xf32>
    %c127_i32_56 = arith.constant 127 : i32
    %207 = tpu.dynamic_rotate %1 by %c127_i32_56 dim 2 : vector<16x16x128xf32>, i32 -> vector<16x16x128xf32>
    %208 = vector.broadcast %206 : vector<1x1x128xf32> to vector<16x16x128xf32>
    %209 = arith.mulf %208, %207 : vector<16x16x128xf32>
    %210 = arith.addf %203, %209 : vector<16x16x128xf32>
    %c48 = arith.constant 48 : index
    %c0_57 = arith.constant 0 : index
    %211 = vector.load %arg3[%c48, %c0_57] : memref<64x128xf32, #tpu.memory_space<vmem>>, vector<1x128xf32>
    %212 = vector.shape_cast %211 : vector<1x128xf32> to vector<128xf32>
    %213 = vector.shape_cast %212 : vector<128xf32> to vector<1x1x128xf32>
    %c126_i32_58 = arith.constant 126 : i32
    %214 = tpu.dynamic_rotate %1 by %c126_i32_58 dim 2 : vector<16x16x128xf32>, i32 -> vector<16x16x128xf32>
    %215 = vector.broadcast %213 : vector<1x1x128xf32> to vector<16x16x128xf32>
    %216 = arith.mulf %215, %214 : vector<16x16x128xf32>
    %217 = arith.addf %210, %216 : vector<16x16x128xf32>
    %c57 = arith.constant 57 : index
    %c0_59 = arith.constant 0 : index
    %218 = vector.load %arg3[%c57, %c0_59] : memref<64x128xf32, #tpu.memory_space<vmem>>, vector<1x128xf32>
    %219 = vector.shape_cast %218 : vector<1x128xf32> to vector<128xf32>
    %220 = vector.shape_cast %219 : vector<128xf32> to vector<1x1x128xf32>
    %c125_i32_60 = arith.constant 125 : i32
    %221 = tpu.dynamic_rotate %1 by %c125_i32_60 dim 2 : vector<16x16x128xf32>, i32 -> vector<16x16x128xf32>
    %222 = vector.broadcast %220 : vector<1x1x128xf32> to vector<16x16x128xf32>
    %223 = arith.mulf %222, %221 : vector<16x16x128xf32>
    %224 = arith.addf %217, %223 : vector<16x16x128xf32>
    %c1_i32_61 = arith.constant 1 : i32
    %225 = tpu.dynamic_rotate %224 by %c1_i32_61 dim 1 : vector<16x16x128xf32>, i32 -> vector<16x16x128xf32>
    %c1_i32_62 = arith.constant 1 : i32
    %226 = vector.broadcast %c1_i32_62 : i32 to vector<16x16x128xi32>
    %227 = arith.cmpi slt, %2, %226 : vector<16x16x128xi32>
    %cst_63 = arith.constant 0.000000e+00 : f32
    %228 = vector.broadcast %cst_63 : f32 to vector<16x16x128xf32>
    %229 = arith.select %227, %228, %225 : vector<16x16x128xi1>, vector<16x16x128xf32>
    %230 = arith.addf %175, %229 : vector<16x16x128xf32>
    %cst_64 = arith.constant 0.000000e+00 : f32
    %231 = vector.broadcast %cst_64 : f32 to vector<16x16x128xf32>
    %c4 = arith.constant 4 : index
    %c0_65 = arith.constant 0 : index
    %232 = vector.load %arg3[%c4, %c0_65] : memref<64x128xf32, #tpu.memory_space<vmem>>, vector<1x128xf32>
    %233 = vector.shape_cast %232 : vector<1x128xf32> to vector<128xf32>
    %234 = vector.shape_cast %233 : vector<128xf32> to vector<1x1x128xf32>
    %c3_i32_66 = arith.constant 3 : i32
    %235 = tpu.dynamic_rotate %1 by %c3_i32_66 dim 2 : vector<16x16x128xf32>, i32 -> vector<16x16x128xf32>
    %236 = vector.broadcast %234 : vector<1x1x128xf32> to vector<16x16x128xf32>
    %237 = arith.mulf %236, %235 : vector<16x16x128xf32>
    %238 = arith.addf %231, %237 : vector<16x16x128xf32>
    %c13 = arith.constant 13 : index
    %c0_67 = arith.constant 0 : index
    %239 = vector.load %arg3[%c13, %c0_67] : memref<64x128xf32, #tpu.memory_space<vmem>>, vector<1x128xf32>
    %240 = vector.shape_cast %239 : vector<1x128xf32> to vector<128xf32>
    %241 = vector.shape_cast %240 : vector<128xf32> to vector<1x1x128xf32>
    %c2_i32_68 = arith.constant 2 : i32
    %242 = tpu.dynamic_rotate %1 by %c2_i32_68 dim 2 : vector<16x16x128xf32>, i32 -> vector<16x16x128xf32>
    %243 = vector.broadcast %241 : vector<1x1x128xf32> to vector<16x16x128xf32>
    %244 = arith.mulf %243, %242 : vector<16x16x128xf32>
    %245 = arith.addf %238, %244 : vector<16x16x128xf32>
    %c22 = arith.constant 22 : index
    %c0_69 = arith.constant 0 : index
    %246 = vector.load %arg3[%c22, %c0_69] : memref<64x128xf32, #tpu.memory_space<vmem>>, vector<1x128xf32>
    %247 = vector.shape_cast %246 : vector<1x128xf32> to vector<128xf32>
    %248 = vector.shape_cast %247 : vector<128xf32> to vector<1x1x128xf32>
    %c1_i32_70 = arith.constant 1 : i32
    %249 = tpu.dynamic_rotate %1 by %c1_i32_70 dim 2 : vector<16x16x128xf32>, i32 -> vector<16x16x128xf32>
    %250 = vector.broadcast %248 : vector<1x1x128xf32> to vector<16x16x128xf32>
    %251 = arith.mulf %250, %249 : vector<16x16x128xf32>
    %252 = arith.addf %245, %251 : vector<16x16x128xf32>
    %c31 = arith.constant 31 : index
    %c0_71 = arith.constant 0 : index
    %253 = vector.load %arg3[%c31, %c0_71] : memref<64x128xf32, #tpu.memory_space<vmem>>, vector<1x128xf32>
    %254 = vector.shape_cast %253 : vector<1x128xf32> to vector<128xf32>
    %255 = vector.shape_cast %254 : vector<128xf32> to vector<1x1x128xf32>
    %256 = vector.broadcast %255 : vector<1x1x128xf32> to vector<16x16x128xf32>
    %257 = arith.mulf %256, %1 : vector<16x16x128xf32>
    %258 = arith.addf %252, %257 : vector<16x16x128xf32>
    %c40 = arith.constant 40 : index
    %c0_72 = arith.constant 0 : index
    %259 = vector.load %arg3[%c40, %c0_72] : memref<64x128xf32, #tpu.memory_space<vmem>>, vector<1x128xf32>
    %260 = vector.shape_cast %259 : vector<1x128xf32> to vector<128xf32>
    %261 = vector.shape_cast %260 : vector<128xf32> to vector<1x1x128xf32>
    %c127_i32_73 = arith.constant 127 : i32
    %262 = tpu.dynamic_rotate %1 by %c127_i32_73 dim 2 : vector<16x16x128xf32>, i32 -> vector<16x16x128xf32>
    %263 = vector.broadcast %261 : vector<1x1x128xf32> to vector<16x16x128xf32>
    %264 = arith.mulf %263, %262 : vector<16x16x128xf32>
    %265 = arith.addf %258, %264 : vector<16x16x128xf32>
    %c49 = arith.constant 49 : index
    %c0_74 = arith.constant 0 : index
    %266 = vector.load %arg3[%c49, %c0_74] : memref<64x128xf32, #tpu.memory_space<vmem>>, vector<1x128xf32>
    %267 = vector.shape_cast %266 : vector<1x128xf32> to vector<128xf32>
    %268 = vector.shape_cast %267 : vector<128xf32> to vector<1x1x128xf32>
    %c126_i32_75 = arith.constant 126 : i32
    %269 = tpu.dynamic_rotate %1 by %c126_i32_75 dim 2 : vector<16x16x128xf32>, i32 -> vector<16x16x128xf32>
    %270 = vector.broadcast %268 : vector<1x1x128xf32> to vector<16x16x128xf32>
    %271 = arith.mulf %270, %269 : vector<16x16x128xf32>
    %272 = arith.addf %265, %271 : vector<16x16x128xf32>
    %c58 = arith.constant 58 : index
    %c0_76 = arith.constant 0 : index
    %273 = vector.load %arg3[%c58, %c0_76] : memref<64x128xf32, #tpu.memory_space<vmem>>, vector<1x128xf32>
    %274 = vector.shape_cast %273 : vector<1x128xf32> to vector<128xf32>
    %275 = vector.shape_cast %274 : vector<128xf32> to vector<1x1x128xf32>
    %c125_i32_77 = arith.constant 125 : i32
    %276 = tpu.dynamic_rotate %1 by %c125_i32_77 dim 2 : vector<16x16x128xf32>, i32 -> vector<16x16x128xf32>
    %277 = vector.broadcast %275 : vector<1x1x128xf32> to vector<16x16x128xf32>
    %278 = arith.mulf %277, %276 : vector<16x16x128xf32>
    %279 = arith.addf %272, %278 : vector<16x16x128xf32>
    %280 = arith.addf %230, %279 : vector<16x16x128xf32>
    %cst_78 = arith.constant 0.000000e+00 : f32
    %281 = vector.broadcast %cst_78 : f32 to vector<16x16x128xf32>
    %c5 = arith.constant 5 : index
    %c0_79 = arith.constant 0 : index
    %282 = vector.load %arg3[%c5, %c0_79] : memref<64x128xf32, #tpu.memory_space<vmem>>, vector<1x128xf32>
    %283 = vector.shape_cast %282 : vector<1x128xf32> to vector<128xf32>
    %284 = vector.shape_cast %283 : vector<128xf32> to vector<1x1x128xf32>
    %c3_i32_80 = arith.constant 3 : i32
    %285 = tpu.dynamic_rotate %1 by %c3_i32_80 dim 2 : vector<16x16x128xf32>, i32 -> vector<16x16x128xf32>
    %286 = vector.broadcast %284 : vector<1x1x128xf32> to vector<16x16x128xf32>
    %287 = arith.mulf %286, %285 : vector<16x16x128xf32>
    %288 = arith.addf %281, %287 : vector<16x16x128xf32>
    %c14 = arith.constant 14 : index
    %c0_81 = arith.constant 0 : index
    %289 = vector.load %arg3[%c14, %c0_81] : memref<64x128xf32, #tpu.memory_space<vmem>>, vector<1x128xf32>
    %290 = vector.shape_cast %289 : vector<1x128xf32> to vector<128xf32>
    %291 = vector.shape_cast %290 : vector<128xf32> to vector<1x1x128xf32>
    %c2_i32_82 = arith.constant 2 : i32
    %292 = tpu.dynamic_rotate %1 by %c2_i32_82 dim 2 : vector<16x16x128xf32>, i32 -> vector<16x16x128xf32>
    %293 = vector.broadcast %291 : vector<1x1x128xf32> to vector<16x16x128xf32>
    %294 = arith.mulf %293, %292 : vector<16x16x128xf32>
    %295 = arith.addf %288, %294 : vector<16x16x128xf32>
    %c23 = arith.constant 23 : index
    %c0_83 = arith.constant 0 : index
    %296 = vector.load %arg3[%c23, %c0_83] : memref<64x128xf32, #tpu.memory_space<vmem>>, vector<1x128xf32>
    %297 = vector.shape_cast %296 : vector<1x128xf32> to vector<128xf32>
    %298 = vector.shape_cast %297 : vector<128xf32> to vector<1x1x128xf32>
    %c1_i32_84 = arith.constant 1 : i32
    %299 = tpu.dynamic_rotate %1 by %c1_i32_84 dim 2 : vector<16x16x128xf32>, i32 -> vector<16x16x128xf32>
    %300 = vector.broadcast %298 : vector<1x1x128xf32> to vector<16x16x128xf32>
    %301 = arith.mulf %300, %299 : vector<16x16x128xf32>
    %302 = arith.addf %295, %301 : vector<16x16x128xf32>
    %c32 = arith.constant 32 : index
    %c0_85 = arith.constant 0 : index
    %303 = vector.load %arg3[%c32, %c0_85] : memref<64x128xf32, #tpu.memory_space<vmem>>, vector<1x128xf32>
    %304 = vector.shape_cast %303 : vector<1x128xf32> to vector<128xf32>
    %305 = vector.shape_cast %304 : vector<128xf32> to vector<1x1x128xf32>
    %306 = vector.broadcast %305 : vector<1x1x128xf32> to vector<16x16x128xf32>
    %307 = arith.mulf %306, %1 : vector<16x16x128xf32>
    %308 = arith.addf %302, %307 : vector<16x16x128xf32>
    %c41 = arith.constant 41 : index
    %c0_86 = arith.constant 0 : index
    %309 = vector.load %arg3[%c41, %c0_86] : memref<64x128xf32, #tpu.memory_space<vmem>>, vector<1x128xf32>
    %310 = vector.shape_cast %309 : vector<1x128xf32> to vector<128xf32>
    %311 = vector.shape_cast %310 : vector<128xf32> to vector<1x1x128xf32>
    %c127_i32_87 = arith.constant 127 : i32
    %312 = tpu.dynamic_rotate %1 by %c127_i32_87 dim 2 : vector<16x16x128xf32>, i32 -> vector<16x16x128xf32>
    %313 = vector.broadcast %311 : vector<1x1x128xf32> to vector<16x16x128xf32>
    %314 = arith.mulf %313, %312 : vector<16x16x128xf32>
    %315 = arith.addf %308, %314 : vector<16x16x128xf32>
    %c50 = arith.constant 50 : index
    %c0_88 = arith.constant 0 : index
    %316 = vector.load %arg3[%c50, %c0_88] : memref<64x128xf32, #tpu.memory_space<vmem>>, vector<1x128xf32>
    %317 = vector.shape_cast %316 : vector<1x128xf32> to vector<128xf32>
    %318 = vector.shape_cast %317 : vector<128xf32> to vector<1x1x128xf32>
    %c126_i32_89 = arith.constant 126 : i32
    %319 = tpu.dynamic_rotate %1 by %c126_i32_89 dim 2 : vector<16x16x128xf32>, i32 -> vector<16x16x128xf32>
    %320 = vector.broadcast %318 : vector<1x1x128xf32> to vector<16x16x128xf32>
    %321 = arith.mulf %320, %319 : vector<16x16x128xf32>
    %322 = arith.addf %315, %321 : vector<16x16x128xf32>
    %c59 = arith.constant 59 : index
    %c0_90 = arith.constant 0 : index
    %323 = vector.load %arg3[%c59, %c0_90] : memref<64x128xf32, #tpu.memory_space<vmem>>, vector<1x128xf32>
    %324 = vector.shape_cast %323 : vector<1x128xf32> to vector<128xf32>
    %325 = vector.shape_cast %324 : vector<128xf32> to vector<1x1x128xf32>
    %c125_i32_91 = arith.constant 125 : i32
    %326 = tpu.dynamic_rotate %1 by %c125_i32_91 dim 2 : vector<16x16x128xf32>, i32 -> vector<16x16x128xf32>
    %327 = vector.broadcast %325 : vector<1x1x128xf32> to vector<16x16x128xf32>
    %328 = arith.mulf %327, %326 : vector<16x16x128xf32>
    %329 = arith.addf %322, %328 : vector<16x16x128xf32>
    %c15_i32_92 = arith.constant 15 : i32
    %330 = tpu.dynamic_rotate %329 by %c15_i32_92 dim 1 : vector<16x16x128xf32>, i32 -> vector<16x16x128xf32>
    %c15_i32_93 = arith.constant 15 : i32
    %331 = vector.broadcast %c15_i32_93 : i32 to vector<16x16x128xi32>
    %332 = arith.cmpi sge, %2, %331 : vector<16x16x128xi32>
    %cst_94 = arith.constant 0.000000e+00 : f32
    %333 = vector.broadcast %cst_94 : f32 to vector<16x16x128xf32>
    %334 = arith.select %332, %333, %330 : vector<16x16x128xi1>, vector<16x16x128xf32>
    %335 = arith.addf %280, %334 : vector<16x16x128xf32>
    %cst_95 = arith.constant 0.000000e+00 : f32
    %336 = vector.broadcast %cst_95 : f32 to vector<16x16x128xf32>
    %c6 = arith.constant 6 : index
    %c0_96 = arith.constant 0 : index
    %337 = vector.load %arg3[%c6, %c0_96] : memref<64x128xf32, #tpu.memory_space<vmem>>, vector<1x128xf32>
    %338 = vector.shape_cast %337 : vector<1x128xf32> to vector<128xf32>
    %339 = vector.shape_cast %338 : vector<128xf32> to vector<1x1x128xf32>
    %c3_i32_97 = arith.constant 3 : i32
    %340 = tpu.dynamic_rotate %1 by %c3_i32_97 dim 2 : vector<16x16x128xf32>, i32 -> vector<16x16x128xf32>
    %341 = vector.broadcast %339 : vector<1x1x128xf32> to vector<16x16x128xf32>
    %342 = arith.mulf %341, %340 : vector<16x16x128xf32>
    %343 = arith.addf %336, %342 : vector<16x16x128xf32>
    %c15 = arith.constant 15 : index
    %c0_98 = arith.constant 0 : index
    %344 = vector.load %arg3[%c15, %c0_98] : memref<64x128xf32, #tpu.memory_space<vmem>>, vector<1x128xf32>
    %345 = vector.shape_cast %344 : vector<1x128xf32> to vector<128xf32>
    %346 = vector.shape_cast %345 : vector<128xf32> to vector<1x1x128xf32>
    %c2_i32_99 = arith.constant 2 : i32
    %347 = tpu.dynamic_rotate %1 by %c2_i32_99 dim 2 : vector<16x16x128xf32>, i32 -> vector<16x16x128xf32>
    %348 = vector.broadcast %346 : vector<1x1x128xf32> to vector<16x16x128xf32>
    %349 = arith.mulf %348, %347 : vector<16x16x128xf32>
    %350 = arith.addf %343, %349 : vector<16x16x128xf32>
    %c24 = arith.constant 24 : index
    %c0_100 = arith.constant 0 : index
    %351 = vector.load %arg3[%c24, %c0_100] : memref<64x128xf32, #tpu.memory_space<vmem>>, vector<1x128xf32>
    %352 = vector.shape_cast %351 : vector<1x128xf32> to vector<128xf32>
    %353 = vector.shape_cast %352 : vector<128xf32> to vector<1x1x128xf32>
    %c1_i32_101 = arith.constant 1 : i32
    %354 = tpu.dynamic_rotate %1 by %c1_i32_101 dim 2 : vector<16x16x128xf32>, i32 -> vector<16x16x128xf32>
    %355 = vector.broadcast %353 : vector<1x1x128xf32> to vector<16x16x128xf32>
    %356 = arith.mulf %355, %354 : vector<16x16x128xf32>
    %357 = arith.addf %350, %356 : vector<16x16x128xf32>
    %c33 = arith.constant 33 : index
    %c0_102 = arith.constant 0 : index
    %358 = vector.load %arg3[%c33, %c0_102] : memref<64x128xf32, #tpu.memory_space<vmem>>, vector<1x128xf32>
    %359 = vector.shape_cast %358 : vector<1x128xf32> to vector<128xf32>
    %360 = vector.shape_cast %359 : vector<128xf32> to vector<1x1x128xf32>
    %361 = vector.broadcast %360 : vector<1x1x128xf32> to vector<16x16x128xf32>
    %362 = arith.mulf %361, %1 : vector<16x16x128xf32>
    %363 = arith.addf %357, %362 : vector<16x16x128xf32>
    %c42 = arith.constant 42 : index
    %c0_103 = arith.constant 0 : index
    %364 = vector.load %arg3[%c42, %c0_103] : memref<64x128xf32, #tpu.memory_space<vmem>>, vector<1x128xf32>
    %365 = vector.shape_cast %364 : vector<1x128xf32> to vector<128xf32>
    %366 = vector.shape_cast %365 : vector<128xf32> to vector<1x1x128xf32>
    %c127_i32_104 = arith.constant 127 : i32
    %367 = tpu.dynamic_rotate %1 by %c127_i32_104 dim 2 : vector<16x16x128xf32>, i32 -> vector<16x16x128xf32>
    %368 = vector.broadcast %366 : vector<1x1x128xf32> to vector<16x16x128xf32>
    %369 = arith.mulf %368, %367 : vector<16x16x128xf32>
    %370 = arith.addf %363, %369 : vector<16x16x128xf32>
    %c51 = arith.constant 51 : index
    %c0_105 = arith.constant 0 : index
    %371 = vector.load %arg3[%c51, %c0_105] : memref<64x128xf32, #tpu.memory_space<vmem>>, vector<1x128xf32>
    %372 = vector.shape_cast %371 : vector<1x128xf32> to vector<128xf32>
    %373 = vector.shape_cast %372 : vector<128xf32> to vector<1x1x128xf32>
    %c126_i32_106 = arith.constant 126 : i32
    %374 = tpu.dynamic_rotate %1 by %c126_i32_106 dim 2 : vector<16x16x128xf32>, i32 -> vector<16x16x128xf32>
    %375 = vector.broadcast %373 : vector<1x1x128xf32> to vector<16x16x128xf32>
    %376 = arith.mulf %375, %374 : vector<16x16x128xf32>
    %377 = arith.addf %370, %376 : vector<16x16x128xf32>
    %c60 = arith.constant 60 : index
    %c0_107 = arith.constant 0 : index
    %378 = vector.load %arg3[%c60, %c0_107] : memref<64x128xf32, #tpu.memory_space<vmem>>, vector<1x128xf32>
    %379 = vector.shape_cast %378 : vector<1x128xf32> to vector<128xf32>
    %380 = vector.shape_cast %379 : vector<128xf32> to vector<1x1x128xf32>
    %c125_i32_108 = arith.constant 125 : i32
    %381 = tpu.dynamic_rotate %1 by %c125_i32_108 dim 2 : vector<16x16x128xf32>, i32 -> vector<16x16x128xf32>
    %382 = vector.broadcast %380 : vector<1x1x128xf32> to vector<16x16x128xf32>
    %383 = arith.mulf %382, %381 : vector<16x16x128xf32>
    %384 = arith.addf %377, %383 : vector<16x16x128xf32>
    %c1_i32_109 = arith.constant 1 : i32
    %385 = tpu.dynamic_rotate %384 by %c1_i32_109 dim 1 : vector<16x16x128xf32>, i32 -> vector<16x16x128xf32>
    %c1_i32_110 = arith.constant 1 : i32
    %386 = vector.broadcast %c1_i32_110 : i32 to vector<16x16x128xi32>
    %387 = arith.cmpi slt, %2, %386 : vector<16x16x128xi32>
    %cst_111 = arith.constant 0.000000e+00 : f32
    %388 = vector.broadcast %cst_111 : f32 to vector<16x16x128xf32>
    %389 = arith.select %387, %388, %385 : vector<16x16x128xi1>, vector<16x16x128xf32>
    %390 = vector.extract_strided_slice %389 {offsets = [1, 0, 0], sizes = [15, 16, 128], strides = [1, 1, 1]} : vector<16x16x128xf32> to vector<15x16x128xf32>
    %391 = tpu.concatenate %390, %9 in 0 : vector<15x16x128xf32>, vector<1x16x128xf32> -> vector<16x16x128xf32>
    %392 = arith.addf %335, %391 : vector<16x16x128xf32>
    %cst_112 = arith.constant 0.000000e+00 : f32
    %393 = vector.broadcast %cst_112 : f32 to vector<16x16x128xf32>
    %c7 = arith.constant 7 : index
    %c0_113 = arith.constant 0 : index
    %394 = vector.load %arg3[%c7, %c0_113] : memref<64x128xf32, #tpu.memory_space<vmem>>, vector<1x128xf32>
    %395 = vector.shape_cast %394 : vector<1x128xf32> to vector<128xf32>
    %396 = vector.shape_cast %395 : vector<128xf32> to vector<1x1x128xf32>
    %c3_i32_114 = arith.constant 3 : i32
    %397 = tpu.dynamic_rotate %1 by %c3_i32_114 dim 2 : vector<16x16x128xf32>, i32 -> vector<16x16x128xf32>
    %398 = vector.broadcast %396 : vector<1x1x128xf32> to vector<16x16x128xf32>
    %399 = arith.mulf %398, %397 : vector<16x16x128xf32>
    %400 = arith.addf %393, %399 : vector<16x16x128xf32>
    %c16 = arith.constant 16 : index
    %c0_115 = arith.constant 0 : index
    %401 = vector.load %arg3[%c16, %c0_115] : memref<64x128xf32, #tpu.memory_space<vmem>>, vector<1x128xf32>
    %402 = vector.shape_cast %401 : vector<1x128xf32> to vector<128xf32>
    %403 = vector.shape_cast %402 : vector<128xf32> to vector<1x1x128xf32>
    %c2_i32_116 = arith.constant 2 : i32
    %404 = tpu.dynamic_rotate %1 by %c2_i32_116 dim 2 : vector<16x16x128xf32>, i32 -> vector<16x16x128xf32>
    %405 = vector.broadcast %403 : vector<1x1x128xf32> to vector<16x16x128xf32>
    %406 = arith.mulf %405, %404 : vector<16x16x128xf32>
    %407 = arith.addf %400, %406 : vector<16x16x128xf32>
    %c25 = arith.constant 25 : index
    %c0_117 = arith.constant 0 : index
    %408 = vector.load %arg3[%c25, %c0_117] : memref<64x128xf32, #tpu.memory_space<vmem>>, vector<1x128xf32>
    %409 = vector.shape_cast %408 : vector<1x128xf32> to vector<128xf32>
    %410 = vector.shape_cast %409 : vector<128xf32> to vector<1x1x128xf32>
    %c1_i32_118 = arith.constant 1 : i32
    %411 = tpu.dynamic_rotate %1 by %c1_i32_118 dim 2 : vector<16x16x128xf32>, i32 -> vector<16x16x128xf32>
    %412 = vector.broadcast %410 : vector<1x1x128xf32> to vector<16x16x128xf32>
    %413 = arith.mulf %412, %411 : vector<16x16x128xf32>
    %414 = arith.addf %407, %413 : vector<16x16x128xf32>
    %c34 = arith.constant 34 : index
    %c0_119 = arith.constant 0 : index
    %415 = vector.load %arg3[%c34, %c0_119] : memref<64x128xf32, #tpu.memory_space<vmem>>, vector<1x128xf32>
    %416 = vector.shape_cast %415 : vector<1x128xf32> to vector<128xf32>
    %417 = vector.shape_cast %416 : vector<128xf32> to vector<1x1x128xf32>
    %418 = vector.broadcast %417 : vector<1x1x128xf32> to vector<16x16x128xf32>
    %419 = arith.mulf %418, %1 : vector<16x16x128xf32>
    %420 = arith.addf %414, %419 : vector<16x16x128xf32>
    %c43 = arith.constant 43 : index
    %c0_120 = arith.constant 0 : index
    %421 = vector.load %arg3[%c43, %c0_120] : memref<64x128xf32, #tpu.memory_space<vmem>>, vector<1x128xf32>
    %422 = vector.shape_cast %421 : vector<1x128xf32> to vector<128xf32>
    %423 = vector.shape_cast %422 : vector<128xf32> to vector<1x1x128xf32>
    %c127_i32_121 = arith.constant 127 : i32
    %424 = tpu.dynamic_rotate %1 by %c127_i32_121 dim 2 : vector<16x16x128xf32>, i32 -> vector<16x16x128xf32>
    %425 = vector.broadcast %423 : vector<1x1x128xf32> to vector<16x16x128xf32>
    %426 = arith.mulf %425, %424 : vector<16x16x128xf32>
    %427 = arith.addf %420, %426 : vector<16x16x128xf32>
    %c52 = arith.constant 52 : index
    %c0_122 = arith.constant 0 : index
    %428 = vector.load %arg3[%c52, %c0_122] : memref<64x128xf32, #tpu.memory_space<vmem>>, vector<1x128xf32>
    %429 = vector.shape_cast %428 : vector<1x128xf32> to vector<128xf32>
    %430 = vector.shape_cast %429 : vector<128xf32> to vector<1x1x128xf32>
    %c126_i32_123 = arith.constant 126 : i32
    %431 = tpu.dynamic_rotate %1 by %c126_i32_123 dim 2 : vector<16x16x128xf32>, i32 -> vector<16x16x128xf32>
    %432 = vector.broadcast %430 : vector<1x1x128xf32> to vector<16x16x128xf32>
    %433 = arith.mulf %432, %431 : vector<16x16x128xf32>
    %434 = arith.addf %427, %433 : vector<16x16x128xf32>
    %c61 = arith.constant 61 : index
    %c0_124 = arith.constant 0 : index
    %435 = vector.load %arg3[%c61, %c0_124] : memref<64x128xf32, #tpu.memory_space<vmem>>, vector<1x128xf32>
    %436 = vector.shape_cast %435 : vector<1x128xf32> to vector<128xf32>
    %437 = vector.shape_cast %436 : vector<128xf32> to vector<1x1x128xf32>
    %c125_i32_125 = arith.constant 125 : i32
    %438 = tpu.dynamic_rotate %1 by %c125_i32_125 dim 2 : vector<16x16x128xf32>, i32 -> vector<16x16x128xf32>
    %439 = vector.broadcast %437 : vector<1x1x128xf32> to vector<16x16x128xf32>
    %440 = arith.mulf %439, %438 : vector<16x16x128xf32>
    %441 = arith.addf %434, %440 : vector<16x16x128xf32>
    %442 = vector.extract_strided_slice %441 {offsets = [1, 0, 0], sizes = [15, 16, 128], strides = [1, 1, 1]} : vector<16x16x128xf32> to vector<15x16x128xf32>
    %443 = tpu.concatenate %442, %9 in 0 : vector<15x16x128xf32>, vector<1x16x128xf32> -> vector<16x16x128xf32>
    %444 = arith.addf %392, %443 : vector<16x16x128xf32>
    %cst_126 = arith.constant 0.000000e+00 : f32
    %445 = vector.broadcast %cst_126 : f32 to vector<16x16x128xf32>
    %c8 = arith.constant 8 : index
    %c0_127 = arith.constant 0 : index
    %446 = vector.load %arg3[%c8, %c0_127] : memref<64x128xf32, #tpu.memory_space<vmem>>, vector<1x128xf32>
    %447 = vector.shape_cast %446 : vector<1x128xf32> to vector<128xf32>
    %448 = vector.shape_cast %447 : vector<128xf32> to vector<1x1x128xf32>
    %c3_i32_128 = arith.constant 3 : i32
    %449 = tpu.dynamic_rotate %1 by %c3_i32_128 dim 2 : vector<16x16x128xf32>, i32 -> vector<16x16x128xf32>
    %450 = vector.broadcast %448 : vector<1x1x128xf32> to vector<16x16x128xf32>
    %451 = arith.mulf %450, %449 : vector<16x16x128xf32>
    %452 = arith.addf %445, %451 : vector<16x16x128xf32>
    %c17 = arith.constant 17 : index
    %c0_129 = arith.constant 0 : index
    %453 = vector.load %arg3[%c17, %c0_129] : memref<64x128xf32, #tpu.memory_space<vmem>>, vector<1x128xf32>
    %454 = vector.shape_cast %453 : vector<1x128xf32> to vector<128xf32>
    %455 = vector.shape_cast %454 : vector<128xf32> to vector<1x1x128xf32>
    %c2_i32_130 = arith.constant 2 : i32
    %456 = tpu.dynamic_rotate %1 by %c2_i32_130 dim 2 : vector<16x16x128xf32>, i32 -> vector<16x16x128xf32>
    %457 = vector.broadcast %455 : vector<1x1x128xf32> to vector<16x16x128xf32>
    %458 = arith.mulf %457, %456 : vector<16x16x128xf32>
    %459 = arith.addf %452, %458 : vector<16x16x128xf32>
    %c26 = arith.constant 26 : index
    %c0_131 = arith.constant 0 : index
    %460 = vector.load %arg3[%c26, %c0_131] : memref<64x128xf32, #tpu.memory_space<vmem>>, vector<1x128xf32>
    %461 = vector.shape_cast %460 : vector<1x128xf32> to vector<128xf32>
    %462 = vector.shape_cast %461 : vector<128xf32> to vector<1x1x128xf32>
    %c1_i32_132 = arith.constant 1 : i32
    %463 = tpu.dynamic_rotate %1 by %c1_i32_132 dim 2 : vector<16x16x128xf32>, i32 -> vector<16x16x128xf32>
    %464 = vector.broadcast %462 : vector<1x1x128xf32> to vector<16x16x128xf32>
    %465 = arith.mulf %464, %463 : vector<16x16x128xf32>
    %466 = arith.addf %459, %465 : vector<16x16x128xf32>
    %c35 = arith.constant 35 : index
    %c0_133 = arith.constant 0 : index
    %467 = vector.load %arg3[%c35, %c0_133] : memref<64x128xf32, #tpu.memory_space<vmem>>, vector<1x128xf32>
    %468 = vector.shape_cast %467 : vector<1x128xf32> to vector<128xf32>
    %469 = vector.shape_cast %468 : vector<128xf32> to vector<1x1x128xf32>
    %470 = vector.broadcast %469 : vector<1x1x128xf32> to vector<16x16x128xf32>
    %471 = arith.mulf %470, %1 : vector<16x16x128xf32>
    %472 = arith.addf %466, %471 : vector<16x16x128xf32>
    %c44 = arith.constant 44 : index
    %c0_134 = arith.constant 0 : index
    %473 = vector.load %arg3[%c44, %c0_134] : memref<64x128xf32, #tpu.memory_space<vmem>>, vector<1x128xf32>
    %474 = vector.shape_cast %473 : vector<1x128xf32> to vector<128xf32>
    %475 = vector.shape_cast %474 : vector<128xf32> to vector<1x1x128xf32>
    %c127_i32_135 = arith.constant 127 : i32
    %476 = tpu.dynamic_rotate %1 by %c127_i32_135 dim 2 : vector<16x16x128xf32>, i32 -> vector<16x16x128xf32>
    %477 = vector.broadcast %475 : vector<1x1x128xf32> to vector<16x16x128xf32>
    %478 = arith.mulf %477, %476 : vector<16x16x128xf32>
    %479 = arith.addf %472, %478 : vector<16x16x128xf32>
    %c53 = arith.constant 53 : index
    %c0_136 = arith.constant 0 : index
    %480 = vector.load %arg3[%c53, %c0_136] : memref<64x128xf32, #tpu.memory_space<vmem>>, vector<1x128xf32>
    %481 = vector.shape_cast %480 : vector<1x128xf32> to vector<128xf32>
    %482 = vector.shape_cast %481 : vector<128xf32> to vector<1x1x128xf32>
    %c126_i32_137 = arith.constant 126 : i32
    %483 = tpu.dynamic_rotate %1 by %c126_i32_137 dim 2 : vector<16x16x128xf32>, i32 -> vector<16x16x128xf32>
    %484 = vector.broadcast %482 : vector<1x1x128xf32> to vector<16x16x128xf32>
    %485 = arith.mulf %484, %483 : vector<16x16x128xf32>
    %486 = arith.addf %479, %485 : vector<16x16x128xf32>
    %c62 = arith.constant 62 : index
    %c0_138 = arith.constant 0 : index
    %487 = vector.load %arg3[%c62, %c0_138] : memref<64x128xf32, #tpu.memory_space<vmem>>, vector<1x128xf32>
    %488 = vector.shape_cast %487 : vector<1x128xf32> to vector<128xf32>
    %489 = vector.shape_cast %488 : vector<128xf32> to vector<1x1x128xf32>
    %c125_i32_139 = arith.constant 125 : i32
    %490 = tpu.dynamic_rotate %1 by %c125_i32_139 dim 2 : vector<16x16x128xf32>, i32 -> vector<16x16x128xf32>
    %491 = vector.broadcast %489 : vector<1x1x128xf32> to vector<16x16x128xf32>
    %492 = arith.mulf %491, %490 : vector<16x16x128xf32>
    %493 = arith.addf %486, %492 : vector<16x16x128xf32>
    %c15_i32_140 = arith.constant 15 : i32
    %494 = tpu.dynamic_rotate %493 by %c15_i32_140 dim 1 : vector<16x16x128xf32>, i32 -> vector<16x16x128xf32>
    %c15_i32_141 = arith.constant 15 : i32
    %495 = vector.broadcast %c15_i32_141 : i32 to vector<16x16x128xi32>
    %496 = arith.cmpi sge, %2, %495 : vector<16x16x128xi32>
    %cst_142 = arith.constant 0.000000e+00 : f32
    %497 = vector.broadcast %cst_142 : f32 to vector<16x16x128xf32>
    %498 = arith.select %496, %497, %494 : vector<16x16x128xi1>, vector<16x16x128xf32>
    %499 = vector.extract_strided_slice %498 {offsets = [1, 0, 0], sizes = [15, 16, 128], strides = [1, 1, 1]} : vector<16x16x128xf32> to vector<15x16x128xf32>
    %500 = tpu.concatenate %499, %9 in 0 : vector<15x16x128xf32>, vector<1x16x128xf32> -> vector<16x16x128xf32>
    %501 = arith.addf %444, %500 : vector<16x16x128xf32>
    %c0_143 = arith.constant 0 : index
    %c0_144 = arith.constant 0 : index
    %c0_145 = arith.constant 0 : index
    %c0_146 = arith.constant 0 : index
    %502 = vector.load %arg4[%c0_143, %c0_144, %c0_145, %c0_146] : memref<1x16x16x128xf32, #tpu.memory_space<vmem>>, vector<1x16x16x128xf32>
    %503 = vector.shape_cast %502 : vector<1x16x16x128xf32> to vector<16x16x128xf32>
    %504 = vector.shape_cast %501 : vector<16x16x128xf32> to vector<1x16x16x128xf32>
    tpu.vector_store %arg4[%c0_143, %c0_144, %c0_145, %c0_146], %504 {strides = array<i32>} : memref<1x16x16x128xf32, #tpu.memory_space<vmem>>, vector<1x16x16x128xf32>,
    return
  }
  func.func @transform_0(%arg0: i32, %arg1: i32) -> (i32, i32, i32, i32) {
    %c0_i32 = arith.constant 0 : i32
    %c0_i32_0 = arith.constant 0 : i32
    %c0_i32_1 = arith.constant 0 : i32
    return %arg0, %c0_i32, %c0_i32_0, %arg1 : i32, i32, i32, i32
  }
  func.func @transform_1(%arg0: i32, %arg1: i32) -> (i32, i32) {
    %c0_i32 = arith.constant 0 : i32
    %c0_i32_0 = arith.constant 0 : i32
    return %c0_i32, %arg1 : i32, i32
  }
  func.func @transform_2(%arg0: i32, %arg1: i32) -> (i32, i32, i32, i32) {
    %c0_i32 = arith.constant 0 : i32
    %c0_i32_0 = arith.constant 0 : i32
    %c0_i32_1 = arith.constant 0 : i32
    return %arg0, %c0_i32, %c0_i32_0, %arg1 : i32, i32, i32, i32
  }
}

</mosaic_0001>

<llo_original>
// kernel: tpu_custom_call.1
$region0: #{tpu_custom_call.1}
  #allocation0 [shape = 'u32[]', space=smem, size = 0x4, offset = 0x4, fixed_abs, tag = 'smem constant byte address 0x4 - core index']
  #allocation1 [shape = 'u32[144,128]{1,0:T(1,128)}', space=vmem, size = 0x12000, scoped, tag = 'internal scratch']
  %s0 = inlined_call_operand.hbm [shape: f32[2,16,16,256], index: 0, kind: input, shape index: {}]
  %s1 = inlined_call_operand.hbm [shape: f32[64,256], index: 1, kind: input, shape index: {}]
  %s2 = inlined_call_operand.hbm [shape: f32[2,16,16,256], index: 2, kind: output, shape index: {}]
  %s3 = sld [smem:[#allocation0]]
  $region49: #{tpu_custom_call.1} parent=0
    _
  %s5 = ssub.s32 1, %s3
  %s6 = scalar_select 0, %s5, %s3
  $region1: #{tpu_custom_call.1} parent=0
    #allocation2 [shape = 'u8[262144]{0}', space=vmem, size = 0x40000, scoped, tag = 'input window, operand 0']
    #allocation3 [shape = 's32[2]{0}', space=sflag, size = 0x8, scoped, tag = 'scoped memory for tpu_custom_call.1']
    #allocation4 [shape = 's32[2]{0}', space=sflag, size = 0x8, scoped, tag = 'scoped memory for tpu_custom_call.1']
    #allocation5 [shape = 'u8[65536]{0}', space=vmem, size = 0x10000, scoped, tag = 'input window, operand 1']
    #allocation6 [shape = 's32[2]{0}', space=sflag, size = 0x8, scoped, tag = 'scoped memory for tpu_custom_call.1']
    #allocation7 [shape = 'u8[262144]{0}', space=vmem, size = 0x40000, scoped, tag = 'output window, operand 0']
    %7 = vsyncpa [#allocation3], 0
    %s8 = scalar_lea.sflag [#allocation3], 1
    %9 = vsyncpa %s8, 0
    %10 = vsyncpa [#allocation6], 0
    %s11 = scalar_lea.sflag [#allocation6], 1
    %12 = vsyncpa %s11, 0
    %13 = vsyncpa [#allocation4], 0
    %s14 = scalar_lea.sflag [#allocation4], 1
    %15 = vsyncpa %s14, 0
    loop: start=0, step=1, limit=6
    $region2: #{tpu_custom_call.1} parent=1 // loop_pre_header
      _
    $region3: #{tpu_custom_call.1} parent=1 // loop_header
      %s17 = sphi 0, %s21
      %p18 = scmp.ge.s32.totalorder %s17, 6
      %s24 = sphi 0, %s36
      %s25 = sphi 0, %s32
      %s26 = sphi 0, %s24
      %s27 = sphi 0, %s25
      %s28 = sphi 0, %s26
      %s29 = sphi 0, %s27
      %s41 = sphi 0, %s43
      %s44 = sphi 0, %s41
      %s45 = sphi 0, %s44
      %s61 = sphi 0, %s45
      %s67 = sphi 0, %s69
      %s70 = sphi 0, %s67
      %s71 = sphi 0, %s70
      %s87 = sphi 0, %s71
      %s95 = sphi 0, %s97
      %s98 = sphi 0, %s95
      %s99 = sphi 0, %s98
      %s115 = sphi 0, %s99
    $region4: #{tpu_custom_call.1} parent=1 // loop_header_branch
      %20 = sbr.rel (%p18) target = $region8
    $region5: #{tpu_custom_call.1} parent=1 // loop_body
      %s22 = ssub.s32 %s17, 1
      %s23 = ssub.s32 %s17, 2
      %s30 = sadd.s32 1, %s25
      %p31 = scmp.ge.s32.totalorder %s30, 2
      %s32 = scalar_select %p31, 0, %s30
      %s33 = sadd.s32 1, %s24
      %s34 = scalar_select %p31, %s33, %s24
      %p35 = scmp.ge.s32.totalorder %s34, 2
      %s36 = scalar_select %p35, 0, %s34
      %s37 = ssub.s32 %s24, %s36
      %s38 = ssub.s32 %s25, %s32
      %s39 = sor.u32 %s37, %s38
      %p40 = scmp.eq.s32.totalorder %s39, 0
      %s42 = sadd.s32 %s41, 1
      %s43 = scalar_select %p40, %s41, %s42
      %p46 = pneg %p40
      %p47 = scmp.eq.s32.totalorder %s17, 3
      %p48 = por %p46, %p47
      %p49 = scmp.ne.s32.totalorder %s41, %s44
      %p50 = scmp.eq.s32.totalorder %s17, 0
      %p51 = por %p49, %p50
      %p52 = scmp.ne.s32.totalorder %s41, %s44
      %p53 = scmp.eq.s32.totalorder %s22, 3
      %p54 = por %p52, %p53
      %p55 = scmp.ne.s32.totalorder %s44, %s45
      %p56 = scmp.eq.s32.totalorder %s22, 0
      %p57 = por %p55, %p56
      %p58 = scmp.ne.s32.totalorder %s44, %s45
      %p59 = scmp.eq.s32.totalorder %s23, 3
      %p60 = por %p58, %p59
      %p62 = scmp.ne.s32.totalorder %s45, %s61
      %p63 = scmp.eq.s32.totalorder %s23, 0
      %p64 = por %p62, %p63
      %s65 = ssub.s32 %s25, %s32
      %p66 = scmp.eq.s32.totalorder %s65, 0
      %s68 = sadd.s32 %s67, 1
      %s69 = scalar_select %p66, %s67, %s68
      %p72 = pneg %p66
      %p73 = scmp.eq.s32.totalorder %s17, 3
      %p74 = por %p72, %p73
      %p75 = scmp.ne.s32.totalorder %s67, %s70
      %p76 = scmp.eq.s32.totalorder %s17, 0
      %p77 = por %p75, %p76
      %p78 = scmp.ne.s32.totalorder %s67, %s70
      %p79 = scmp.eq.s32.totalorder %s22, 3
      %p80 = por %p78, %p79
      %p81 = scmp.ne.s32.totalorder %s70, %s71
      %p82 = scmp.eq.s32.totalorder %s22, 0
      %p83 = por %p81, %p82
      %p84 = scmp.ne.s32.totalorder %s70, %s71
      %p85 = scmp.eq.s32.totalorder %s23, 3
      %p86 = por %p84, %p85
      %p88 = scmp.ne.s32.totalorder %s71, %s87
      %p89 = scmp.eq.s32.totalorder %s23, 0
      %p90 = por %p88, %p89
      %s91 = ssub.s32 %s24, %s36
      %s92 = ssub.s32 %s25, %s32
      %s93 = sor.u32 %s91, %s92
      %p94 = scmp.eq.s32.totalorder %s93, 0
      %s96 = sadd.s32 %s95, 1
      %s97 = scalar_select %p94, %s95, %s96
      %p100 = pneg %p94
      %p101 = scmp.eq.s32.totalorder %s17, 3
      %p102 = por %p100, %p101
      %p103 = scmp.ne.s32.totalorder %s95, %s98
      %p104 = scmp.eq.s32.totalorder %s17, 0
      %p105 = por %p103, %p104
      %p106 = scmp.ne.s32.totalorder %s95, %s98
      %p107 = scmp.eq.s32.totalorder %s22, 3
      %p108 = por %p106, %p107
      %p109 = scmp.ne.s32.totalorder %s98, %s99
      %p110 = scmp.eq.s32.totalorder %s22, 0
      %p111 = por %p109, %p110
      %p112 = scmp.ne.s32.totalorder %s98, %s99
      %p113 = scmp.eq.s32.totalorder %s23, 3
      %p114 = por %p112, %p113
      %p116 = scmp.ne.s32.totalorder %s99, %s115
      %p117 = scmp.eq.s32.totalorder %s23, 0
      %p118 = por %p116, %p117
      %p119 = scmp.le.s32.totalorder 1, %s17
      %p120 = scmp.lt.s32.totalorder %s17, 5
      %p121 = pnand %p119, %p120
      %p122 = pneg %p121
      // Predicated region
      $region9: #{tpu_custom_call.1} parent=5 // pred_check
        _
      $region10: #{tpu_custom_call.1} parent=5 // pred_check_branch
        %124 = sbr.rel (%p121) target = $region12
      $region11: #{tpu_custom_call.1} parent=5 // pred_region
        %s125 = ssub.s32 %s17, 1
      $region12: #{tpu_custom_call.1} parent=5 // pred_fallthru
        _
      %p126 = scmp.lt.s32.totalorder %s17, 4
      // Predicated region
      $region13: #{tpu_custom_call.1} parent=5 // pred_check
        %p127 = pneg %p126
      $region14: #{tpu_custom_call.1} parent=5 // pred_check_branch
        %129 = sbr.rel (%p127) target = $region16
      $region15: #{tpu_custom_call.1} parent=5 // pred_region
        // Predicated region
        $region17: #{tpu_custom_call.1} parent=15 // pred_check
          %p130 = pneg %p51
        $region18: #{tpu_custom_call.1} parent=15 // pred_check_branch
          %132 = sbr.rel (%p130) target = $region20
        $region19: #{tpu_custom_call.1} parent=15 // pred_region
          %s133 = sand.u32 %s41, 1
          %s134 = scalar_lea.sflag [#allocation3], %s133
          %s135 = sand.u32 %s41, 1
          %s136 = smul.addr %s135, 256
          %s137 = scalar_lea.vmem [#allocation2], %s136
          %s139 = ssub.s32 4096, 4096
          %140 = vsyncadd %s134, %s139
          %s141 = smul.addr %s24, 64
          %s142 = sadd.s32 %s25, %s141
          %s143 = smul.addr %s142, 128
          %s144 = scalar_lea.hbm %s0, %s143
          %s145 = sshll.u32 %s137, 4
          %s146 = int_to_ptr.vmem [resolvable:$true] %s145
          %151 = dma.hbm_to_vmem [thread:$0]  %s144, 4096, %s146, %s134, 256, 128, 8
        $region20: #{tpu_custom_call.1} parent=15 // pred_fallthru
          _
        // Predicated region
        $region21: #{tpu_custom_call.1} parent=15 // pred_check
          %p152 = pneg %p77
        $region22: #{tpu_custom_call.1} parent=15 // pred_check_branch
          %154 = sbr.rel (%p152) target = $region24
        $region23: #{tpu_custom_call.1} parent=15 // pred_region
          %s155 = sand.u32 %s67, 1
          %s156 = scalar_lea.sflag [#allocation6], %s155
          %s157 = sand.u32 %s67, 1
          %s158 = smul.addr %s157, 64
          %s159 = scalar_lea.vmem [#allocation5], %s158
          %s161 = ssub.s32 1024, 1024
          %162 = vsyncadd %s156, %s161
          %s163 = smul.addr %s25, 128
          %s164 = scalar_lea.hbm %s1, %s163
          %s165 = sshll.u32 %s159, 4
          %s166 = int_to_ptr.vmem [resolvable:$true] %s165
          %171 = dma.hbm_to_vmem [thread:$0]  %s164, 1024, %s166, %s156, 256, 128, 8
        $region24: #{tpu_custom_call.1} parent=15 // pred_fallthru
          _
      $region16: #{tpu_custom_call.1} parent=5 // pred_fallthru
        _
      %p172 = scmp.le.s32.totalorder 1, %s17
      %p173 = scmp.lt.s32.totalorder %s17, 5
      %p174 = pnand %p172, %p173
      %p175 = pneg %p174
      // Predicated region
      $region25: #{tpu_custom_call.1} parent=5 // pred_check
        _
      $region26: #{tpu_custom_call.1} parent=5 // pred_check_branch
        %177 = sbr.rel (%p174) target = $region28
      $region27: #{tpu_custom_call.1} parent=5 // pred_region
        %s178 = ssub.s32 %s17, 1
        %s179 = sand.u32 %s44, 1
        %s180 = scalar_lea.sflag [#allocation3], %s179
        %s181 = sand.u32 %s44, 1
        %s182 = smul.addr %s181, 256
        %s183 = scalar_lea.vmem [#allocation2], %s182
        // Predicated region
        $region29: #{tpu_custom_call.1} parent=27 // pred_check
          %p184 = pneg %p57
        $region30: #{tpu_custom_call.1} parent=27 // pred_check_branch
          %186 = sbr.rel (%p184) target = $region32
        $region31: #{tpu_custom_call.1} parent=27 // pred_region
          %187 = dma.done %s180, 4096
        $region32: #{tpu_custom_call.1} parent=27 // pred_fallthru
          _
        %s188 = sand.u32 %s70, 1
        %s189 = scalar_lea.sflag [#allocation6], %s188
        %s190 = sand.u32 %s70, 1
        %s191 = smul.addr %s190, 64
        %s192 = scalar_lea.vmem [#allocation5], %s191
        // Predicated region
        $region33: #{tpu_custom_call.1} parent=27 // pred_check
          %p193 = pneg %p83
        $region34: #{tpu_custom_call.1} parent=27 // pred_check_branch
          %195 = sbr.rel (%p193) target = $region36
        $region35: #{tpu_custom_call.1} parent=27 // pred_region
          %196 = dma.done %s189, 1024
        $region36: #{tpu_custom_call.1} parent=27 // pred_fallthru
          _
        %s197 = sand.u32 %s44, 1
        %s198 = scalar_lea.sflag [#allocation3], %s197
        %s199 = sand.u32 %s44, 1
        %s200 = smul.addr %s199, 256
        %s201 = scalar_lea.vmem [#allocation2], %s200
        %p202 = pneg %p57
        %p203 = pneg %p54
        %s204 = sand.u32 %s70, 1
        %s205 = scalar_lea.sflag [#allocation6], %s204
        %s206 = sand.u32 %s70, 1
        %s207 = smul.addr %s206, 64
        %s208 = scalar_lea.vmem [#allocation5], %s207
        %p209 = pneg %p83
        %p210 = pneg %p80
        %p211 = pneg %p111
        %p212 = pneg %p108
        %s213 = sand.u32 %s98, 1
        %s214 = scalar_lea.sflag [#allocation4], %s213
        %s215 = sand.u32 %s98, 1
        %s216 = smul.addr %s215, 256
        %s217 = scalar_lea.vmem [#allocation7], %s216
        %v218 = vld [vmem:[%s183] sm:$0xff]
        %v219 = vld [vmem:[%s183 + $0x8] sm:$0xff]
        %v220 = vld [vmem:[%s183 + $0x10] sm:$0xff]
        %v221 = vld [vmem:[%s183 + $0x18] sm:$0xff]
        %v222 = vld [vmem:[%s183 + $0x20] sm:$0xff]
        %v223 = vld [vmem:[%s183 + $0x28] sm:$0xff]
        %v224 = vld [vmem:[%s183 + $0x30] sm:$0xff]
        %v225 = vld [vmem:[%s183 + $0x38] sm:$0xff]
        %v226 = vld [vmem:[%s183 + $0x40] sm:$0xff]
        %v227 = vld [vmem:[%s183 + $0x48] sm:$0xff]
        %v228 = vld [vmem:[%s183 + $0x50] sm:$0xff]
        %v229 = vld [vmem:[%s183 + $0x58] sm:$0xff]
        %v230 = vld [vmem:[%s183 + $0x60] sm:$0xff]
        %v231 = vld [vmem:[%s183 + $0x68] sm:$0xff]
        %v232 = vld [vmem:[%s183 + $0x70] sm:$0xff]
        %v233 = vld [vmem:[%s183 + $0x78] sm:$0xff]
        %v234 = vld [vmem:[%s183 + $0x80] sm:$0xff]
        %v235 = vld [vmem:[%s183 + $0x88] sm:$0xff]
        %v236 = vld [vmem:[%s183 + $0x90] sm:$0xff]
        %v237 = vld [vmem:[%s183 + $0x98] sm:$0xff]
        %v238 = vld [vmem:[%s183 + $0xa0] sm:$0xff]
        %v239 = vld [vmem:[%s183 + $0xa8] sm:$0xff]
        %v240 = vld [vmem:[%s183 + $0xb0] sm:$0xff]
        %v241 = vld [vmem:[%s183 + $0xb8] sm:$0xff]
        %v242 = vld [vmem:[%s183 + $0xc0] sm:$0xff]
        %v243 = vld [vmem:[%s183 + $0xc8] sm:$0xff]
        %v244 = vld [vmem:[%s183 + $0xd0] sm:$0xff]
        %v245 = vld [vmem:[%s183 + $0xd8] sm:$0xff]
        %v246 = vld [vmem:[%s183 + $0xe0] sm:$0xff]
        %v247 = vld [vmem:[%s183 + $0xe8] sm:$0xff]
        %v248 = vld [vmem:[%s183 + $0xf0] sm:$0xff]
        %v249 = vld [vmem:[%s183 + $0xf8] sm:$0xff]
        %v250 = vlaneseq
        %v251 = vshrl.u32 %v250, 7
        %v252 = vadd.s32 %v251, 8
        %v253 = vld [vmem:[%s192 + $0x3f] sm:$0x1]
        %v254 = vlaneseq
        %v255 = vshrl.u32 %v254, 7
        %v256 = vsub.s32 0, %v255
        %v257 = vrot.slane %v253, %v256
        %v258 = vadd.f32 %v257, 0.0
        %v259 = vld [vmem:[%s192] sm:$0x1]
        %260 = vrot.lane.b32.xlu0 %v218, 3
        %v261 = vpop.permute.xlu0 %260
        %262 = vrot.lane.b32.xlu0 %v219, 3
        %v263 = vpop.permute.xlu0 %262
        %264 = vrot.lane.b32.xlu0 %v220, 3
        %v265 = vpop.permute.xlu0 %264
        %266 = vrot.lane.b32.xlu0 %v221, 3
        %v267 = vpop.permute.xlu0 %266
        %268 = vrot.lane.b32.xlu0 %v222, 3
        %v269 = vpop.permute.xlu0 %268
        %270 = vrot.lane.b32.xlu0 %v223, 3
        %v271 = vpop.permute.xlu0 %270
        %272 = vrot.lane.b32.xlu0 %v224, 3
        %v273 = vpop.permute.xlu0 %272
        %274 = vrot.lane.b32.xlu0 %v225, 3
        %v275 = vpop.permute.xlu0 %274
        %276 = vrot.lane.b32.xlu0 %v226, 3
        %v277 = vpop.permute.xlu0 %276
        %278 = vrot.lane.b32.xlu0 %v227, 3
        %v279 = vpop.permute.xlu0 %278
        %280 = vrot.lane.b32.xlu0 %v228, 3
        %v281 = vpop.permute.xlu0 %280
        %282 = vrot.lane.b32.xlu0 %v229, 3
        %v283 = vpop.permute.xlu0 %282
        %284 = vrot.lane.b32.xlu0 %v230, 3
        %v285 = vpop.permute.xlu0 %284
        %286 = vrot.lane.b32.xlu0 %v231, 3
        %v287 = vpop.permute.xlu0 %286
        %288 = vrot.lane.b32.xlu0 %v232, 3
        %v289 = vpop.permute.xlu0 %288
        %290 = vrot.lane.b32.xlu0 %v233, 3
        %v291 = vpop.permute.xlu0 %290
        %292 = vrot.lane.b32.xlu0 %v234, 3
        %v293 = vpop.permute.xlu0 %292
        %294 = vrot.lane.b32.xlu0 %v235, 3
        %v295 = vpop.permute.xlu0 %294
        %296 = vrot.lane.b32.xlu0 %v236, 3
        %v297 = vpop.permute.xlu0 %296
        %298 = vrot.lane.b32.xlu0 %v237, 3
        %v299 = vpop.permute.xlu0 %298
        %300 = vrot.lane.b32.xlu0 %v238, 3
        %v301 = vpop.permute.xlu0 %300
        %302 = vrot.lane.b32.xlu0 %v239, 3
        %v303 = vpop.permute.xlu0 %302
        %304 = vrot.lane.b32.xlu0 %v240, 3
        %v305 = vpop.permute.xlu0 %304
        %306 = vrot.lane.b32.xlu0 %v241, 3
        %v307 = vpop.permute.xlu0 %306
        %308 = vrot.lane.b32.xlu0 %v242, 3
        %v309 = vpop.permute.xlu0 %308
        %310 = vrot.lane.b32.xlu0 %v243, 3
        %v311 = vpop.permute.xlu0 %310
        %312 = vrot.lane.b32.xlu0 %v244, 3
        %v313 = vpop.permute.xlu0 %312
        %314 = vrot.lane.b32.xlu0 %v245, 3
        %v315 = vpop.permute.xlu0 %314
        %316 = vrot.lane.b32.xlu0 %v246, 3
        %v317 = vpop.permute.xlu0 %316
        %318 = vrot.lane.b32.xlu0 %v247, 3
        %v319 = vpop.permute.xlu0 %318
        %320 = vrot.lane.b32.xlu0 %v248, 3
        %v321 = vpop.permute.xlu0 %320
        %322 = vrot.lane.b32.xlu0 %v249, 3
        %v323 = vpop.permute.xlu0 %322
        %v324 = vlaneseq
        %v325 = vshrl.u32 %v324, 7
        %v326 = vsub.s32 0, %v325
        %v327 = vrot.slane %v259, %v326
        %v328 = vmul.f32 %v327, %v261
        %v329 = vmul.f32 %v327, %v263
        %v330 = vmul.f32 %v327, %v265
        %v331 = vmul.f32 %v327, %v267
        %v332 = vmul.f32 %v327, %v269
        %v333 = vmul.f32 %v327, %v271
        %v334 = vmul.f32 %v327, %v273
        %v335 = vmul.f32 %v327, %v275
        %v336 = vmul.f32 %v327, %v277
        %v337 = vmul.f32 %v327, %v279
        %v338 = vmul.f32 %v327, %v281
        %v339 = vmul.f32 %v327, %v283
        %v340 = vmul.f32 %v327, %v285
        %v341 = vmul.f32 %v327, %v287
        %v342 = vmul.f32 %v327, %v289
        %v343 = vmul.f32 %v327, %v291
        %v344 = vmul.f32 %v327, %v293
        %v345 = vmul.f32 %v327, %v295
        %v346 = vmul.f32 %v327, %v297
        %v347 = vmul.f32 %v327, %v299
        %v348 = vmul.f32 %v327, %v301
        %v349 = vmul.f32 %v327, %v303
        %v350 = vmul.f32 %v327, %v305
        %v351 = vmul.f32 %v327, %v307
        %v352 = vmul.f32 %v327, %v309
        %v353 = vmul.f32 %v327, %v311
        %v354 = vmul.f32 %v327, %v313
        %v355 = vmul.f32 %v327, %v315
        %v356 = vmul.f32 %v327, %v317
        %v357 = vmul.f32 %v327, %v319
        %v358 = vadd.f32 %v328, 0.0
        %v359 = vadd.f32 %v329, 0.0
        %v360 = vadd.f32 %v330, 0.0
        %v361 = vadd.f32 %v331, 0.0
        %v362 = vadd.f32 %v332, 0.0
        %v363 = vadd.f32 %v333, 0.0
        %v364 = vadd.f32 %v334, 0.0
        %v365 = vadd.f32 %v335, 0.0
        %v366 = vadd.f32 %v336, 0.0
        %v367 = vadd.f32 %v337, 0.0
        %v368 = vadd.f32 %v338, 0.0
        %v369 = vadd.f32 %v339, 0.0
        %v370 = vadd.f32 %v340, 0.0
        %v371 = vadd.f32 %v341, 0.0
        %v372 = vadd.f32 %v342, 0.0
        %v373 = vadd.f32 %v343, 0.0
        %v374 = vadd.f32 %v344, 0.0
        %v375 = vadd.f32 %v345, 0.0
        %v376 = vadd.f32 %v346, 0.0
        %v377 = vadd.f32 %v347, 0.0
        %v378 = vadd.f32 %v348, 0.0
        %v379 = vadd.f32 %v349, 0.0
        %v380 = vadd.f32 %v350, 0.0
        %v381 = vadd.f32 %v351, 0.0
        %v382 = vadd.f32 %v352, 0.0
        %v383 = vadd.f32 %v353, 0.0
        %v384 = vadd.f32 %v354, 0.0
        %v385 = vadd.f32 %v355, 0.0
        %v386 = vadd.f32 %v356, 0.0
        %v387 = vadd.f32 %v357, 0.0
        %v388 = vld [vmem:[%s192 + $0x9] sm:$0x1]
        %389 = vrot.lane.b32.xlu0 %v218, 2
        %v390 = vpop.permute.xlu0 %389
        %391 = vrot.lane.b32.xlu0 %v219, 2
        %v392 = vpop.permute.xlu0 %391
        %393 = vrot.lane.b32.xlu0 %v220, 2
        %v394 = vpop.permute.xlu0 %393
        %395 = vrot.lane.b32.xlu0 %v221, 2
        %v396 = vpop.permute.xlu0 %395
        %397 = vrot.lane.b32.xlu0 %v222, 2
        %v398 = vpop.permute.xlu0 %397
        %399 = vrot.lane.b32.xlu0 %v223, 2
        %v400 = vpop.permute.xlu0 %399
        %401 = vrot.lane.b32.xlu0 %v224, 2
        %v402 = vpop.permute.xlu0 %401
        %403 = vrot.lane.b32.xlu0 %v225, 2
        %v404 = vpop.permute.xlu0 %403
        %405 = vrot.lane.b32.xlu0 %v226, 2
        %v406 = vpop.permute.xlu0 %405
        %407 = vrot.lane.b32.xlu0 %v227, 2
        %v408 = vpop.permute.xlu0 %407
        %409 = vrot.lane.b32.xlu0 %v228, 2
        %v410 = vpop.permute.xlu0 %409
        %411 = vrot.lane.b32.xlu0 %v229, 2
        %v412 = vpop.permute.xlu0 %411
        %413 = vrot.lane.b32.xlu0 %v230, 2
        %v414 = vpop.permute.xlu0 %413
        %415 = vrot.lane.b32.xlu0 %v231, 2
        %v416 = vpop.permute.xlu0 %415
        %417 = vrot.lane.b32.xlu0 %v232, 2
        %v418 = vpop.permute.xlu0 %417
        %419 = vrot.lane.b32.xlu0 %v233, 2
        %v420 = vpop.permute.xlu0 %419
        %421 = vrot.lane.b32.xlu0 %v234, 2
        %v422 = vpop.permute.xlu0 %421
        %423 = vrot.lane.b32.xlu0 %v235, 2
        %v424 = vpop.permute.xlu0 %423
        %425 = vrot.lane.b32.xlu0 %v236, 2
        %v426 = vpop.permute.xlu0 %425
        %427 = vrot.lane.b32.xlu0 %v237, 2
        %v428 = vpop.permute.xlu0 %427
        %429 = vrot.lane.b32.xlu0 %v238, 2
        %v430 = vpop.permute.xlu0 %429
        %431 = vrot.lane.b32.xlu0 %v239, 2
        %v432 = vpop.permute.xlu0 %431
        %433 = vrot.lane.b32.xlu0 %v240, 2
        %v434 = vpop.permute.xlu0 %433
        %435 = vrot.lane.b32.xlu0 %v241, 2
        %v436 = vpop.permute.xlu0 %435
        %437 = vrot.lane.b32.xlu0 %v242, 2
        %v438 = vpop.permute.xlu0 %437
        %439 = vrot.lane.b32.xlu0 %v243, 2
        %v440 = vpop.permute.xlu0 %439
        %441 = vrot.lane.b32.xlu0 %v244, 2
        %v442 = vpop.permute.xlu0 %441
        %443 = vrot.lane.b32.xlu0 %v245, 2
        %v444 = vpop.permute.xlu0 %443
        %445 = vrot.lane.b32.xlu0 %v246, 2
        %v446 = vpop.permute.xlu0 %445
        %447 = vrot.lane.b32.xlu0 %v247, 2
        %v448 = vpop.permute.xlu0 %447
        %449 = vrot.lane.b32.xlu0 %v248, 2
        %v450 = vpop.permute.xlu0 %449
        %451 = vrot.lane.b32.xlu0 %v249, 2
        %v452 = vpop.permute.xlu0 %451
        %v453 = vlaneseq
        %v454 = vshrl.u32 %v453, 7
        %v455 = vsub.s32 0, %v454
        %v456 = vrot.slane %v388, %v455
        %v457 = vmul.f32 %v456, %v390
        %v458 = vmul.f32 %v456, %v392
        %v459 = vmul.f32 %v456, %v394
        %v460 = vmul.f32 %v456, %v396
        %v461 = vmul.f32 %v456, %v398
        %v462 = vmul.f32 %v456, %v400
        %v463 = vmul.f32 %v456, %v402
        %v464 = vmul.f32 %v456, %v404
        %v465 = vmul.f32 %v456, %v406
        %v466 = vmul.f32 %v456, %v408
        %v467 = vmul.f32 %v456, %v410
        %v468 = vmul.f32 %v456, %v412
        %v469 = vmul.f32 %v456, %v414
        %v470 = vmul.f32 %v456, %v416
        %v471 = vmul.f32 %v456, %v418
        %v472 = vmul.f32 %v456, %v420
        %v473 = vmul.f32 %v456, %v422
        %v474 = vmul.f32 %v456, %v424
        %v475 = vmul.f32 %v456, %v426
        %v476 = vmul.f32 %v456, %v428
        %v477 = vmul.f32 %v456, %v430
        %v478 = vmul.f32 %v456, %v432
        %v479 = vmul.f32 %v456, %v434
        %v480 = vmul.f32 %v456, %v436
        %v481 = vmul.f32 %v456, %v438
        %v482 = vmul.f32 %v456, %v440
        %v483 = vmul.f32 %v456, %v442
        %v484 = vmul.f32 %v456, %v444
        %v485 = vmul.f32 %v456, %v446
        %v486 = vmul.f32 %v456, %v448
        %v487 = vadd.f32 %v358, %v457
        %v488 = vadd.f32 %v359, %v458
        %v489 = vadd.f32 %v360, %v459
        %v490 = vadd.f32 %v361, %v460
        %v491 = vadd.f32 %v362, %v461
        %v492 = vadd.f32 %v363, %v462
        %v493 = vadd.f32 %v364, %v463
        %v494 = vadd.f32 %v365, %v464
        %v495 = vadd.f32 %v366, %v465
        %v496 = vadd.f32 %v367, %v466
        %v497 = vadd.f32 %v368, %v467
        %v498 = vadd.f32 %v369, %v468
        %v499 = vadd.f32 %v370, %v469
        %v500 = vadd.f32 %v371, %v470
        %v501 = vadd.f32 %v372, %v471
        %v502 = vadd.f32 %v373, %v472
        %v503 = vadd.f32 %v374, %v473
        %v504 = vadd.f32 %v375, %v474
        %v505 = vadd.f32 %v376, %v475
        %v506 = vadd.f32 %v377, %v476
        %v507 = vadd.f32 %v378, %v477
        %v508 = vadd.f32 %v379, %v478
        %v509 = vadd.f32 %v380, %v479
        %v510 = vadd.f32 %v381, %v480
        %v511 = vadd.f32 %v382, %v481
        %v512 = vadd.f32 %v383, %v482
        %v513 = vadd.f32 %v384, %v483
        %v514 = vadd.f32 %v385, %v484
        %v515 = vadd.f32 %v386, %v485
        %v516 = vadd.f32 %v387, %v486
        %v517 = vld [vmem:[%s192 + $0x12] sm:$0x1]
        %518 = vrot.lane.b32.xlu0 %v218, 1
        %v519 = vpop.permute.xlu0 %518
        %520 = vrot.lane.b32.xlu0 %v219, 1
        %v521 = vpop.permute.xlu0 %520
        %522 = vrot.lane.b32.xlu0 %v220, 1
        %v523 = vpop.permute.xlu0 %522
        %524 = vrot.lane.b32.xlu0 %v221, 1
        %v525 = vpop.permute.xlu0 %524
        %526 = vrot.lane.b32.xlu0 %v222, 1
        %v527 = vpop.permute.xlu0 %526
        %528 = vrot.lane.b32.xlu0 %v223, 1
        %v529 = vpop.permute.xlu0 %528
        %530 = vrot.lane.b32.xlu0 %v224, 1
        %v531 = vpop.permute.xlu0 %530
        %532 = vrot.lane.b32.xlu0 %v225, 1
        %v533 = vpop.permute.xlu0 %532
        %534 = vrot.lane.b32.xlu0 %v226, 1
        %v535 = vpop.permute.xlu0 %534
        %536 = vrot.lane.b32.xlu0 %v227, 1
        %v537 = vpop.permute.xlu0 %536
        %538 = vrot.lane.b32.xlu0 %v228, 1
        %v539 = vpop.permute.xlu0 %538
        %540 = vrot.lane.b32.xlu0 %v229, 1
        %v541 = vpop.permute.xlu0 %540
        %542 = vrot.lane.b32.xlu0 %v230, 1
        %v543 = vpop.permute.xlu0 %542
        %544 = vrot.lane.b32.xlu0 %v231, 1
        %v545 = vpop.permute.xlu0 %544
        %546 = vrot.lane.b32.xlu0 %v232, 1
        %v547 = vpop.permute.xlu0 %546
        %548 = vrot.lane.b32.xlu0 %v233, 1
        %v549 = vpop.permute.xlu0 %548
        %550 = vrot.lane.b32.xlu0 %v234, 1
        %v551 = vpop.permute.xlu0 %550
        %552 = vrot.lane.b32.xlu0 %v235, 1
        %v553 = vpop.permute.xlu0 %552
        %554 = vrot.lane.b32.xlu0 %v236, 1
        %v555 = vpop.permute.xlu0 %554
        %556 = vrot.lane.b32.xlu0 %v237, 1
        %v557 = vpop.permute.xlu0 %556
        %558 = vrot.lane.b32.xlu0 %v238, 1
        %v559 = vpop.permute.xlu0 %558
        %560 = vrot.lane.b32.xlu0 %v239, 1
        %v561 = vpop.permute.xlu0 %560
        %562 = vrot.lane.b32.xlu0 %v240, 1
        %v563 = vpop.permute.xlu0 %562
        %564 = vrot.lane.b32.xlu0 %v241, 1
        %v565 = vpop.permute.xlu0 %564
        %566 = vrot.lane.b32.xlu0 %v242, 1
        %v567 = vpop.permute.xlu0 %566
        %568 = vrot.lane.b32.xlu0 %v243, 1
        %v569 = vpop.permute.xlu0 %568
        %570 = vrot.lane.b32.xlu0 %v244, 1
        %v571 = vpop.permute.xlu0 %570
        %572 = vrot.lane.b32.xlu0 %v245, 1
        %v573 = vpop.permute.xlu0 %572
        %574 = vrot.lane.b32.xlu0 %v246, 1
        %v575 = vpop.permute.xlu0 %574
        %576 = vrot.lane.b32.xlu0 %v247, 1
        %v577 = vpop.permute.xlu0 %576
        %578 = vrot.lane.b32.xlu0 %v248, 1
        %v579 = vpop.permute.xlu0 %578
        %580 = vrot.lane.b32.xlu0 %v249, 1
        %v581 = vpop.permute.xlu0 %580
        %v582 = vlaneseq
        %v583 = vshrl.u32 %v582, 7
        %v584 = vsub.s32 0, %v583
        %v585 = vrot.slane %v517, %v584
        %v586 = vmul.f32 %v585, %v519
        %v587 = vmul.f32 %v585, %v521
        %v588 = vmul.f32 %v585, %v523
        %v589 = vmul.f32 %v585, %v525
        %v590 = vmul.f32 %v585, %v527
        %v591 = vmul.f32 %v585, %v529
        %v592 = vmul.f32 %v585, %v531
        %v593 = vmul.f32 %v585, %v533
        %v594 = vmul.f32 %v585, %v535
        %v595 = vmul.f32 %v585, %v537
        %v596 = vmul.f32 %v585, %v539
        %v597 = vmul.f32 %v585, %v541
        %v598 = vmul.f32 %v585, %v543
        %v599 = vmul.f32 %v585, %v545
        %v600 = vmul.f32 %v585, %v547
        %v601 = vmul.f32 %v585, %v549
        %v602 = vmul.f32 %v585, %v551
        %v603 = vmul.f32 %v585, %v553
        %v604 = vmul.f32 %v585, %v555
        %v605 = vmul.f32 %v585, %v557
        %v606 = vmul.f32 %v585, %v559
        %v607 = vmul.f32 %v585, %v561
        %v608 = vmul.f32 %v585, %v563
        %v609 = vmul.f32 %v585, %v565
        %v610 = vmul.f32 %v585, %v567
        %v611 = vmul.f32 %v585, %v569
        %v612 = vmul.f32 %v585, %v571
        %v613 = vmul.f32 %v585, %v573
        %v614 = vmul.f32 %v585, %v575
        %v615 = vmul.f32 %v585, %v577
        %v616 = vadd.f32 %v487, %v586
        %v617 = vadd.f32 %v488, %v587
        %v618 = vadd.f32 %v489, %v588
        %v619 = vadd.f32 %v490, %v589
        %v620 = vadd.f32 %v491, %v590
        %v621 = vadd.f32 %v492, %v591
        %v622 = vadd.f32 %v493, %v592
        %v623 = vadd.f32 %v494, %v593
        %v624 = vadd.f32 %v495, %v594
        %v625 = vadd.f32 %v496, %v595
        %v626 = vadd.f32 %v497, %v596
        %v627 = vadd.f32 %v498, %v597
        %v628 = vadd.f32 %v499, %v598
        %v629 = vadd.f32 %v500, %v599
        %v630 = vadd.f32 %v501, %v600
        %v631 = vadd.f32 %v502, %v601
        %v632 = vadd.f32 %v503, %v602
        %v633 = vadd.f32 %v504, %v603
        %v634 = vadd.f32 %v505, %v604
        %v635 = vadd.f32 %v506, %v605
        %v636 = vadd.f32 %v507, %v606
        %v637 = vadd.f32 %v508, %v607
        %v638 = vadd.f32 %v509, %v608
        %v639 = vadd.f32 %v510, %v609
        %v640 = vadd.f32 %v511, %v610
        %v641 = vadd.f32 %v512, %v611
        %v642 = vadd.f32 %v513, %v612
        %v643 = vadd.f32 %v514, %v613
        %v644 = vadd.f32 %v515, %v614
        %v645 = vadd.f32 %v516, %v615
        %v646 = vld [vmem:[%s192 + $0x1b] sm:$0x1]
        %v647 = vlaneseq
        %v648 = vshrl.u32 %v647, 7
        %v649 = vsub.s32 0, %v648
        %v650 = vrot.slane %v646, %v649
        %v651 = vmul.f32 %v650, %v218
        %v652 = vmul.f32 %v650, %v219
        %v653 = vmul.f32 %v650, %v220
        %v654 = vmul.f32 %v650, %v221
        %v655 = vmul.f32 %v650, %v222
        %v656 = vmul.f32 %v650, %v223
        %v657 = vmul.f32 %v650, %v224
        %v658 = vmul.f32 %v650, %v225
        %v659 = vmul.f32 %v650, %v226
        %v660 = vmul.f32 %v650, %v227
        %v661 = vmul.f32 %v650, %v228
        %v662 = vmul.f32 %v650, %v229
        %v663 = vmul.f32 %v650, %v230
        %v664 = vmul.f32 %v650, %v231
        %v665 = vmul.f32 %v650, %v232
        %v666 = vmul.f32 %v650, %v233
        %v667 = vmul.f32 %v650, %v234
        %v668 = vmul.f32 %v650, %v235
        %v669 = vmul.f32 %v650, %v236
        %v670 = vmul.f32 %v650, %v237
        %v671 = vmul.f32 %v650, %v238
        %v672 = vmul.f32 %v650, %v239
        %v673 = vmul.f32 %v650, %v240
        %v674 = vmul.f32 %v650, %v241
        %v675 = vmul.f32 %v650, %v242
        %v676 = vmul.f32 %v650, %v243
        %v677 = vmul.f32 %v650, %v244
        %v678 = vmul.f32 %v650, %v245
        %v679 = vmul.f32 %v650, %v246
        %v680 = vmul.f32 %v650, %v247
        %v681 = vadd.f32 %v616, %v651
        %v682 = vadd.f32 %v617, %v652
        %v683 = vadd.f32 %v618, %v653
        %v684 = vadd.f32 %v619, %v654
        %v685 = vadd.f32 %v620, %v655
        %v686 = vadd.f32 %v621, %v656
        %v687 = vadd.f32 %v622, %v657
        %v688 = vadd.f32 %v623, %v658
        %v689 = vadd.f32 %v624, %v659
        %v690 = vadd.f32 %v625, %v660
        %v691 = vadd.f32 %v626, %v661
        %v692 = vadd.f32 %v627, %v662
        %v693 = vadd.f32 %v628, %v663
        %v694 = vadd.f32 %v629, %v664
        %v695 = vadd.f32 %v630, %v665
        %v696 = vadd.f32 %v631, %v666
        %v697 = vadd.f32 %v632, %v667
        %v698 = vadd.f32 %v633, %v668
        %v699 = vadd.f32 %v634, %v669
        %v700 = vadd.f32 %v635, %v670
        %v701 = vadd.f32 %v636, %v671
        %v702 = vadd.f32 %v637, %v672
        %v703 = vadd.f32 %v638, %v673
        %v704 = vadd.f32 %v639, %v674
        %v705 = vadd.f32 %v640, %v675
        %v706 = vadd.f32 %v641, %v676
        %v707 = vadd.f32 %v642, %v677
        %v708 = vadd.f32 %v643, %v678
        %v709 = vadd.f32 %v644, %v679
        %v710 = vadd.f32 %v645, %v680
        %v711 = vld [vmem:[%s192 + $0x24] sm:$0x1]
        %712 = vrot.lane.b32.xlu0 %v218, 127
        %v713 = vpop.permute.xlu0 %712
        %714 = vrot.lane.b32.xlu0 %v219, 127
        %v715 = vpop.permute.xlu0 %714
        %716 = vrot.lane.b32.xlu0 %v220, 127
        %v717 = vpop.permute.xlu0 %716
        %718 = vrot.lane.b32.xlu0 %v221, 127
        %v719 = vpop.permute.xlu0 %718
        %720 = vrot.lane.b32.xlu0 %v222, 127
        %v721 = vpop.permute.xlu0 %720
        %722 = vrot.lane.b32.xlu0 %v223, 127
        %v723 = vpop.permute.xlu0 %722
        %724 = vrot.lane.b32.xlu0 %v224, 127
        %v725 = vpop.permute.xlu0 %724
        %726 = vrot.lane.b32.xlu0 %v225, 127
        %v727 = vpop.permute.xlu0 %726
        %728 = vrot.lane.b32.xlu0 %v226, 127
        %v729 = vpop.permute.xlu0 %728
        %730 = vrot.lane.b32.xlu0 %v227, 127
        %v731 = vpop.permute.xlu0 %730
        %732 = vrot.lane.b32.xlu0 %v228, 127
        %v733 = vpop.permute.xlu0 %732
        %734 = vrot.lane.b32.xlu0 %v229, 127
        %v735 = vpop.permute.xlu0 %734
        %736 = vrot.lane.b32.xlu0 %v230, 127
        %v737 = vpop.permute.xlu0 %736
        %738 = vrot.lane.b32.xlu0 %v231, 127
        %v739 = vpop.permute.xlu0 %738
        %740 = vrot.lane.b32.xlu0 %v232, 127
        %v741 = vpop.permute.xlu0 %740
        %742 = vrot.lane.b32.xlu0 %v233, 127
        %v743 = vpop.permute.xlu0 %742
        %744 = vrot.lane.b32.xlu0 %v234, 127
        %v745 = vpop.permute.xlu0 %744
        %746 = vrot.lane.b32.xlu0 %v235, 127
        %v747 = vpop.permute.xlu0 %746
        %748 = vrot.lane.b32.xlu0 %v236, 127
        %v749 = vpop.permute.xlu0 %748
        %750 = vrot.lane.b32.xlu0 %v237, 127
        %v751 = vpop.permute.xlu0 %750
        %752 = vrot.lane.b32.xlu0 %v238, 127
        %v753 = vpop.permute.xlu0 %752
        %754 = vrot.lane.b32.xlu0 %v239, 127
        %v755 = vpop.permute.xlu0 %754
        %756 = vrot.lane.b32.xlu0 %v240, 127
        %v757 = vpop.permute.xlu0 %756
        %758 = vrot.lane.b32.xlu0 %v241, 127
        %v759 = vpop.permute.xlu0 %758
        %760 = vrot.lane.b32.xlu0 %v242, 127
        %v761 = vpop.permute.xlu0 %760
        %762 = vrot.lane.b32.xlu0 %v243, 127
        %v763 = vpop.permute.xlu0 %762
        %764 = vrot.lane.b32.xlu0 %v244, 127
        %v765 = vpop.permute.xlu0 %764
        %766 = vrot.lane.b32.xlu0 %v245, 127
        %v767 = vpop.permute.xlu0 %766
        %768 = vrot.lane.b32.xlu0 %v246, 127
        %v769 = vpop.permute.xlu0 %768
        %770 = vrot.lane.b32.xlu0 %v247, 127
        %v771 = vpop.permute.xlu0 %770
        %772 = vrot.lane.b32.xlu0 %v248, 127
        %v773 = vpop.permute.xlu0 %772
        %774 = vrot.lane.b32.xlu0 %v249, 127
        %v775 = vpop.permute.xlu0 %774
        %v776 = vlaneseq
        %v777 = vshrl.u32 %v776, 7
        %v778 = vsub.s32 0, %v777
        %v779 = vrot.slane %v711, %v778
        %v780 = vmul.f32 %v779, %v713
        %v781 = vmul.f32 %v779, %v715
        %v782 = vmul.f32 %v779, %v717
        %v783 = vmul.f32 %v779, %v719
        %v784 = vmul.f32 %v779, %v721
        %v785 = vmul.f32 %v779, %v723
        %v786 = vmul.f32 %v779, %v725
        %v787 = vmul.f32 %v779, %v727
        %v788 = vmul.f32 %v779, %v729
        %v789 = vmul.f32 %v779, %v731
        %v790 = vmul.f32 %v779, %v733
        %v791 = vmul.f32 %v779, %v735
        %v792 = vmul.f32 %v779, %v737
        %v793 = vmul.f32 %v779, %v739
        %v794 = vmul.f32 %v779, %v741
        %v795 = vmul.f32 %v779, %v743
        %v796 = vmul.f32 %v779, %v745
        %v797 = vmul.f32 %v779, %v747
        %v798 = vmul.f32 %v779, %v749
        %v799 = vmul.f32 %v779, %v751
        %v800 = vmul.f32 %v779, %v753
        %v801 = vmul.f32 %v779, %v755
        %v802 = vmul.f32 %v779, %v757
        %v803 = vmul.f32 %v779, %v759
        %v804 = vmul.f32 %v779, %v761
        %v805 = vmul.f32 %v779, %v763
        %v806 = vmul.f32 %v779, %v765
        %v807 = vmul.f32 %v779, %v767
        %v808 = vmul.f32 %v779, %v769
        %v809 = vmul.f32 %v779, %v771
        %v810 = vadd.f32 %v681, %v780
        %v811 = vadd.f32 %v682, %v781
        %v812 = vadd.f32 %v683, %v782
        %v813 = vadd.f32 %v684, %v783
        %v814 = vadd.f32 %v685, %v784
        %v815 = vadd.f32 %v686, %v785
        %v816 = vadd.f32 %v687, %v786
        %v817 = vadd.f32 %v688, %v787
        %v818 = vadd.f32 %v689, %v788
        %v819 = vadd.f32 %v690, %v789
        %v820 = vadd.f32 %v691, %v790
        %v821 = vadd.f32 %v692, %v791
        %v822 = vadd.f32 %v693, %v792
        %v823 = vadd.f32 %v694, %v793
        %v824 = vadd.f32 %v695, %v794
        %v825 = vadd.f32 %v696, %v795
        %v826 = vadd.f32 %v697, %v796
        %v827 = vadd.f32 %v698, %v797
        %v828 = vadd.f32 %v699, %v798
        %v829 = vadd.f32 %v700, %v799
        %v830 = vadd.f32 %v701, %v800
        %v831 = vadd.f32 %v702, %v801
        %v832 = vadd.f32 %v703, %v802
        %v833 = vadd.f32 %v704, %v803
        %v834 = vadd.f32 %v705, %v804
        %v835 = vadd.f32 %v706, %v805
        %v836 = vadd.f32 %v707, %v806
        %v837 = vadd.f32 %v708, %v807
        %v838 = vadd.f32 %v709, %v808
        %v839 = vadd.f32 %v710, %v809
        %v840 = vld [vmem:[%s192 + $0x2d] sm:$0x1]
        %841 = vrot.lane.b32.xlu0 %v218, 126
        %v842 = vpop.permute.xlu0 %841
        %843 = vrot.lane.b32.xlu0 %v219, 126
        %v844 = vpop.permute.xlu0 %843
        %845 = vrot.lane.b32.xlu0 %v220, 126
        %v846 = vpop.permute.xlu0 %845
        %847 = vrot.lane.b32.xlu0 %v221, 126
        %v848 = vpop.permute.xlu0 %847
        %849 = vrot.lane.b32.xlu0 %v222, 126
        %v850 = vpop.permute.xlu0 %849
        %851 = vrot.lane.b32.xlu0 %v223, 126
        %v852 = vpop.permute.xlu0 %851
        %853 = vrot.lane.b32.xlu0 %v224, 126
        %v854 = vpop.permute.xlu0 %853
        %855 = vrot.lane.b32.xlu0 %v225, 126
        %v856 = vpop.permute.xlu0 %855
        %857 = vrot.lane.b32.xlu0 %v226, 126
        %v858 = vpop.permute.xlu0 %857
        %859 = vrot.lane.b32.xlu0 %v227, 126
        %v860 = vpop.permute.xlu0 %859
        %861 = vrot.lane.b32.xlu0 %v228, 126
        %v862 = vpop.permute.xlu0 %861
        %863 = vrot.lane.b32.xlu0 %v229, 126
        %v864 = vpop.permute.xlu0 %863
        %865 = vrot.lane.b32.xlu0 %v230, 126
        %v866 = vpop.permute.xlu0 %865
        %867 = vrot.lane.b32.xlu0 %v231, 126
        %v868 = vpop.permute.xlu0 %867
        %869 = vrot.lane.b32.xlu0 %v232, 126
        %v870 = vpop.permute.xlu0 %869
        %871 = vrot.lane.b32.xlu0 %v233, 126
        %v872 = vpop.permute.xlu0 %871
        %873 = vrot.lane.b32.xlu0 %v234, 126
        %v874 = vpop.permute.xlu0 %873
        %875 = vrot.lane.b32.xlu0 %v235, 126
        %v876 = vpop.permute.xlu0 %875
        %877 = vrot.lane.b32.xlu0 %v236, 126
        %v878 = vpop.permute.xlu0 %877
        %879 = vrot.lane.b32.xlu0 %v237, 126
        %v880 = vpop.permute.xlu0 %879
        %881 = vrot.lane.b32.xlu0 %v238, 126
        %v882 = vpop.permute.xlu0 %881
        %883 = vrot.lane.b32.xlu0 %v239, 126
        %v884 = vpop.permute.xlu0 %883
        %885 = vrot.lane.b32.xlu0 %v240, 126
        %v886 = vpop.permute.xlu0 %885
        %887 = vrot.lane.b32.xlu0 %v241, 126
        %v888 = vpop.permute.xlu0 %887
        %889 = vrot.lane.b32.xlu0 %v242, 126
        %v890 = vpop.permute.xlu0 %889
        %891 = vrot.lane.b32.xlu0 %v243, 126
        %v892 = vpop.permute.xlu0 %891
        %893 = vrot.lane.b32.xlu0 %v244, 126
        %v894 = vpop.permute.xlu0 %893
        %895 = vrot.lane.b32.xlu0 %v245, 126
        %v896 = vpop.permute.xlu0 %895
        %897 = vrot.lane.b32.xlu0 %v246, 126
        %v898 = vpop.permute.xlu0 %897
        %899 = vrot.lane.b32.xlu0 %v247, 126
        %v900 = vpop.permute.xlu0 %899
        %901 = vrot.lane.b32.xlu0 %v248, 126
        %v902 = vpop.permute.xlu0 %901
        %903 = vrot.lane.b32.xlu0 %v249, 126
        %v904 = vpop.permute.xlu0 %903
        %v905 = vlaneseq
        %v906 = vshrl.u32 %v905, 7
        %v907 = vsub.s32 0, %v906
        %v908 = vrot.slane %v840, %v907
        %v909 = vmul.f32 %v908, %v842
        %v910 = vmul.f32 %v908, %v844
        %v911 = vmul.f32 %v908, %v846
        %v912 = vmul.f32 %v908, %v848
        %v913 = vmul.f32 %v908, %v850
        %v914 = vmul.f32 %v908, %v852
        %v915 = vmul.f32 %v908, %v854
        %v916 = vmul.f32 %v908, %v856
        %v917 = vmul.f32 %v908, %v858
        %v918 = vmul.f32 %v908, %v860
        %v919 = vmul.f32 %v908, %v862
        %v920 = vmul.f32 %v908, %v864
        %v921 = vmul.f32 %v908, %v866
        %v922 = vmul.f32 %v908, %v868
        %v923 = vmul.f32 %v908, %v870
        %v924 = vmul.f32 %v908, %v872
        %v925 = vmul.f32 %v908, %v874
        %v926 = vmul.f32 %v908, %v876
        %v927 = vmul.f32 %v908, %v878
        %v928 = vmul.f32 %v908, %v880
        %v929 = vmul.f32 %v908, %v882
        %v930 = vmul.f32 %v908, %v884
        %v931 = vmul.f32 %v908, %v886
        %v932 = vmul.f32 %v908, %v888
        %v933 = vmul.f32 %v908, %v890
        %v934 = vmul.f32 %v908, %v892
        %v935 = vmul.f32 %v908, %v894
        %v936 = vmul.f32 %v908, %v896
        %v937 = vmul.f32 %v908, %v898
        %v938 = vmul.f32 %v908, %v900
        %v939 = vadd.f32 %v810, %v909
        %v940 = vadd.f32 %v811, %v910
        %v941 = vadd.f32 %v812, %v911
        %v942 = vadd.f32 %v813, %v912
        %v943 = vadd.f32 %v814, %v913
        %v944 = vadd.f32 %v815, %v914
        %v945 = vadd.f32 %v816, %v915
        %v946 = vadd.f32 %v817, %v916
        %v947 = vadd.f32 %v818, %v917
        %v948 = vadd.f32 %v819, %v918
        %v949 = vadd.f32 %v820, %v919
        %v950 = vadd.f32 %v821, %v920
        %v951 = vadd.f32 %v822, %v921
        %v952 = vadd.f32 %v823, %v922
        %v953 = vadd.f32 %v824, %v923
        %v954 = vadd.f32 %v825, %v924
        %v955 = vadd.f32 %v826, %v925
        %v956 = vadd.f32 %v827, %v926
        %v957 = vadd.f32 %v828, %v927
        %v958 = vadd.f32 %v829, %v928
        %v959 = vadd.f32 %v830, %v929
        %v960 = vadd.f32 %v831, %v930
        %v961 = vadd.f32 %v832, %v931
        %v962 = vadd.f32 %v833, %v932
        %v963 = vadd.f32 %v834, %v933
        %v964 = vadd.f32 %v835, %v934
        %v965 = vadd.f32 %v836, %v935
        %v966 = vadd.f32 %v837, %v936
        %v967 = vadd.f32 %v838, %v937
        %v968 = vadd.f32 %v839, %v938
        %v969 = vld [vmem:[%s192 + $0x36] sm:$0x1]
        %970 = vrot.lane.b32.xlu0 %v218, 125
        %v971 = vpop.permute.xlu0 %970
        %972 = vrot.lane.b32.xlu0 %v219, 125
        %v973 = vpop.permute.xlu0 %972
        %974 = vrot.lane.b32.xlu0 %v220, 125
        %v975 = vpop.permute.xlu0 %974
        %976 = vrot.lane.b32.xlu0 %v221, 125
        %v977 = vpop.permute.xlu0 %976
        %978 = vrot.lane.b32.xlu0 %v222, 125
        %v979 = vpop.permute.xlu0 %978
        %980 = vrot.lane.b32.xlu0 %v223, 125
        %v981 = vpop.permute.xlu0 %980
        %982 = vrot.lane.b32.xlu0 %v224, 125
        %v983 = vpop.permute.xlu0 %982
        %984 = vrot.lane.b32.xlu0 %v225, 125
        %v985 = vpop.permute.xlu0 %984
        %986 = vrot.lane.b32.xlu0 %v226, 125
        %v987 = vpop.permute.xlu0 %986
        %988 = vrot.lane.b32.xlu0 %v227, 125
        %v989 = vpop.permute.xlu0 %988
        %990 = vrot.lane.b32.xlu0 %v228, 125
        %v991 = vpop.permute.xlu0 %990
        %992 = vrot.lane.b32.xlu0 %v229, 125
        %v993 = vpop.permute.xlu0 %992
        %994 = vrot.lane.b32.xlu0 %v230, 125
        %v995 = vpop.permute.xlu0 %994
        %996 = vrot.lane.b32.xlu0 %v231, 125
        %v997 = vpop.permute.xlu0 %996
        %998 = vrot.lane.b32.xlu0 %v232, 125
        %v999 = vpop.permute.xlu0 %998
        %1000 = vrot.lane.b32.xlu0 %v233, 125
        %v1001 = vpop.permute.xlu0 %1000
        %1002 = vrot.lane.b32.xlu0 %v234, 125
        %v1003 = vpop.permute.xlu0 %1002
        %1004 = vrot.lane.b32.xlu0 %v235, 125
        %v1005 = vpop.permute.xlu0 %1004
        %1006 = vrot.lane.b32.xlu0 %v236, 125
        %v1007 = vpop.permute.xlu0 %1006
        %1008 = vrot.lane.b32.xlu0 %v237, 125
        %v1009 = vpop.permute.xlu0 %1008
        %1010 = vrot.lane.b32.xlu0 %v238, 125
        %v1011 = vpop.permute.xlu0 %1010
        %1012 = vrot.lane.b32.xlu0 %v239, 125
        %v1013 = vpop.permute.xlu0 %1012
        %1014 = vrot.lane.b32.xlu0 %v240, 125
        %v1015 = vpop.permute.xlu0 %1014
        %1016 = vrot.lane.b32.xlu0 %v241, 125
        %v1017 = vpop.permute.xlu0 %1016
        %1018 = vrot.lane.b32.xlu0 %v242, 125
        %v1019 = vpop.permute.xlu0 %1018
        %1020 = vrot.lane.b32.xlu0 %v243, 125
        %v1021 = vpop.permute.xlu0 %1020
        %1022 = vrot.lane.b32.xlu0 %v244, 125
        %v1023 = vpop.permute.xlu0 %1022
        %1024 = vrot.lane.b32.xlu0 %v245, 125
        %v1025 = vpop.permute.xlu0 %1024
        %1026 = vrot.lane.b32.xlu0 %v246, 125
        %v1027 = vpop.permute.xlu0 %1026
        %1028 = vrot.lane.b32.xlu0 %v247, 125
        %v1029 = vpop.permute.xlu0 %1028
        %1030 = vrot.lane.b32.xlu0 %v248, 125
        %v1031 = vpop.permute.xlu0 %1030
        %1032 = vrot.lane.b32.xlu0 %v249, 125
        %v1033 = vpop.permute.xlu0 %1032
        %v1034 = vlaneseq
        %v1035 = vshrl.u32 %v1034, 7
        %v1036 = vsub.s32 0, %v1035
        %v1037 = vrot.slane %v969, %v1036
        %v1038 = vmul.f32 %v1037, %v971
        %v1039 = vmul.f32 %v1037, %v973
        %v1040 = vmul.f32 %v1037, %v975
        %v1041 = vmul.f32 %v1037, %v977
        %v1042 = vmul.f32 %v1037, %v979
        %v1043 = vmul.f32 %v1037, %v981
        %v1044 = vmul.f32 %v1037, %v983
        %v1045 = vmul.f32 %v1037, %v985
        %v1046 = vmul.f32 %v1037, %v987
        %v1047 = vmul.f32 %v1037, %v989
        %v1048 = vmul.f32 %v1037, %v991
        %v1049 = vmul.f32 %v1037, %v993
        %v1050 = vmul.f32 %v1037, %v995
        %v1051 = vmul.f32 %v1037, %v997
        %v1052 = vmul.f32 %v1037, %v999
        %v1053 = vmul.f32 %v1037, %v1001
        %v1054 = vmul.f32 %v1037, %v1003
        %v1055 = vmul.f32 %v1037, %v1005
        %v1056 = vmul.f32 %v1037, %v1007
        %v1057 = vmul.f32 %v1037, %v1009
        %v1058 = vmul.f32 %v1037, %v1011
        %v1059 = vmul.f32 %v1037, %v1013
        %v1060 = vmul.f32 %v1037, %v1015
        %v1061 = vmul.f32 %v1037, %v1017
        %v1062 = vmul.f32 %v1037, %v1019
        %v1063 = vmul.f32 %v1037, %v1021
        %v1064 = vmul.f32 %v1037, %v1023
        %v1065 = vmul.f32 %v1037, %v1025
        %v1066 = vmul.f32 %v1037, %v1027
        %v1067 = vmul.f32 %v1037, %v1029
        %v1068 = vadd.f32 %v939, %v1038
        %v1069 = vadd.f32 %v940, %v1039
        %v1070 = vadd.f32 %v941, %v1040
        %v1071 = vadd.f32 %v942, %v1041
        %v1072 = vadd.f32 %v943, %v1042
        %v1073 = vadd.f32 %v944, %v1043
        %v1074 = vadd.f32 %v945, %v1044
        %v1075 = vadd.f32 %v946, %v1045
        %v1076 = vadd.f32 %v947, %v1046
        %v1077 = vadd.f32 %v948, %v1047
        %v1078 = vadd.f32 %v949, %v1048
        %v1079 = vadd.f32 %v950, %v1049
        %v1080 = vadd.f32 %v951, %v1050
        %v1081 = vadd.f32 %v952, %v1051
        %v1082 = vadd.f32 %v953, %v1052
        %v1083 = vadd.f32 %v954, %v1053
        %v1084 = vadd.f32 %v955, %v1054
        %v1085 = vadd.f32 %v956, %v1055
        %v1086 = vadd.f32 %v957, %v1056
        %v1087 = vadd.f32 %v958, %v1057
        %v1088 = vadd.f32 %v959, %v1058
        %v1089 = vadd.f32 %v960, %v1059
        %v1090 = vadd.f32 %v961, %v1060
        %v1091 = vadd.f32 %v962, %v1061
        %v1092 = vadd.f32 %v963, %v1062
        %v1093 = vadd.f32 %v964, %v1063
        %v1094 = vadd.f32 %v965, %v1064
        %v1095 = vadd.f32 %v966, %v1065
        %v1096 = vadd.f32 %v967, %v1066
        %v1097 = vadd.f32 %v968, %v1067
        %v1098 = vrot.slane %v1068, 7
        %v1099 = vrot.slane %v1070, 7
        %v1100 = vrot.slane %v1072, 7
        %v1101 = vrot.slane %v1074, 7
        %v1102 = vrot.slane %v1076, 7
        %v1103 = vrot.slane %v1078, 7
        %v1104 = vrot.slane %v1080, 7
        %v1105 = vrot.slane %v1082, 7
        %v1106 = vrot.slane %v1084, 7
        %v1107 = vrot.slane %v1086, 7
        %v1108 = vrot.slane %v1088, 7
        %v1109 = vrot.slane %v1090, 7
        %v1110 = vrot.slane %v1092, 7
        %v1111 = vrot.slane %v1094, 7
        %v1112 = vrot.slane %v1096, 7
        %v1113 = vrot.slane %v1069, 7
        %v1114 = vrot.slane %v1071, 7
        %v1115 = vrot.slane %v1073, 7
        %v1116 = vrot.slane %v1075, 7
        %v1117 = vrot.slane %v1077, 7
        %v1118 = vrot.slane %v1079, 7
        %v1119 = vrot.slane %v1081, 7
        %v1120 = vrot.slane %v1083, 7
        %v1121 = vrot.slane %v1085, 7
        %v1122 = vrot.slane %v1087, 7
        %v1123 = vrot.slane %v1089, 7
        %v1124 = vrot.slane %v1091, 7
        %v1125 = vrot.slane %v1093, 7
        %v1126 = vrot.slane %v1095, 7
        %v1127 = vrot.slane %v1097, 7
        %vm1128 = vcmp.lt.s32.totalorder %v251, 1
        %v1129 = vsel %vm1128, %v1098, %v1113
        %v1130 = vsel %vm1128, %v1099, %v1114
        %v1131 = vsel %vm1128, %v1100, %v1115
        %v1132 = vsel %vm1128, %v1101, %v1116
        %v1133 = vsel %vm1128, %v1102, %v1117
        %v1134 = vsel %vm1128, %v1103, %v1118
        %v1135 = vsel %vm1128, %v1104, %v1119
        %v1136 = vsel %vm1128, %v1105, %v1120
        %v1137 = vsel %vm1128, %v1106, %v1121
        %v1138 = vsel %vm1128, %v1107, %v1122
        %v1139 = vsel %vm1128, %v1108, %v1123
        %v1140 = vsel %vm1128, %v1109, %v1124
        %v1141 = vsel %vm1128, %v1110, %v1125
        %v1142 = vsel %vm1128, %v1111, %v1126
        %v1143 = vsel %vm1128, %v1112, %v1127
        %v1144 = vsel %vm1128, %v1113, %v1098
        %v1145 = vsel %vm1128, %v1114, %v1099
        %v1146 = vsel %vm1128, %v1115, %v1100
        %v1147 = vsel %vm1128, %v1116, %v1101
        %v1148 = vsel %vm1128, %v1117, %v1102
        %v1149 = vsel %vm1128, %v1118, %v1103
        %v1150 = vsel %vm1128, %v1119, %v1104
        %v1151 = vsel %vm1128, %v1120, %v1105
        %v1152 = vsel %vm1128, %v1121, %v1106
        %v1153 = vsel %vm1128, %v1122, %v1107
        %v1154 = vsel %vm1128, %v1123, %v1108
        %v1155 = vsel %vm1128, %v1124, %v1109
        %v1156 = vsel %vm1128, %v1125, %v1110
        %v1157 = vsel %vm1128, %v1126, %v1111
        %v1158 = vsel %vm1128, %v1127, %v1112
        %vm1159 = vcmp.lt.s32.totalorder %v252, 1
        %v1160 = vsel %vm1128, 0.0, %v1144
        %v1161 = vsel %vm1159, 0.0, %v1129
        %v1162 = vsel %vm1128, 0.0, %v1145
        %v1163 = vsel %vm1159, 0.0, %v1130
        %v1164 = vsel %vm1128, 0.0, %v1146
        %v1165 = vsel %vm1159, 0.0, %v1131
        %v1166 = vsel %vm1128, 0.0, %v1147
        %v1167 = vsel %vm1159, 0.0, %v1132
        %v1168 = vsel %vm1128, 0.0, %v1148
        %v1169 = vsel %vm1159, 0.0, %v1133
        %v1170 = vsel %vm1128, 0.0, %v1149
        %v1171 = vsel %vm1159, 0.0, %v1134
        %v1172 = vsel %vm1128, 0.0, %v1150
        %v1173 = vsel %vm1159, 0.0, %v1135
        %v1174 = vsel %vm1128, 0.0, %v1151
        %v1175 = vsel %vm1159, 0.0, %v1136
        %v1176 = vsel %vm1128, 0.0, %v1152
        %v1177 = vsel %vm1159, 0.0, %v1137
        %v1178 = vsel %vm1128, 0.0, %v1153
        %v1179 = vsel %vm1159, 0.0, %v1138
        %v1180 = vsel %vm1128, 0.0, %v1154
        %v1181 = vsel %vm1159, 0.0, %v1139
        %v1182 = vsel %vm1128, 0.0, %v1155
        %v1183 = vsel %vm1159, 0.0, %v1140
        %v1184 = vsel %vm1128, 0.0, %v1156
        %v1185 = vsel %vm1159, 0.0, %v1141
        %v1186 = vsel %vm1128, 0.0, %v1157
        %v1187 = vsel %vm1159, 0.0, %v1142
        %v1188 = vsel %vm1128, 0.0, %v1158
        %v1189 = vsel %vm1159, 0.0, %v1143
        %v1190 = vadd.f32 %v258, 0.0
        %v1191 = vadd.f32 %v258, %v1160
        %v1192 = vadd.f32 %v258, %v1161
        %v1193 = vadd.f32 %v258, %v1162
        %v1194 = vadd.f32 %v258, %v1163
        %v1195 = vadd.f32 %v258, %v1164
        %v1196 = vadd.f32 %v258, %v1165
        %v1197 = vadd.f32 %v258, %v1166
        %v1198 = vadd.f32 %v258, %v1167
        %v1199 = vadd.f32 %v258, %v1168
        %v1200 = vadd.f32 %v258, %v1169
        %v1201 = vadd.f32 %v258, %v1170
        %v1202 = vadd.f32 %v258, %v1171
        %v1203 = vadd.f32 %v258, %v1172
        %v1204 = vadd.f32 %v258, %v1173
        %v1205 = vadd.f32 %v258, %v1174
        %v1206 = vadd.f32 %v258, %v1175
        %v1207 = vadd.f32 %v258, %v1176
        %v1208 = vadd.f32 %v258, %v1177
        %v1209 = vadd.f32 %v258, %v1178
        %v1210 = vadd.f32 %v258, %v1179
        %v1211 = vadd.f32 %v258, %v1180
        %v1212 = vadd.f32 %v258, %v1181
        %v1213 = vadd.f32 %v258, %v1182
        %v1214 = vadd.f32 %v258, %v1183
        %v1215 = vadd.f32 %v258, %v1184
        %v1216 = vadd.f32 %v258, %v1185
        %v1217 = vadd.f32 %v258, %v1186
        %v1218 = vadd.f32 %v258, %v1187
        %v1219 = vadd.f32 %v258, %v1188
        %v1220 = vadd.f32 %v258, %v1189
        %v1221 = vld [vmem:[%s192 + $0x1] sm:$0x1]
        %v1222 = vlaneseq
        %v1223 = vshrl.u32 %v1222, 7
        %v1224 = vsub.s32 0, %v1223
        %v1225 = vrot.slane %v1221, %v1224
        %v1226 = vmul.f32 %v1225, %v261
        %v1227 = vmul.f32 %v1225, %v263
        %v1228 = vmul.f32 %v1225, %v265
        %v1229 = vmul.f32 %v1225, %v267
        %v1230 = vmul.f32 %v1225, %v269
        %v1231 = vmul.f32 %v1225, %v271
        %v1232 = vmul.f32 %v1225, %v273
        %v1233 = vmul.f32 %v1225, %v275
        %v1234 = vmul.f32 %v1225, %v277
        %v1235 = vmul.f32 %v1225, %v279
        %v1236 = vmul.f32 %v1225, %v281
        %v1237 = vmul.f32 %v1225, %v283
        %v1238 = vmul.f32 %v1225, %v285
        %v1239 = vmul.f32 %v1225, %v287
        %v1240 = vmul.f32 %v1225, %v289
        %v1241 = vmul.f32 %v1225, %v291
        %v1242 = vmul.f32 %v1225, %v293
        %v1243 = vmul.f32 %v1225, %v295
        %v1244 = vmul.f32 %v1225, %v297
        %v1245 = vmul.f32 %v1225, %v299
        %v1246 = vmul.f32 %v1225, %v301
        %v1247 = vmul.f32 %v1225, %v303
        %v1248 = vmul.f32 %v1225, %v305
        %v1249 = vmul.f32 %v1225, %v307
        %v1250 = vmul.f32 %v1225, %v309
        %v1251 = vmul.f32 %v1225, %v311
        %v1252 = vmul.f32 %v1225, %v313
        %v1253 = vmul.f32 %v1225, %v315
        %v1254 = vmul.f32 %v1225, %v317
        %v1255 = vmul.f32 %v1225, %v319
        %v1256 = vadd.f32 %v1226, 0.0
        %v1257 = vadd.f32 %v1227, 0.0
        %v1258 = vadd.f32 %v1228, 0.0
        %v1259 = vadd.f32 %v1229, 0.0
        %v1260 = vadd.f32 %v1230, 0.0
        %v1261 = vadd.f32 %v1231, 0.0
        %v1262 = vadd.f32 %v1232, 0.0
        %v1263 = vadd.f32 %v1233, 0.0
        %v1264 = vadd.f32 %v1234, 0.0
        %v1265 = vadd.f32 %v1235, 0.0
        %v1266 = vadd.f32 %v1236, 0.0
        %v1267 = vadd.f32 %v1237, 0.0
        %v1268 = vadd.f32 %v1238, 0.0
        %v1269 = vadd.f32 %v1239, 0.0
        %v1270 = vadd.f32 %v1240, 0.0
        %v1271 = vadd.f32 %v1241, 0.0
        %v1272 = vadd.f32 %v1242, 0.0
        %v1273 = vadd.f32 %v1243, 0.0
        %v1274 = vadd.f32 %v1244, 0.0
        %v1275 = vadd.f32 %v1245, 0.0
        %v1276 = vadd.f32 %v1246, 0.0
        %v1277 = vadd.f32 %v1247, 0.0
        %v1278 = vadd.f32 %v1248, 0.0
        %v1279 = vadd.f32 %v1249, 0.0
        %v1280 = vadd.f32 %v1250, 0.0
        %v1281 = vadd.f32 %v1251, 0.0
        %v1282 = vadd.f32 %v1252, 0.0
        %v1283 = vadd.f32 %v1253, 0.0
        %v1284 = vadd.f32 %v1254, 0.0
        %v1285 = vadd.f32 %v1255, 0.0
        %v1286 = vld [vmem:[%s192 + $0xa] sm:$0x1]
        %v1287 = vlaneseq
        %v1288 = vshrl.u32 %v1287, 7
        %v1289 = vsub.s32 0, %v1288
        %v1290 = vrot.slane %v1286, %v1289
        %v1291 = vmul.f32 %v1290, %v390
        %v1292 = vmul.f32 %v1290, %v392
        %v1293 = vmul.f32 %v1290, %v394
        %v1294 = vmul.f32 %v1290, %v396
        %v1295 = vmul.f32 %v1290, %v398
        %v1296 = vmul.f32 %v1290, %v400
        %v1297 = vmul.f32 %v1290, %v402
        %v1298 = vmul.f32 %v1290, %v404
        %v1299 = vmul.f32 %v1290, %v406
        %v1300 = vmul.f32 %v1290, %v408
        %v1301 = vmul.f32 %v1290, %v410
        %v1302 = vmul.f32 %v1290, %v412
        %v1303 = vmul.f32 %v1290, %v414
        %v1304 = vmul.f32 %v1290, %v416
        %v1305 = vmul.f32 %v1290, %v418
        %v1306 = vmul.f32 %v1290, %v420
        %v1307 = vmul.f32 %v1290, %v422
        %v1308 = vmul.f32 %v1290, %v424
        %v1309 = vmul.f32 %v1290, %v426
        %v1310 = vmul.f32 %v1290, %v428
        %v1311 = vmul.f32 %v1290, %v430
        %v1312 = vmul.f32 %v1290, %v432
        %v1313 = vmul.f32 %v1290, %v434
        %v1314 = vmul.f32 %v1290, %v436
        %v1315 = vmul.f32 %v1290, %v438
        %v1316 = vmul.f32 %v1290, %v440
        %v1317 = vmul.f32 %v1290, %v442
        %v1318 = vmul.f32 %v1290, %v444
        %v1319 = vmul.f32 %v1290, %v446
        %v1320 = vmul.f32 %v1290, %v448
        %v1321 = vadd.f32 %v1256, %v1291
        %v1322 = vadd.f32 %v1257, %v1292
        %v1323 = vadd.f32 %v1258, %v1293
        %v1324 = vadd.f32 %v1259, %v1294
        %v1325 = vadd.f32 %v1260, %v1295
        %v1326 = vadd.f32 %v1261, %v1296
        %v1327 = vadd.f32 %v1262, %v1297
        %v1328 = vadd.f32 %v1263, %v1298
        %v1329 = vadd.f32 %v1264, %v1299
        %v1330 = vadd.f32 %v1265, %v1300
        %v1331 = vadd.f32 %v1266, %v1301
        %v1332 = vadd.f32 %v1267, %v1302
        %v1333 = vadd.f32 %v1268, %v1303
        %v1334 = vadd.f32 %v1269, %v1304
        %v1335 = vadd.f32 %v1270, %v1305
        %v1336 = vadd.f32 %v1271, %v1306
        %v1337 = vadd.f32 %v1272, %v1307
        %v1338 = vadd.f32 %v1273, %v1308
        %v1339 = vadd.f32 %v1274, %v1309
        %v1340 = vadd.f32 %v1275, %v1310
        %v1341 = vadd.f32 %v1276, %v1311
        %v1342 = vadd.f32 %v1277, %v1312
        %v1343 = vadd.f32 %v1278, %v1313
        %v1344 = vadd.f32 %v1279, %v1314
        %v1345 = vadd.f32 %v1280, %v1315
        %v1346 = vadd.f32 %v1281, %v1316
        %v1347 = vadd.f32 %v1282, %v1317
        %v1348 = vadd.f32 %v1283, %v1318
        %v1349 = vadd.f32 %v1284, %v1319
        %v1350 = vadd.f32 %v1285, %v1320
        %v1351 = vld [vmem:[%s192 + $0x13] sm:$0x1]
        %v1352 = vlaneseq
        %v1353 = vshrl.u32 %v1352, 7
        %v1354 = vsub.s32 0, %v1353
        %v1355 = vrot.slane %v1351, %v1354
        %v1356 = vmul.f32 %v1355, %v519
        %v1357 = vmul.f32 %v1355, %v521
        %v1358 = vmul.f32 %v1355, %v523
        %v1359 = vmul.f32 %v1355, %v525
        %v1360 = vmul.f32 %v1355, %v527
        %v1361 = vmul.f32 %v1355, %v529
        %v1362 = vmul.f32 %v1355, %v531
        %v1363 = vmul.f32 %v1355, %v533
        %v1364 = vmul.f32 %v1355, %v535
        %v1365 = vmul.f32 %v1355, %v537
        %v1366 = vmul.f32 %v1355, %v539
        %v1367 = vmul.f32 %v1355, %v541
        %v1368 = vmul.f32 %v1355, %v543
        %v1369 = vmul.f32 %v1355, %v545
        %v1370 = vmul.f32 %v1355, %v547
        %v1371 = vmul.f32 %v1355, %v549
        %v1372 = vmul.f32 %v1355, %v551
        %v1373 = vmul.f32 %v1355, %v553
        %v1374 = vmul.f32 %v1355, %v555
        %v1375 = vmul.f32 %v1355, %v557
        %v1376 = vmul.f32 %v1355, %v559
        %v1377 = vmul.f32 %v1355, %v561
        %v1378 = vmul.f32 %v1355, %v563
        %v1379 = vmul.f32 %v1355, %v565
        %v1380 = vmul.f32 %v1355, %v567
        %v1381 = vmul.f32 %v1355, %v569
        %v1382 = vmul.f32 %v1355, %v571
        %v1383 = vmul.f32 %v1355, %v573
        %v1384 = vmul.f32 %v1355, %v575
        %v1385 = vmul.f32 %v1355, %v577
        %v1386 = vadd.f32 %v1321, %v1356
        %v1387 = vadd.f32 %v1322, %v1357
        %v1388 = vadd.f32 %v1323, %v1358
        %v1389 = vadd.f32 %v1324, %v1359
        %v1390 = vadd.f32 %v1325, %v1360
        %v1391 = vadd.f32 %v1326, %v1361
        %v1392 = vadd.f32 %v1327, %v1362
        %v1393 = vadd.f32 %v1328, %v1363
        %v1394 = vadd.f32 %v1329, %v1364
        %v1395 = vadd.f32 %v1330, %v1365
        %v1396 = vadd.f32 %v1331, %v1366
        %v1397 = vadd.f32 %v1332, %v1367
        %v1398 = vadd.f32 %v1333, %v1368
        %v1399 = vadd.f32 %v1334, %v1369
        %v1400 = vadd.f32 %v1335, %v1370
        %v1401 = vadd.f32 %v1336, %v1371
        %v1402 = vadd.f32 %v1337, %v1372
        %v1403 = vadd.f32 %v1338, %v1373
        %v1404 = vadd.f32 %v1339, %v1374
        %v1405 = vadd.f32 %v1340, %v1375
        %v1406 = vadd.f32 %v1341, %v1376
        %v1407 = vadd.f32 %v1342, %v1377
        %v1408 = vadd.f32 %v1343, %v1378
        %v1409 = vadd.f32 %v1344, %v1379
        %v1410 = vadd.f32 %v1345, %v1380
        %v1411 = vadd.f32 %v1346, %v1381
        %v1412 = vadd.f32 %v1347, %v1382
        %v1413 = vadd.f32 %v1348, %v1383
        %v1414 = vadd.f32 %v1349, %v1384
        %v1415 = vadd.f32 %v1350, %v1385
        %v1416 = vld [vmem:[%s192 + $0x1c] sm:$0x1]
        %v1417 = vlaneseq
        %v1418 = vshrl.u32 %v1417, 7
        %v1419 = vsub.s32 0, %v1418
        %v1420 = vrot.slane %v1416, %v1419
        %v1421 = vmul.f32 %v1420, %v218
        %v1422 = vmul.f32 %v1420, %v219
        %v1423 = vmul.f32 %v1420, %v220
        %v1424 = vmul.f32 %v1420, %v221
        %v1425 = vmul.f32 %v1420, %v222
        %v1426 = vmul.f32 %v1420, %v223
        %v1427 = vmul.f32 %v1420, %v224
        %v1428 = vmul.f32 %v1420, %v225
        %v1429 = vmul.f32 %v1420, %v226
        %v1430 = vmul.f32 %v1420, %v227
        %v1431 = vmul.f32 %v1420, %v228
        %v1432 = vmul.f32 %v1420, %v229
        %v1433 = vmul.f32 %v1420, %v230
        %v1434 = vmul.f32 %v1420, %v231
        %v1435 = vmul.f32 %v1420, %v232
        %v1436 = vmul.f32 %v1420, %v233
        %v1437 = vmul.f32 %v1420, %v234
        %v1438 = vmul.f32 %v1420, %v235
        %v1439 = vmul.f32 %v1420, %v236
        %v1440 = vmul.f32 %v1420, %v237
        %v1441 = vmul.f32 %v1420, %v238
        %v1442 = vmul.f32 %v1420, %v239
        %v1443 = vmul.f32 %v1420, %v240
        %v1444 = vmul.f32 %v1420, %v241
        %v1445 = vmul.f32 %v1420, %v242
        %v1446 = vmul.f32 %v1420, %v243
        %v1447 = vmul.f32 %v1420, %v244
        %v1448 = vmul.f32 %v1420, %v245
        %v1449 = vmul.f32 %v1420, %v246
        %v1450 = vmul.f32 %v1420, %v247
        %v1451 = vadd.f32 %v1386, %v1421
        %v1452 = vadd.f32 %v1387, %v1422
        %v1453 = vadd.f32 %v1388, %v1423
        %v1454 = vadd.f32 %v1389, %v1424
        %v1455 = vadd.f32 %v1390, %v1425
        %v1456 = vadd.f32 %v1391, %v1426
        %v1457 = vadd.f32 %v1392, %v1427
        %v1458 = vadd.f32 %v1393, %v1428
        %v1459 = vadd.f32 %v1394, %v1429
        %v1460 = vadd.f32 %v1395, %v1430
        %v1461 = vadd.f32 %v1396, %v1431
        %v1462 = vadd.f32 %v1397, %v1432
        %v1463 = vadd.f32 %v1398, %v1433
        %v1464 = vadd.f32 %v1399, %v1434
        %v1465 = vadd.f32 %v1400, %v1435
        %v1466 = vadd.f32 %v1401, %v1436
        %v1467 = vadd.f32 %v1402, %v1437
        %v1468 = vadd.f32 %v1403, %v1438
        %v1469 = vadd.f32 %v1404, %v1439
        %v1470 = vadd.f32 %v1405, %v1440
        %v1471 = vadd.f32 %v1406, %v1441
        %v1472 = vadd.f32 %v1407, %v1442
        %v1473 = vadd.f32 %v1408, %v1443
        %v1474 = vadd.f32 %v1409, %v1444
        %v1475 = vadd.f32 %v1410, %v1445
        %v1476 = vadd.f32 %v1411, %v1446
        %v1477 = vadd.f32 %v1412, %v1447
        %v1478 = vadd.f32 %v1413, %v1448
        %v1479 = vadd.f32 %v1414, %v1449
        %v1480 = vadd.f32 %v1415, %v1450
        %v1481 = vld [vmem:[%s192 + $0x25] sm:$0x1]
        %v1482 = vlaneseq
        %v1483 = vshrl.u32 %v1482, 7
        %v1484 = vsub.s32 0, %v1483
        %v1485 = vrot.slane %v1481, %v1484
        %v1486 = vmul.f32 %v1485, %v713
        %v1487 = vmul.f32 %v1485, %v715
        %v1488 = vmul.f32 %v1485, %v717
        %v1489 = vmul.f32 %v1485, %v719
        %v1490 = vmul.f32 %v1485, %v721
        %v1491 = vmul.f32 %v1485, %v723
        %v1492 = vmul.f32 %v1485, %v725
        %v1493 = vmul.f32 %v1485, %v727
        %v1494 = vmul.f32 %v1485, %v729
        %v1495 = vmul.f32 %v1485, %v731
        %v1496 = vmul.f32 %v1485, %v733
        %v1497 = vmul.f32 %v1485, %v735
        %v1498 = vmul.f32 %v1485, %v737
        %v1499 = vmul.f32 %v1485, %v739
        %v1500 = vmul.f32 %v1485, %v741
        %v1501 = vmul.f32 %v1485, %v743
        %v1502 = vmul.f32 %v1485, %v745
        %v1503 = vmul.f32 %v1485, %v747
        %v1504 = vmul.f32 %v1485, %v749
        %v1505 = vmul.f32 %v1485, %v751
        %v1506 = vmul.f32 %v1485, %v753
        %v1507 = vmul.f32 %v1485, %v755
        %v1508 = vmul.f32 %v1485, %v757
        %v1509 = vmul.f32 %v1485, %v759
        %v1510 = vmul.f32 %v1485, %v761
        %v1511 = vmul.f32 %v1485, %v763
        %v1512 = vmul.f32 %v1485, %v765
        %v1513 = vmul.f32 %v1485, %v767
        %v1514 = vmul.f32 %v1485, %v769
        %v1515 = vmul.f32 %v1485, %v771
        %v1516 = vadd.f32 %v1451, %v1486
        %v1517 = vadd.f32 %v1452, %v1487
        %v1518 = vadd.f32 %v1453, %v1488
        %v1519 = vadd.f32 %v1454, %v1489
        %v1520 = vadd.f32 %v1455, %v1490
        %v1521 = vadd.f32 %v1456, %v1491
        %v1522 = vadd.f32 %v1457, %v1492
        %v1523 = vadd.f32 %v1458, %v1493
        %v1524 = vadd.f32 %v1459, %v1494
        %v1525 = vadd.f32 %v1460, %v1495
        %v1526 = vadd.f32 %v1461, %v1496
        %v1527 = vadd.f32 %v1462, %v1497
        %v1528 = vadd.f32 %v1463, %v1498
        %v1529 = vadd.f32 %v1464, %v1499
        %v1530 = vadd.f32 %v1465, %v1500
        %v1531 = vadd.f32 %v1466, %v1501
        %v1532 = vadd.f32 %v1467, %v1502
        %v1533 = vadd.f32 %v1468, %v1503
        %v1534 = vadd.f32 %v1469, %v1504
        %v1535 = vadd.f32 %v1470, %v1505
        %v1536 = vadd.f32 %v1471, %v1506
        %v1537 = vadd.f32 %v1472, %v1507
        %v1538 = vadd.f32 %v1473, %v1508
        %v1539 = vadd.f32 %v1474, %v1509
        %v1540 = vadd.f32 %v1475, %v1510
        %v1541 = vadd.f32 %v1476, %v1511
        %v1542 = vadd.f32 %v1477, %v1512
        %v1543 = vadd.f32 %v1478, %v1513
        %v1544 = vadd.f32 %v1479, %v1514
        %v1545 = vadd.f32 %v1480, %v1515
        %v1546 = vld [vmem:[%s192 + $0x2e] sm:$0x1]
        %v1547 = vlaneseq
        %v1548 = vshrl.u32 %v1547, 7
        %v1549 = vsub.s32 0, %v1548
        %v1550 = vrot.slane %v1546, %v1549
        %v1551 = vmul.f32 %v1550, %v842
        %v1552 = vmul.f32 %v1550, %v844
        %v1553 = vmul.f32 %v1550, %v846
        %v1554 = vmul.f32 %v1550, %v848
        %v1555 = vmul.f32 %v1550, %v850
        %v1556 = vmul.f32 %v1550, %v852
        %v1557 = vmul.f32 %v1550, %v854
        %v1558 = vmul.f32 %v1550, %v856
        %v1559 = vmul.f32 %v1550, %v858
        %v1560 = vmul.f32 %v1550, %v860
        %v1561 = vmul.f32 %v1550, %v862
        %v1562 = vmul.f32 %v1550, %v864
        %v1563 = vmul.f32 %v1550, %v866
        %v1564 = vmul.f32 %v1550, %v868
        %v1565 = vmul.f32 %v1550, %v870
        %v1566 = vmul.f32 %v1550, %v872
        %v1567 = vmul.f32 %v1550, %v874
        %v1568 = vmul.f32 %v1550, %v876
        %v1569 = vmul.f32 %v1550, %v878
        %v1570 = vmul.f32 %v1550, %v880
        %v1571 = vmul.f32 %v1550, %v882
        %v1572 = vmul.f32 %v1550, %v884
        %v1573 = vmul.f32 %v1550, %v886
        %v1574 = vmul.f32 %v1550, %v888
        %v1575 = vmul.f32 %v1550, %v890
        %v1576 = vmul.f32 %v1550, %v892
        %v1577 = vmul.f32 %v1550, %v894
        %v1578 = vmul.f32 %v1550, %v896
        %v1579 = vmul.f32 %v1550, %v898
        %v1580 = vmul.f32 %v1550, %v900
        %v1581 = vadd.f32 %v1516, %v1551
        %v1582 = vadd.f32 %v1517, %v1552
        %v1583 = vadd.f32 %v1518, %v1553
        %v1584 = vadd.f32 %v1519, %v1554
        %v1585 = vadd.f32 %v1520, %v1555
        %v1586 = vadd.f32 %v1521, %v1556
        %v1587 = vadd.f32 %v1522, %v1557
        %v1588 = vadd.f32 %v1523, %v1558
        %v1589 = vadd.f32 %v1524, %v1559
        %v1590 = vadd.f32 %v1525, %v1560
        %v1591 = vadd.f32 %v1526, %v1561
        %v1592 = vadd.f32 %v1527, %v1562
        %v1593 = vadd.f32 %v1528, %v1563
        %v1594 = vadd.f32 %v1529, %v1564
        %v1595 = vadd.f32 %v1530, %v1565
        %v1596 = vadd.f32 %v1531, %v1566
        %v1597 = vadd.f32 %v1532, %v1567
        %v1598 = vadd.f32 %v1533, %v1568
        %v1599 = vadd.f32 %v1534, %v1569
        %v1600 = vadd.f32 %v1535, %v1570
        %v1601 = vadd.f32 %v1536, %v1571
        %v1602 = vadd.f32 %v1537, %v1572
        %v1603 = vadd.f32 %v1538, %v1573
        %v1604 = vadd.f32 %v1539, %v1574
        %v1605 = vadd.f32 %v1540, %v1575
        %v1606 = vadd.f32 %v1541, %v1576
        %v1607 = vadd.f32 %v1542, %v1577
        %v1608 = vadd.f32 %v1543, %v1578
        %v1609 = vadd.f32 %v1544, %v1579
        %v1610 = vadd.f32 %v1545, %v1580
        %v1611 = vld [vmem:[%s192 + $0x37] sm:$0x1]
        %v1612 = vlaneseq
        %v1613 = vshrl.u32 %v1612, 7
        %v1614 = vsub.s32 0, %v1613
        %v1615 = vrot.slane %v1611, %v1614
        %v1616 = vmul.f32 %v1615, %v971
        %v1617 = vmul.f32 %v1615, %v973
        %v1618 = vmul.f32 %v1615, %v975
        %v1619 = vmul.f32 %v1615, %v977
        %v1620 = vmul.f32 %v1615, %v979
        %v1621 = vmul.f32 %v1615, %v981
        %v1622 = vmul.f32 %v1615, %v983
        %v1623 = vmul.f32 %v1615, %v985
        %v1624 = vmul.f32 %v1615, %v987
        %v1625 = vmul.f32 %v1615, %v989
        %v1626 = vmul.f32 %v1615, %v991
        %v1627 = vmul.f32 %v1615, %v993
        %v1628 = vmul.f32 %v1615, %v995
        %v1629 = vmul.f32 %v1615, %v997
        %v1630 = vmul.f32 %v1615, %v999
        %v1631 = vmul.f32 %v1615, %v1001
        %v1632 = vmul.f32 %v1615, %v1003
        %v1633 = vmul.f32 %v1615, %v1005
        %v1634 = vmul.f32 %v1615, %v1007
        %v1635 = vmul.f32 %v1615, %v1009
        %v1636 = vmul.f32 %v1615, %v1011
        %v1637 = vmul.f32 %v1615, %v1013
        %v1638 = vmul.f32 %v1615, %v1015
        %v1639 = vmul.f32 %v1615, %v1017
        %v1640 = vmul.f32 %v1615, %v1019
        %v1641 = vmul.f32 %v1615, %v1021
        %v1642 = vmul.f32 %v1615, %v1023
        %v1643 = vmul.f32 %v1615, %v1025
        %v1644 = vmul.f32 %v1615, %v1027
        %v1645 = vmul.f32 %v1615, %v1029
        %v1646 = vadd.f32 %v1581, %v1616
        %v1647 = vadd.f32 %v1582, %v1617
        %v1648 = vadd.f32 %v1583, %v1618
        %v1649 = vadd.f32 %v1584, %v1619
        %v1650 = vadd.f32 %v1585, %v1620
        %v1651 = vadd.f32 %v1586, %v1621
        %v1652 = vadd.f32 %v1587, %v1622
        %v1653 = vadd.f32 %v1588, %v1623
        %v1654 = vadd.f32 %v1589, %v1624
        %v1655 = vadd.f32 %v1590, %v1625
        %v1656 = vadd.f32 %v1591, %v1626
        %v1657 = vadd.f32 %v1592, %v1627
        %v1658 = vadd.f32 %v1593, %v1628
        %v1659 = vadd.f32 %v1594, %v1629
        %v1660 = vadd.f32 %v1595, %v1630
        %v1661 = vadd.f32 %v1596, %v1631
        %v1662 = vadd.f32 %v1597, %v1632
        %v1663 = vadd.f32 %v1598, %v1633
        %v1664 = vadd.f32 %v1599, %v1634
        %v1665 = vadd.f32 %v1600, %v1635
        %v1666 = vadd.f32 %v1601, %v1636
        %v1667 = vadd.f32 %v1602, %v1637
        %v1668 = vadd.f32 %v1603, %v1638
        %v1669 = vadd.f32 %v1604, %v1639
        %v1670 = vadd.f32 %v1605, %v1640
        %v1671 = vadd.f32 %v1606, %v1641
        %v1672 = vadd.f32 %v1607, %v1642
        %v1673 = vadd.f32 %v1608, %v1643
        %v1674 = vadd.f32 %v1609, %v1644
        %v1675 = vadd.f32 %v1610, %v1645
        %v1676 = vadd.f32 %v1190, 0.0
        %v1677 = vadd.f32 %v1191, %v1646
        %v1678 = vadd.f32 %v1192, %v1647
        %v1679 = vadd.f32 %v1193, %v1648
        %v1680 = vadd.f32 %v1194, %v1649
        %v1681 = vadd.f32 %v1195, %v1650
        %v1682 = vadd.f32 %v1196, %v1651
        %v1683 = vadd.f32 %v1197, %v1652
        %v1684 = vadd.f32 %v1198, %v1653
        %v1685 = vadd.f32 %v1199, %v1654
        %v1686 = vadd.f32 %v1200, %v1655
        %v1687 = vadd.f32 %v1201, %v1656
        %v1688 = vadd.f32 %v1202, %v1657
        %v1689 = vadd.f32 %v1203, %v1658
        %v1690 = vadd.f32 %v1204, %v1659
        %v1691 = vadd.f32 %v1205, %v1660
        %v1692 = vadd.f32 %v1206, %v1661
        %v1693 = vadd.f32 %v1207, %v1662
        %v1694 = vadd.f32 %v1208, %v1663
        %v1695 = vadd.f32 %v1209, %v1664
        %v1696 = vadd.f32 %v1210, %v1665
        %v1697 = vadd.f32 %v1211, %v1666
        %v1698 = vadd.f32 %v1212, %v1667
        %v1699 = vadd.f32 %v1213, %v1668
        %v1700 = vadd.f32 %v1214, %v1669
        %v1701 = vadd.f32 %v1215, %v1670
        %v1702 = vadd.f32 %v1216, %v1671
        %v1703 = vadd.f32 %v1217, %v1672
        %v1704 = vadd.f32 %v1218, %v1673
        %v1705 = vadd.f32 %v1219, %v1674
        %v1706 = vadd.f32 %v1220, %v1675
        %v1707 = vld [vmem:[%s192 + $0x2] sm:$0x1]
        %v1708 = vlaneseq
        %v1709 = vshrl.u32 %v1708, 7
        %v1710 = vsub.s32 0, %v1709
        %v1711 = vrot.slane %v1707, %v1710
        %v1712 = vmul.f32 %v1711, %v261
        %v1713 = vmul.f32 %v1711, %v263
        %v1714 = vmul.f32 %v1711, %v265
        %v1715 = vmul.f32 %v1711, %v267
        %v1716 = vmul.f32 %v1711, %v269
        %v1717 = vmul.f32 %v1711, %v271
        %v1718 = vmul.f32 %v1711, %v273
        %v1719 = vmul.f32 %v1711, %v275
        %v1720 = vmul.f32 %v1711, %v277
        %v1721 = vmul.f32 %v1711, %v279
        %v1722 = vmul.f32 %v1711, %v281
        %v1723 = vmul.f32 %v1711, %v283
        %v1724 = vmul.f32 %v1711, %v285
        %v1725 = vmul.f32 %v1711, %v287
        %v1726 = vmul.f32 %v1711, %v289
        %v1727 = vmul.f32 %v1711, %v291
        %v1728 = vmul.f32 %v1711, %v293
        %v1729 = vmul.f32 %v1711, %v295
        %v1730 = vmul.f32 %v1711, %v297
        %v1731 = vmul.f32 %v1711, %v299
        %v1732 = vmul.f32 %v1711, %v301
        %v1733 = vmul.f32 %v1711, %v303
        %v1734 = vmul.f32 %v1711, %v305
        %v1735 = vmul.f32 %v1711, %v307
        %v1736 = vmul.f32 %v1711, %v309
        %v1737 = vmul.f32 %v1711, %v311
        %v1738 = vmul.f32 %v1711, %v313
        %v1739 = vmul.f32 %v1711, %v315
        %v1740 = vmul.f32 %v1711, %v317
        %v1741 = vmul.f32 %v1711, %v319
        %v1742 = vadd.f32 %v1712, 0.0
        %v1743 = vadd.f32 %v1713, 0.0
        %v1744 = vadd.f32 %v1714, 0.0
        %v1745 = vadd.f32 %v1715, 0.0
        %v1746 = vadd.f32 %v1716, 0.0
        %v1747 = vadd.f32 %v1717, 0.0
        %v1748 = vadd.f32 %v1718, 0.0
        %v1749 = vadd.f32 %v1719, 0.0
        %v1750 = vadd.f32 %v1720, 0.0
        %v1751 = vadd.f32 %v1721, 0.0
        %v1752 = vadd.f32 %v1722, 0.0
        %v1753 = vadd.f32 %v1723, 0.0
        %v1754 = vadd.f32 %v1724, 0.0
        %v1755 = vadd.f32 %v1725, 0.0
        %v1756 = vadd.f32 %v1726, 0.0
        %v1757 = vadd.f32 %v1727, 0.0
        %v1758 = vadd.f32 %v1728, 0.0
        %v1759 = vadd.f32 %v1729, 0.0
        %v1760 = vadd.f32 %v1730, 0.0
        %v1761 = vadd.f32 %v1731, 0.0
        %v1762 = vadd.f32 %v1732, 0.0
        %v1763 = vadd.f32 %v1733, 0.0
        %v1764 = vadd.f32 %v1734, 0.0
        %v1765 = vadd.f32 %v1735, 0.0
        %v1766 = vadd.f32 %v1736, 0.0
        %v1767 = vadd.f32 %v1737, 0.0
        %v1768 = vadd.f32 %v1738, 0.0
        %v1769 = vadd.f32 %v1739, 0.0
        %v1770 = vadd.f32 %v1740, 0.0
        %v1771 = vadd.f32 %v1741, 0.0
        %v1772 = vld [vmem:[%s192 + $0xb] sm:$0x1]
        %v1773 = vlaneseq
        %v1774 = vshrl.u32 %v1773, 7
        %v1775 = vsub.s32 0, %v1774
        %v1776 = vrot.slane %v1772, %v1775
        %v1777 = vmul.f32 %v1776, %v390
        %v1778 = vmul.f32 %v1776, %v392
        %v1779 = vmul.f32 %v1776, %v394
        %v1780 = vmul.f32 %v1776, %v396
        %v1781 = vmul.f32 %v1776, %v398
        %v1782 = vmul.f32 %v1776, %v400
        %v1783 = vmul.f32 %v1776, %v402
        %v1784 = vmul.f32 %v1776, %v404
        %v1785 = vmul.f32 %v1776, %v406
        %v1786 = vmul.f32 %v1776, %v408
        %v1787 = vmul.f32 %v1776, %v410
        %v1788 = vmul.f32 %v1776, %v412
        %v1789 = vmul.f32 %v1776, %v414
        %v1790 = vmul.f32 %v1776, %v416
        %v1791 = vmul.f32 %v1776, %v418
        %v1792 = vmul.f32 %v1776, %v420
        %v1793 = vmul.f32 %v1776, %v422
        %v1794 = vmul.f32 %v1776, %v424
        %v1795 = vmul.f32 %v1776, %v426
        %v1796 = vmul.f32 %v1776, %v428
        %v1797 = vmul.f32 %v1776, %v430
        %v1798 = vmul.f32 %v1776, %v432
        %v1799 = vmul.f32 %v1776, %v434
        %v1800 = vmul.f32 %v1776, %v436
        %v1801 = vmul.f32 %v1776, %v438
        %v1802 = vmul.f32 %v1776, %v440
        %v1803 = vmul.f32 %v1776, %v442
        %v1804 = vmul.f32 %v1776, %v444
        %v1805 = vmul.f32 %v1776, %v446
        %v1806 = vmul.f32 %v1776, %v448
        %v1807 = vadd.f32 %v1742, %v1777
        %v1808 = vadd.f32 %v1743, %v1778
        %v1809 = vadd.f32 %v1744, %v1779
        %v1810 = vadd.f32 %v1745, %v1780
        %v1811 = vadd.f32 %v1746, %v1781
        %v1812 = vadd.f32 %v1747, %v1782
        %v1813 = vadd.f32 %v1748, %v1783
        %v1814 = vadd.f32 %v1749, %v1784
        %v1815 = vadd.f32 %v1750, %v1785
        %v1816 = vadd.f32 %v1751, %v1786
        %v1817 = vadd.f32 %v1752, %v1787
        %v1818 = vadd.f32 %v1753, %v1788
        %v1819 = vadd.f32 %v1754, %v1789
        %v1820 = vadd.f32 %v1755, %v1790
        %v1821 = vadd.f32 %v1756, %v1791
        %v1822 = vadd.f32 %v1757, %v1792
        %v1823 = vadd.f32 %v1758, %v1793
        %v1824 = vadd.f32 %v1759, %v1794
        %v1825 = vadd.f32 %v1760, %v1795
        %v1826 = vadd.f32 %v1761, %v1796
        %v1827 = vadd.f32 %v1762, %v1797
        %v1828 = vadd.f32 %v1763, %v1798
        %v1829 = vadd.f32 %v1764, %v1799
        %v1830 = vadd.f32 %v1765, %v1800
        %v1831 = vadd.f32 %v1766, %v1801
        %v1832 = vadd.f32 %v1767, %v1802
        %v1833 = vadd.f32 %v1768, %v1803
        %v1834 = vadd.f32 %v1769, %v1804
        %v1835 = vadd.f32 %v1770, %v1805
        %v1836 = vadd.f32 %v1771, %v1806
        %v1837 = vld [vmem:[%s192 + $0x14] sm:$0x1]
        %v1838 = vlaneseq
        %v1839 = vshrl.u32 %v1838, 7
        %v1840 = vsub.s32 0, %v1839
        %v1841 = vrot.slane %v1837, %v1840
        %v1842 = vmul.f32 %v1841, %v519
        %v1843 = vmul.f32 %v1841, %v521
        %v1844 = vmul.f32 %v1841, %v523
        %v1845 = vmul.f32 %v1841, %v525
        %v1846 = vmul.f32 %v1841, %v527
        %v1847 = vmul.f32 %v1841, %v529
        %v1848 = vmul.f32 %v1841, %v531
        %v1849 = vmul.f32 %v1841, %v533
        %v1850 = vmul.f32 %v1841, %v535
        %v1851 = vmul.f32 %v1841, %v537
        %v1852 = vmul.f32 %v1841, %v539
        %v1853 = vmul.f32 %v1841, %v541
        %v1854 = vmul.f32 %v1841, %v543
        %v1855 = vmul.f32 %v1841, %v545
        %v1856 = vmul.f32 %v1841, %v547
        %v1857 = vmul.f32 %v1841, %v549
        %v1858 = vmul.f32 %v1841, %v551
        %v1859 = vmul.f32 %v1841, %v553
        %v1860 = vmul.f32 %v1841, %v555
        %v1861 = vmul.f32 %v1841, %v557
        %v1862 = vmul.f32 %v1841, %v559
        %v1863 = vmul.f32 %v1841, %v561
        %v1864 = vmul.f32 %v1841, %v563
        %v1865 = vmul.f32 %v1841, %v565
        %v1866 = vmul.f32 %v1841, %v567
        %v1867 = vmul.f32 %v1841, %v569
        %v1868 = vmul.f32 %v1841, %v571
        %v1869 = vmul.f32 %v1841, %v573
        %v1870 = vmul.f32 %v1841, %v575
        %v1871 = vmul.f32 %v1841, %v577
        %v1872 = vadd.f32 %v1807, %v1842
        %v1873 = vadd.f32 %v1808, %v1843
        %v1874 = vadd.f32 %v1809, %v1844
        %v1875 = vadd.f32 %v1810, %v1845
        %v1876 = vadd.f32 %v1811, %v1846
        %v1877 = vadd.f32 %v1812, %v1847
        %v1878 = vadd.f32 %v1813, %v1848
        %v1879 = vadd.f32 %v1814, %v1849
        %v1880 = vadd.f32 %v1815, %v1850
        %v1881 = vadd.f32 %v1816, %v1851
        %v1882 = vadd.f32 %v1817, %v1852
        %v1883 = vadd.f32 %v1818, %v1853
        %v1884 = vadd.f32 %v1819, %v1854
        %v1885 = vadd.f32 %v1820, %v1855
        %v1886 = vadd.f32 %v1821, %v1856
        %v1887 = vadd.f32 %v1822, %v1857
        %v1888 = vadd.f32 %v1823, %v1858
        %v1889 = vadd.f32 %v1824, %v1859
        %v1890 = vadd.f32 %v1825, %v1860
        %v1891 = vadd.f32 %v1826, %v1861
        %v1892 = vadd.f32 %v1827, %v1862
        %v1893 = vadd.f32 %v1828, %v1863
        %v1894 = vadd.f32 %v1829, %v1864
        %v1895 = vadd.f32 %v1830, %v1865
        %v1896 = vadd.f32 %v1831, %v1866
        %v1897 = vadd.f32 %v1832, %v1867
        %v1898 = vadd.f32 %v1833, %v1868
        %v1899 = vadd.f32 %v1834, %v1869
        %v1900 = vadd.f32 %v1835, %v1870
        %v1901 = vadd.f32 %v1836, %v1871
        %v1902 = vld [vmem:[%s192 + $0x1d] sm:$0x1]
        %v1903 = vlaneseq
        %v1904 = vshrl.u32 %v1903, 7
        %v1905 = vsub.s32 0, %v1904
        %v1906 = vrot.slane %v1902, %v1905
        %v1907 = vmul.f32 %v1906, %v218
        %v1908 = vmul.f32 %v1906, %v219
        %v1909 = vmul.f32 %v1906, %v220
        %v1910 = vmul.f32 %v1906, %v221
        %v1911 = vmul.f32 %v1906, %v222
        %v1912 = vmul.f32 %v1906, %v223
        %v1913 = vmul.f32 %v1906, %v224
        %v1914 = vmul.f32 %v1906, %v225
        %v1915 = vmul.f32 %v1906, %v226
        %v1916 = vmul.f32 %v1906, %v227
        %v1917 = vmul.f32 %v1906, %v228
        %v1918 = vmul.f32 %v1906, %v229
        %v1919 = vmul.f32 %v1906, %v230
        %v1920 = vmul.f32 %v1906, %v231
        %v1921 = vmul.f32 %v1906, %v232
        %v1922 = vmul.f32 %v1906, %v233
        %v1923 = vmul.f32 %v1906, %v234
        %v1924 = vmul.f32 %v1906, %v235
        %v1925 = vmul.f32 %v1906, %v236
        %v1926 = vmul.f32 %v1906, %v237
        %v1927 = vmul.f32 %v1906, %v238
        %v1928 = vmul.f32 %v1906, %v239
        %v1929 = vmul.f32 %v1906, %v240
        %v1930 = vmul.f32 %v1906, %v241
        %v1931 = vmul.f32 %v1906, %v242
        %v1932 = vmul.f32 %v1906, %v243
        %v1933 = vmul.f32 %v1906, %v244
        %v1934 = vmul.f32 %v1906, %v245
        %v1935 = vmul.f32 %v1906, %v246
        %v1936 = vmul.f32 %v1906, %v247
        %v1937 = vadd.f32 %v1872, %v1907
        %v1938 = vadd.f32 %v1873, %v1908
        %v1939 = vadd.f32 %v1874, %v1909
        %v1940 = vadd.f32 %v1875, %v1910
        %v1941 = vadd.f32 %v1876, %v1911
        %v1942 = vadd.f32 %v1877, %v1912
        %v1943 = vadd.f32 %v1878, %v1913
        %v1944 = vadd.f32 %v1879, %v1914
        %v1945 = vadd.f32 %v1880, %v1915
        %v1946 = vadd.f32 %v1881, %v1916
        %v1947 = vadd.f32 %v1882, %v1917
        %v1948 = vadd.f32 %v1883, %v1918
        %v1949 = vadd.f32 %v1884, %v1919
        %v1950 = vadd.f32 %v1885, %v1920
        %v1951 = vadd.f32 %v1886, %v1921
        %v1952 = vadd.f32 %v1887, %v1922
        %v1953 = vadd.f32 %v1888, %v1923
        %v1954 = vadd.f32 %v1889, %v1924
        %v1955 = vadd.f32 %v1890, %v1925
        %v1956 = vadd.f32 %v1891, %v1926
        %v1957 = vadd.f32 %v1892, %v1927
        %v1958 = vadd.f32 %v1893, %v1928
        %v1959 = vadd.f32 %v1894, %v1929
        %v1960 = vadd.f32 %v1895, %v1930
        %v1961 = vadd.f32 %v1896, %v1931
        %v1962 = vadd.f32 %v1897, %v1932
        %v1963 = vadd.f32 %v1898, %v1933
        %v1964 = vadd.f32 %v1899, %v1934
        %v1965 = vadd.f32 %v1900, %v1935
        %v1966 = vadd.f32 %v1901, %v1936
        %v1967 = vld [vmem:[%s192 + $0x26] sm:$0x1]
        %v1968 = vlaneseq
        %v1969 = vshrl.u32 %v1968, 7
        %v1970 = vsub.s32 0, %v1969
        %v1971 = vrot.slane %v1967, %v1970
        %v1972 = vmul.f32 %v1971, %v713
        %v1973 = vmul.f32 %v1971, %v715
        %v1974 = vmul.f32 %v1971, %v717
        %v1975 = vmul.f32 %v1971, %v719
        %v1976 = vmul.f32 %v1971, %v721
        %v1977 = vmul.f32 %v1971, %v723
        %v1978 = vmul.f32 %v1971, %v725
        %v1979 = vmul.f32 %v1971, %v727
        %v1980 = vmul.f32 %v1971, %v729
        %v1981 = vmul.f32 %v1971, %v731
        %v1982 = vmul.f32 %v1971, %v733
        %v1983 = vmul.f32 %v1971, %v735
        %v1984 = vmul.f32 %v1971, %v737
        %v1985 = vmul.f32 %v1971, %v739
        %v1986 = vmul.f32 %v1971, %v741
        %v1987 = vmul.f32 %v1971, %v743
        %v1988 = vmul.f32 %v1971, %v745
        %v1989 = vmul.f32 %v1971, %v747
        %v1990 = vmul.f32 %v1971, %v749
        %v1991 = vmul.f32 %v1971, %v751
        %v1992 = vmul.f32 %v1971, %v753
        %v1993 = vmul.f32 %v1971, %v755
        %v1994 = vmul.f32 %v1971, %v757
        %v1995 = vmul.f32 %v1971, %v759
        %v1996 = vmul.f32 %v1971, %v761
        %v1997 = vmul.f32 %v1971, %v763
        %v1998 = vmul.f32 %v1971, %v765
        %v1999 = vmul.f32 %v1971, %v767
        %v2000 = vmul.f32 %v1971, %v769
        %v2001 = vmul.f32 %v1971, %v771
        %v2002 = vadd.f32 %v1937, %v1972
        %v2003 = vadd.f32 %v1938, %v1973
        %v2004 = vadd.f32 %v1939, %v1974
        %v2005 = vadd.f32 %v1940, %v1975
        %v2006 = vadd.f32 %v1941, %v1976
        %v2007 = vadd.f32 %v1942, %v1977
        %v2008 = vadd.f32 %v1943, %v1978
        %v2009 = vadd.f32 %v1944, %v1979
        %v2010 = vadd.f32 %v1945, %v1980
        %v2011 = vadd.f32 %v1946, %v1981
        %v2012 = vadd.f32 %v1947, %v1982
        %v2013 = vadd.f32 %v1948, %v1983
        %v2014 = vadd.f32 %v1949, %v1984
        %v2015 = vadd.f32 %v1950, %v1985
        %v2016 = vadd.f32 %v1951, %v1986
        %v2017 = vadd.f32 %v1952, %v1987
        %v2018 = vadd.f32 %v1953, %v1988
        %v2019 = vadd.f32 %v1954, %v1989
        %v2020 = vadd.f32 %v1955, %v1990
        %v2021 = vadd.f32 %v1956, %v1991
        %v2022 = vadd.f32 %v1957, %v1992
        %v2023 = vadd.f32 %v1958, %v1993
        %v2024 = vadd.f32 %v1959, %v1994
        %v2025 = vadd.f32 %v1960, %v1995
        %v2026 = vadd.f32 %v1961, %v1996
        %v2027 = vadd.f32 %v1962, %v1997
        %v2028 = vadd.f32 %v1963, %v1998
        %v2029 = vadd.f32 %v1964, %v1999
        %v2030 = vadd.f32 %v1965, %v2000
        %v2031 = vadd.f32 %v1966, %v2001
        %v2032 = vld [vmem:[%s192 + $0x2f] sm:$0x1]
        %v2033 = vlaneseq
        %v2034 = vshrl.u32 %v2033, 7
        %v2035 = vsub.s32 0, %v2034
        %v2036 = vrot.slane %v2032, %v2035
        %v2037 = vmul.f32 %v2036, %v842
        %v2038 = vmul.f32 %v2036, %v844
        %v2039 = vmul.f32 %v2036, %v846
        %v2040 = vmul.f32 %v2036, %v848
        %v2041 = vmul.f32 %v2036, %v850
        %v2042 = vmul.f32 %v2036, %v852
        %v2043 = vmul.f32 %v2036, %v854
        %v2044 = vmul.f32 %v2036, %v856
        %v2045 = vmul.f32 %v2036, %v858
        %v2046 = vmul.f32 %v2036, %v860
        %v2047 = vmul.f32 %v2036, %v862
        %v2048 = vmul.f32 %v2036, %v864
        %v2049 = vmul.f32 %v2036, %v866
        %v2050 = vmul.f32 %v2036, %v868
        %v2051 = vmul.f32 %v2036, %v870
        %v2052 = vmul.f32 %v2036, %v872
        %v2053 = vmul.f32 %v2036, %v874
        %v2054 = vmul.f32 %v2036, %v876
        %v2055 = vmul.f32 %v2036, %v878
        %v2056 = vmul.f32 %v2036, %v880
        %v2057 = vmul.f32 %v2036, %v882
        %v2058 = vmul.f32 %v2036, %v884
        %v2059 = vmul.f32 %v2036, %v886
        %v2060 = vmul.f32 %v2036, %v888
        %v2061 = vmul.f32 %v2036, %v890
        %v2062 = vmul.f32 %v2036, %v892
        %v2063 = vmul.f32 %v2036, %v894
        %v2064 = vmul.f32 %v2036, %v896
        %v2065 = vmul.f32 %v2036, %v898
        %v2066 = vmul.f32 %v2036, %v900
        %v2067 = vadd.f32 %v2002, %v2037
        %v2068 = vadd.f32 %v2003, %v2038
        %v2069 = vadd.f32 %v2004, %v2039
        %v2070 = vadd.f32 %v2005, %v2040
        %v2071 = vadd.f32 %v2006, %v2041
        %v2072 = vadd.f32 %v2007, %v2042
        %v2073 = vadd.f32 %v2008, %v2043
        %v2074 = vadd.f32 %v2009, %v2044
        %v2075 = vadd.f32 %v2010, %v2045
        %v2076 = vadd.f32 %v2011, %v2046
        %v2077 = vadd.f32 %v2012, %v2047
        %v2078 = vadd.f32 %v2013, %v2048
        %v2079 = vadd.f32 %v2014, %v2049
        %v2080 = vadd.f32 %v2015, %v2050
        %v2081 = vadd.f32 %v2016, %v2051
        %v2082 = vadd.f32 %v2017, %v2052
        %v2083 = vadd.f32 %v2018, %v2053
        %v2084 = vadd.f32 %v2019, %v2054
        %v2085 = vadd.f32 %v2020, %v2055
        %v2086 = vadd.f32 %v2021, %v2056
        %v2087 = vadd.f32 %v2022, %v2057
        %v2088 = vadd.f32 %v2023, %v2058
        %v2089 = vadd.f32 %v2024, %v2059
        %v2090 = vadd.f32 %v2025, %v2060
        %v2091 = vadd.f32 %v2026, %v2061
        %v2092 = vadd.f32 %v2027, %v2062
        %v2093 = vadd.f32 %v2028, %v2063
        %v2094 = vadd.f32 %v2029, %v2064
        %v2095 = vadd.f32 %v2030, %v2065
        %v2096 = vadd.f32 %v2031, %v2066
        %v2097 = vld [vmem:[%s192 + $0x38] sm:$0x1]
        %v2098 = vlaneseq
        %v2099 = vshrl.u32 %v2098, 7
        %v2100 = vsub.s32 0, %v2099
        %v2101 = vrot.slane %v2097, %v2100
        %v2102 = vmul.f32 %v2101, %v971
        %v2103 = vmul.f32 %v2101, %v973
        %v2104 = vmul.f32 %v2101, %v975
        %v2105 = vmul.f32 %v2101, %v977
        %v2106 = vmul.f32 %v2101, %v979
        %v2107 = vmul.f32 %v2101, %v981
        %v2108 = vmul.f32 %v2101, %v983
        %v2109 = vmul.f32 %v2101, %v985
        %v2110 = vmul.f32 %v2101, %v987
        %v2111 = vmul.f32 %v2101, %v989
        %v2112 = vmul.f32 %v2101, %v991
        %v2113 = vmul.f32 %v2101, %v993
        %v2114 = vmul.f32 %v2101, %v995
        %v2115 = vmul.f32 %v2101, %v997
        %v2116 = vmul.f32 %v2101, %v999
        %v2117 = vmul.f32 %v2101, %v1001
        %v2118 = vmul.f32 %v2101, %v1003
        %v2119 = vmul.f32 %v2101, %v1005
        %v2120 = vmul.f32 %v2101, %v1007
        %v2121 = vmul.f32 %v2101, %v1009
        %v2122 = vmul.f32 %v2101, %v1011
        %v2123 = vmul.f32 %v2101, %v1013
        %v2124 = vmul.f32 %v2101, %v1015
        %v2125 = vmul.f32 %v2101, %v1017
        %v2126 = vmul.f32 %v2101, %v1019
        %v2127 = vmul.f32 %v2101, %v1021
        %v2128 = vmul.f32 %v2101, %v1023
        %v2129 = vmul.f32 %v2101, %v1025
        %v2130 = vmul.f32 %v2101, %v1027
        %v2131 = vmul.f32 %v2101, %v1029
        %v2132 = vadd.f32 %v2067, %v2102
        %v2133 = vadd.f32 %v2068, %v2103
        %v2134 = vadd.f32 %v2069, %v2104
        %v2135 = vadd.f32 %v2070, %v2105
        %v2136 = vadd.f32 %v2071, %v2106
        %v2137 = vadd.f32 %v2072, %v2107
        %v2138 = vadd.f32 %v2073, %v2108
        %v2139 = vadd.f32 %v2074, %v2109
        %v2140 = vadd.f32 %v2075, %v2110
        %v2141 = vadd.f32 %v2076, %v2111
        %v2142 = vadd.f32 %v2077, %v2112
        %v2143 = vadd.f32 %v2078, %v2113
        %v2144 = vadd.f32 %v2079, %v2114
        %v2145 = vadd.f32 %v2080, %v2115
        %v2146 = vadd.f32 %v2081, %v2116
        %v2147 = vadd.f32 %v2082, %v2117
        %v2148 = vadd.f32 %v2083, %v2118
        %v2149 = vadd.f32 %v2084, %v2119
        %v2150 = vadd.f32 %v2085, %v2120
        %v2151 = vadd.f32 %v2086, %v2121
        %v2152 = vadd.f32 %v2087, %v2122
        %v2153 = vadd.f32 %v2088, %v2123
        %v2154 = vadd.f32 %v2089, %v2124
        %v2155 = vadd.f32 %v2090, %v2125
        %v2156 = vadd.f32 %v2091, %v2126
        %v2157 = vadd.f32 %v2092, %v2127
        %v2158 = vadd.f32 %v2093, %v2128
        %v2159 = vadd.f32 %v2094, %v2129
        %v2160 = vadd.f32 %v2095, %v2130
        %v2161 = vadd.f32 %v2096, %v2131
        %v2162 = vrot.slane %v2132, 1
        %v2163 = vrot.slane %v2134, 1
        %v2164 = vrot.slane %v2136, 1
        %v2165 = vrot.slane %v2138, 1
        %v2166 = vrot.slane %v2140, 1
        %v2167 = vrot.slane %v2142, 1
        %v2168 = vrot.slane %v2144, 1
        %v2169 = vrot.slane %v2146, 1
        %v2170 = vrot.slane %v2148, 1
        %v2171 = vrot.slane %v2150, 1
        %v2172 = vrot.slane %v2152, 1
        %v2173 = vrot.slane %v2154, 1
        %v2174 = vrot.slane %v2156, 1
        %v2175 = vrot.slane %v2158, 1
        %v2176 = vrot.slane %v2160, 1
        %v2177 = vrot.slane %v2133, 1
        %v2178 = vrot.slane %v2135, 1
        %v2179 = vrot.slane %v2137, 1
        %v2180 = vrot.slane %v2139, 1
        %v2181 = vrot.slane %v2141, 1
        %v2182 = vrot.slane %v2143, 1
        %v2183 = vrot.slane %v2145, 1
        %v2184 = vrot.slane %v2147, 1
        %v2185 = vrot.slane %v2149, 1
        %v2186 = vrot.slane %v2151, 1
        %v2187 = vrot.slane %v2153, 1
        %v2188 = vrot.slane %v2155, 1
        %v2189 = vrot.slane %v2157, 1
        %v2190 = vrot.slane %v2159, 1
        %v2191 = vrot.slane %v2161, 1
        %vm2192 = vcmp.lt.s32.totalorder %v251, 7
        %v2193 = vsel %vm2192, %v2162, %v2177
        %v2194 = vsel %vm2192, %v2163, %v2178
        %v2195 = vsel %vm2192, %v2164, %v2179
        %v2196 = vsel %vm2192, %v2165, %v2180
        %v2197 = vsel %vm2192, %v2166, %v2181
        %v2198 = vsel %vm2192, %v2167, %v2182
        %v2199 = vsel %vm2192, %v2168, %v2183
        %v2200 = vsel %vm2192, %v2169, %v2184
        %v2201 = vsel %vm2192, %v2170, %v2185
        %v2202 = vsel %vm2192, %v2171, %v2186
        %v2203 = vsel %vm2192, %v2172, %v2187
        %v2204 = vsel %vm2192, %v2173, %v2188
        %v2205 = vsel %vm2192, %v2174, %v2189
        %v2206 = vsel %vm2192, %v2175, %v2190
        %v2207 = vsel %vm2192, %v2176, %v2191
        %v2208 = vsel %vm2192, %v2177, %v2162
        %v2209 = vsel %vm2192, %v2178, %v2163
        %v2210 = vsel %vm2192, %v2179, %v2164
        %v2211 = vsel %vm2192, %v2180, %v2165
        %v2212 = vsel %vm2192, %v2181, %v2166
        %v2213 = vsel %vm2192, %v2182, %v2167
        %v2214 = vsel %vm2192, %v2183, %v2168
        %v2215 = vsel %vm2192, %v2184, %v2169
        %v2216 = vsel %vm2192, %v2185, %v2170
        %v2217 = vsel %vm2192, %v2186, %v2171
        %v2218 = vsel %vm2192, %v2187, %v2172
        %v2219 = vsel %vm2192, %v2188, %v2173
        %v2220 = vsel %vm2192, %v2189, %v2174
        %v2221 = vsel %vm2192, %v2190, %v2175
        %v2222 = vsel %vm2192, %v2191, %v2176
        %vm2223 = vcmp.ge.s32.totalorder %v251, 15
        %vm2224 = vcmp.ge.s32.totalorder %v252, 15
        %v2225 = vsel %vm2223, 0.0, %v2193
        %v2226 = vsel %vm2224, 0.0, %v2208
        %v2227 = vsel %vm2223, 0.0, %v2194
        %v2228 = vsel %vm2224, 0.0, %v2209
        %v2229 = vsel %vm2223, 0.0, %v2195
        %v2230 = vsel %vm2224, 0.0, %v2210
        %v2231 = vsel %vm2223, 0.0, %v2196
        %v2232 = vsel %vm2224, 0.0, %v2211
        %v2233 = vsel %vm2223, 0.0, %v2197
        %v2234 = vsel %vm2224, 0.0, %v2212
        %v2235 = vsel %vm2223, 0.0, %v2198
        %v2236 = vsel %vm2224, 0.0, %v2213
        %v2237 = vsel %vm2223, 0.0, %v2199
        %v2238 = vsel %vm2224, 0.0, %v2214
        %v2239 = vsel %vm2223, 0.0, %v2200
        %v2240 = vsel %vm2224, 0.0, %v2215
        %v2241 = vsel %vm2223, 0.0, %v2201
        %v2242 = vsel %vm2224, 0.0, %v2216
        %v2243 = vsel %vm2223, 0.0, %v2202
        %v2244 = vsel %vm2224, 0.0, %v2217
        %v2245 = vsel %vm2223, 0.0, %v2203
        %v2246 = vsel %vm2224, 0.0, %v2218
        %v2247 = vsel %vm2223, 0.0, %v2204
        %v2248 = vsel %vm2224, 0.0, %v2219
        %v2249 = vsel %vm2223, 0.0, %v2205
        %v2250 = vsel %vm2224, 0.0, %v2220
        %v2251 = vsel %vm2223, 0.0, %v2206
        %v2252 = vsel %vm2224, 0.0, %v2221
        %v2253 = vsel %vm2223, 0.0, %v2207
        %v2254 = vsel %vm2224, 0.0, %v2222
        %v2255 = vadd.f32 %v1676, 0.0
        %v2256 = vadd.f32 %v1677, %v2225
        %v2257 = vadd.f32 %v1678, %v2226
        %v2258 = vadd.f32 %v1679, %v2227
        %v2259 = vadd.f32 %v1680, %v2228
        %v2260 = vadd.f32 %v1681, %v2229
        %v2261 = vadd.f32 %v1682, %v2230
        %v2262 = vadd.f32 %v1683, %v2231
        %v2263 = vadd.f32 %v1684, %v2232
        %v2264 = vadd.f32 %v1685, %v2233
        %v2265 = vadd.f32 %v1686, %v2234
        %v2266 = vadd.f32 %v1687, %v2235
        %v2267 = vadd.f32 %v1688, %v2236
        %v2268 = vadd.f32 %v1689, %v2237
        %v2269 = vadd.f32 %v1690, %v2238
        %v2270 = vadd.f32 %v1691, %v2239
        %v2271 = vadd.f32 %v1692, %v2240
        %v2272 = vadd.f32 %v1693, %v2241
        %v2273 = vadd.f32 %v1694, %v2242
        %v2274 = vadd.f32 %v1695, %v2243
        %v2275 = vadd.f32 %v1696, %v2244
        %v2276 = vadd.f32 %v1697, %v2245
        %v2277 = vadd.f32 %v1698, %v2246
        %v2278 = vadd.f32 %v1699, %v2247
        %v2279 = vadd.f32 %v1700, %v2248
        %v2280 = vadd.f32 %v1701, %v2249
        %v2281 = vadd.f32 %v1702, %v2250
        %v2282 = vadd.f32 %v1703, %v2251
        %v2283 = vadd.f32 %v1704, %v2252
        %v2284 = vadd.f32 %v1705, %v2253
        %v2285 = vadd.f32 %v1706, %v2254
        %v2286 = vld [vmem:[%s192 + $0x3] sm:$0x1]
        %v2287 = vlaneseq
        %v2288 = vshrl.u32 %v2287, 7
        %v2289 = vsub.s32 0, %v2288
        %v2290 = vrot.slane %v2286, %v2289
        %v2291 = vmul.f32 %v2290, %v261
        %v2292 = vmul.f32 %v2290, %v263
        %v2293 = vmul.f32 %v2290, %v265
        %v2294 = vmul.f32 %v2290, %v267
        %v2295 = vmul.f32 %v2290, %v269
        %v2296 = vmul.f32 %v2290, %v271
        %v2297 = vmul.f32 %v2290, %v273
        %v2298 = vmul.f32 %v2290, %v275
        %v2299 = vmul.f32 %v2290, %v277
        %v2300 = vmul.f32 %v2290, %v279
        %v2301 = vmul.f32 %v2290, %v281
        %v2302 = vmul.f32 %v2290, %v283
        %v2303 = vmul.f32 %v2290, %v285
        %v2304 = vmul.f32 %v2290, %v287
        %v2305 = vmul.f32 %v2290, %v289
        %v2306 = vmul.f32 %v2290, %v291
        %v2307 = vmul.f32 %v2290, %v293
        %v2308 = vmul.f32 %v2290, %v295
        %v2309 = vmul.f32 %v2290, %v297
        %v2310 = vmul.f32 %v2290, %v299
        %v2311 = vmul.f32 %v2290, %v301
        %v2312 = vmul.f32 %v2290, %v303
        %v2313 = vmul.f32 %v2290, %v305
        %v2314 = vmul.f32 %v2290, %v307
        %v2315 = vmul.f32 %v2290, %v309
        %v2316 = vmul.f32 %v2290, %v311
        %v2317 = vmul.f32 %v2290, %v313
        %v2318 = vmul.f32 %v2290, %v315
        %v2319 = vmul.f32 %v2290, %v317
        %v2320 = vmul.f32 %v2290, %v319
        %v2321 = vmul.f32 %v2290, %v321
        %v2322 = vmul.f32 %v2290, %v323
        %v2323 = vadd.f32 %v2291, 0.0
        %v2324 = vadd.f32 %v2292, 0.0
        %v2325 = vadd.f32 %v2293, 0.0
        %v2326 = vadd.f32 %v2294, 0.0
        %v2327 = vadd.f32 %v2295, 0.0
        %v2328 = vadd.f32 %v2296, 0.0
        %v2329 = vadd.f32 %v2297, 0.0
        %v2330 = vadd.f32 %v2298, 0.0
        %v2331 = vadd.f32 %v2299, 0.0
        %v2332 = vadd.f32 %v2300, 0.0
        %v2333 = vadd.f32 %v2301, 0.0
        %v2334 = vadd.f32 %v2302, 0.0
        %v2335 = vadd.f32 %v2303, 0.0
        %v2336 = vadd.f32 %v2304, 0.0
        %v2337 = vadd.f32 %v2305, 0.0
        %v2338 = vadd.f32 %v2306, 0.0
        %v2339 = vadd.f32 %v2307, 0.0
        %v2340 = vadd.f32 %v2308, 0.0
        %v2341 = vadd.f32 %v2309, 0.0
        %v2342 = vadd.f32 %v2310, 0.0
        %v2343 = vadd.f32 %v2311, 0.0
        %v2344 = vadd.f32 %v2312, 0.0
        %v2345 = vadd.f32 %v2313, 0.0
        %v2346 = vadd.f32 %v2314, 0.0
        %v2347 = vadd.f32 %v2315, 0.0
        %v2348 = vadd.f32 %v2316, 0.0
        %v2349 = vadd.f32 %v2317, 0.0
        %v2350 = vadd.f32 %v2318, 0.0
        %v2351 = vadd.f32 %v2319, 0.0
        %v2352 = vadd.f32 %v2320, 0.0
        %v2353 = vadd.f32 %v2321, 0.0
        %v2354 = vadd.f32 %v2322, 0.0
        %v2355 = vld [vmem:[%s192 + $0xc] sm:$0x1]
        %v2356 = vlaneseq
        %v2357 = vshrl.u32 %v2356, 7
        %v2358 = vsub.s32 0, %v2357
        %v2359 = vrot.slane %v2355, %v2358
        %v2360 = vmul.f32 %v2359, %v390
        %v2361 = vmul.f32 %v2359, %v392
        %v2362 = vmul.f32 %v2359, %v394
        %v2363 = vmul.f32 %v2359, %v396
        %v2364 = vmul.f32 %v2359, %v398
        %v2365 = vmul.f32 %v2359, %v400
        %v2366 = vmul.f32 %v2359, %v402
        %v2367 = vmul.f32 %v2359, %v404
        %v2368 = vmul.f32 %v2359, %v406
        %v2369 = vmul.f32 %v2359, %v408
        %v2370 = vmul.f32 %v2359, %v410
        %v2371 = vmul.f32 %v2359, %v412
        %v2372 = vmul.f32 %v2359, %v414
        %v2373 = vmul.f32 %v2359, %v416
        %v2374 = vmul.f32 %v2359, %v418
        %v2375 = vmul.f32 %v2359, %v420
        %v2376 = vmul.f32 %v2359, %v422
        %v2377 = vmul.f32 %v2359, %v424
        %v2378 = vmul.f32 %v2359, %v426
        %v2379 = vmul.f32 %v2359, %v428
        %v2380 = vmul.f32 %v2359, %v430
        %v2381 = vmul.f32 %v2359, %v432
        %v2382 = vmul.f32 %v2359, %v434
        %v2383 = vmul.f32 %v2359, %v436
        %v2384 = vmul.f32 %v2359, %v438
        %v2385 = vmul.f32 %v2359, %v440
        %v2386 = vmul.f32 %v2359, %v442
        %v2387 = vmul.f32 %v2359, %v444
        %v2388 = vmul.f32 %v2359, %v446
        %v2389 = vmul.f32 %v2359, %v448
        %v2390 = vmul.f32 %v2359, %v450
        %v2391 = vmul.f32 %v2359, %v452
        %v2392 = vadd.f32 %v2323, %v2360
        %v2393 = vadd.f32 %v2324, %v2361
        %v2394 = vadd.f32 %v2325, %v2362
        %v2395 = vadd.f32 %v2326, %v2363
        %v2396 = vadd.f32 %v2327, %v2364
        %v2397 = vadd.f32 %v2328, %v2365
        %v2398 = vadd.f32 %v2329, %v2366
        %v2399 = vadd.f32 %v2330, %v2367
        %v2400 = vadd.f32 %v2331, %v2368
        %v2401 = vadd.f32 %v2332, %v2369
        %v2402 = vadd.f32 %v2333, %v2370
        %v2403 = vadd.f32 %v2334, %v2371
        %v2404 = vadd.f32 %v2335, %v2372
        %v2405 = vadd.f32 %v2336, %v2373
        %v2406 = vadd.f32 %v2337, %v2374
        %v2407 = vadd.f32 %v2338, %v2375
        %v2408 = vadd.f32 %v2339, %v2376
        %v2409 = vadd.f32 %v2340, %v2377
        %v2410 = vadd.f32 %v2341, %v2378
        %v2411 = vadd.f32 %v2342, %v2379
        %v2412 = vadd.f32 %v2343, %v2380
        %v2413 = vadd.f32 %v2344, %v2381
        %v2414 = vadd.f32 %v2345, %v2382
        %v2415 = vadd.f32 %v2346, %v2383
        %v2416 = vadd.f32 %v2347, %v2384
        %v2417 = vadd.f32 %v2348, %v2385
        %v2418 = vadd.f32 %v2349, %v2386
        %v2419 = vadd.f32 %v2350, %v2387
        %v2420 = vadd.f32 %v2351, %v2388
        %v2421 = vadd.f32 %v2352, %v2389
        %v2422 = vadd.f32 %v2353, %v2390
        %v2423 = vadd.f32 %v2354, %v2391
        %v2424 = vld [vmem:[%s192 + $0x15] sm:$0x1]
        %v2425 = vlaneseq
        %v2426 = vshrl.u32 %v2425, 7
        %v2427 = vsub.s32 0, %v2426
        %v2428 = vrot.slane %v2424, %v2427
        %v2429 = vmul.f32 %v2428, %v519
        %v2430 = vmul.f32 %v2428, %v521
        %v2431 = vmul.f32 %v2428, %v523
        %v2432 = vmul.f32 %v2428, %v525
        %v2433 = vmul.f32 %v2428, %v527
        %v2434 = vmul.f32 %v2428, %v529
        %v2435 = vmul.f32 %v2428, %v531
        %v2436 = vmul.f32 %v2428, %v533
        %v2437 = vmul.f32 %v2428, %v535
        %v2438 = vmul.f32 %v2428, %v537
        %v2439 = vmul.f32 %v2428, %v539
        %v2440 = vmul.f32 %v2428, %v541
        %v2441 = vmul.f32 %v2428, %v543
        %v2442 = vmul.f32 %v2428, %v545
        %v2443 = vmul.f32 %v2428, %v547
        %v2444 = vmul.f32 %v2428, %v549
        %v2445 = vmul.f32 %v2428, %v551
        %v2446 = vmul.f32 %v2428, %v553
        %v2447 = vmul.f32 %v2428, %v555
        %v2448 = vmul.f32 %v2428, %v557
        %v2449 = vmul.f32 %v2428, %v559
        %v2450 = vmul.f32 %v2428, %v561
        %v2451 = vmul.f32 %v2428, %v563
        %v2452 = vmul.f32 %v2428, %v565
        %v2453 = vmul.f32 %v2428, %v567
        %v2454 = vmul.f32 %v2428, %v569
        %v2455 = vmul.f32 %v2428, %v571
        %v2456 = vmul.f32 %v2428, %v573
        %v2457 = vmul.f32 %v2428, %v575
        %v2458 = vmul.f32 %v2428, %v577
        %v2459 = vmul.f32 %v2428, %v579
        %v2460 = vmul.f32 %v2428, %v581
        %v2461 = vadd.f32 %v2392, %v2429
        %v2462 = vadd.f32 %v2393, %v2430
        %v2463 = vadd.f32 %v2394, %v2431
        %v2464 = vadd.f32 %v2395, %v2432
        %v2465 = vadd.f32 %v2396, %v2433
        %v2466 = vadd.f32 %v2397, %v2434
        %v2467 = vadd.f32 %v2398, %v2435
        %v2468 = vadd.f32 %v2399, %v2436
        %v2469 = vadd.f32 %v2400, %v2437
        %v2470 = vadd.f32 %v2401, %v2438
        %v2471 = vadd.f32 %v2402, %v2439
        %v2472 = vadd.f32 %v2403, %v2440
        %v2473 = vadd.f32 %v2404, %v2441
        %v2474 = vadd.f32 %v2405, %v2442
        %v2475 = vadd.f32 %v2406, %v2443
        %v2476 = vadd.f32 %v2407, %v2444
        %v2477 = vadd.f32 %v2408, %v2445
        %v2478 = vadd.f32 %v2409, %v2446
        %v2479 = vadd.f32 %v2410, %v2447
        %v2480 = vadd.f32 %v2411, %v2448
        %v2481 = vadd.f32 %v2412, %v2449
        %v2482 = vadd.f32 %v2413, %v2450
        %v2483 = vadd.f32 %v2414, %v2451
        %v2484 = vadd.f32 %v2415, %v2452
        %v2485 = vadd.f32 %v2416, %v2453
        %v2486 = vadd.f32 %v2417, %v2454
        %v2487 = vadd.f32 %v2418, %v2455
        %v2488 = vadd.f32 %v2419, %v2456
        %v2489 = vadd.f32 %v2420, %v2457
        %v2490 = vadd.f32 %v2421, %v2458
        %v2491 = vadd.f32 %v2422, %v2459
        %v2492 = vadd.f32 %v2423, %v2460
        %v2493 = vld [vmem:[%s192 + $0x1e] sm:$0x1]
        %v2494 = vlaneseq
        %v2495 = vshrl.u32 %v2494, 7
        %v2496 = vsub.s32 0, %v2495
        %v2497 = vrot.slane %v2493, %v2496
        %v2498 = vmul.f32 %v2497, %v218
        %v2499 = vmul.f32 %v2497, %v219
        %v2500 = vmul.f32 %v2497, %v220
        %v2501 = vmul.f32 %v2497, %v221
        %v2502 = vmul.f32 %v2497, %v222
        %v2503 = vmul.f32 %v2497, %v223
        %v2504 = vmul.f32 %v2497, %v224
        %v2505 = vmul.f32 %v2497, %v225
        %v2506 = vmul.f32 %v2497, %v226
        %v2507 = vmul.f32 %v2497, %v227
        %v2508 = vmul.f32 %v2497, %v228
        %v2509 = vmul.f32 %v2497, %v229
        %v2510 = vmul.f32 %v2497, %v230
        %v2511 = vmul.f32 %v2497, %v231
        %v2512 = vmul.f32 %v2497, %v232
        %v2513 = vmul.f32 %v2497, %v233
        %v2514 = vmul.f32 %v2497, %v234
        %v2515 = vmul.f32 %v2497, %v235
        %v2516 = vmul.f32 %v2497, %v236
        %v2517 = vmul.f32 %v2497, %v237
        %v2518 = vmul.f32 %v2497, %v238
        %v2519 = vmul.f32 %v2497, %v239
        %v2520 = vmul.f32 %v2497, %v240
        %v2521 = vmul.f32 %v2497, %v241
        %v2522 = vmul.f32 %v2497, %v242
        %v2523 = vmul.f32 %v2497, %v243
        %v2524 = vmul.f32 %v2497, %v244
        %v2525 = vmul.f32 %v2497, %v245
        %v2526 = vmul.f32 %v2497, %v246
        %v2527 = vmul.f32 %v2497, %v247
        %v2528 = vmul.f32 %v2497, %v248
        %v2529 = vmul.f32 %v2497, %v249
        %v2530 = vadd.f32 %v2461, %v2498
        %v2531 = vadd.f32 %v2462, %v2499
        %v2532 = vadd.f32 %v2463, %v2500
        %v2533 = vadd.f32 %v2464, %v2501
        %v2534 = vadd.f32 %v2465, %v2502
        %v2535 = vadd.f32 %v2466, %v2503
        %v2536 = vadd.f32 %v2467, %v2504
        %v2537 = vadd.f32 %v2468, %v2505
        %v2538 = vadd.f32 %v2469, %v2506
        %v2539 = vadd.f32 %v2470, %v2507
        %v2540 = vadd.f32 %v2471, %v2508
        %v2541 = vadd.f32 %v2472, %v2509
        %v2542 = vadd.f32 %v2473, %v2510
        %v2543 = vadd.f32 %v2474, %v2511
        %v2544 = vadd.f32 %v2475, %v2512
        %v2545 = vadd.f32 %v2476, %v2513
        %v2546 = vadd.f32 %v2477, %v2514
        %v2547 = vadd.f32 %v2478, %v2515
        %v2548 = vadd.f32 %v2479, %v2516
        %v2549 = vadd.f32 %v2480, %v2517
        %v2550 = vadd.f32 %v2481, %v2518
        %v2551 = vadd.f32 %v2482, %v2519
        %v2552 = vadd.f32 %v2483, %v2520
        %v2553 = vadd.f32 %v2484, %v2521
        %v2554 = vadd.f32 %v2485, %v2522
        %v2555 = vadd.f32 %v2486, %v2523
        %v2556 = vadd.f32 %v2487, %v2524
        %v2557 = vadd.f32 %v2488, %v2525
        %v2558 = vadd.f32 %v2489, %v2526
        %v2559 = vadd.f32 %v2490, %v2527
        %v2560 = vadd.f32 %v2491, %v2528
        %v2561 = vadd.f32 %v2492, %v2529
        %v2562 = vld [vmem:[%s192 + $0x27] sm:$0x1]
        %v2563 = vlaneseq
        %v2564 = vshrl.u32 %v2563, 7
        %v2565 = vsub.s32 0, %v2564
        %v2566 = vrot.slane %v2562, %v2565
        %v2567 = vmul.f32 %v2566, %v713
        %v2568 = vmul.f32 %v2566, %v715
        %v2569 = vmul.f32 %v2566, %v717
        %v2570 = vmul.f32 %v2566, %v719
        %v2571 = vmul.f32 %v2566, %v721
        %v2572 = vmul.f32 %v2566, %v723
        %v2573 = vmul.f32 %v2566, %v725
        %v2574 = vmul.f32 %v2566, %v727
        %v2575 = vmul.f32 %v2566, %v729
        %v2576 = vmul.f32 %v2566, %v731
        %v2577 = vmul.f32 %v2566, %v733
        %v2578 = vmul.f32 %v2566, %v735
        %v2579 = vmul.f32 %v2566, %v737
        %v2580 = vmul.f32 %v2566, %v739
        %v2581 = vmul.f32 %v2566, %v741
        %v2582 = vmul.f32 %v2566, %v743
        %v2583 = vmul.f32 %v2566, %v745
        %v2584 = vmul.f32 %v2566, %v747
        %v2585 = vmul.f32 %v2566, %v749
        %v2586 = vmul.f32 %v2566, %v751
        %v2587 = vmul.f32 %v2566, %v753
        %v2588 = vmul.f32 %v2566, %v755
        %v2589 = vmul.f32 %v2566, %v757
        %v2590 = vmul.f32 %v2566, %v759
        %v2591 = vmul.f32 %v2566, %v761
        %v2592 = vmul.f32 %v2566, %v763
        %v2593 = vmul.f32 %v2566, %v765
        %v2594 = vmul.f32 %v2566, %v767
        %v2595 = vmul.f32 %v2566, %v769
        %v2596 = vmul.f32 %v2566, %v771
        %v2597 = vmul.f32 %v2566, %v773
        %v2598 = vmul.f32 %v2566, %v775
        %v2599 = vadd.f32 %v2530, %v2567
        %v2600 = vadd.f32 %v2531, %v2568
        %v2601 = vadd.f32 %v2532, %v2569
        %v2602 = vadd.f32 %v2533, %v2570
        %v2603 = vadd.f32 %v2534, %v2571
        %v2604 = vadd.f32 %v2535, %v2572
        %v2605 = vadd.f32 %v2536, %v2573
        %v2606 = vadd.f32 %v2537, %v2574
        %v2607 = vadd.f32 %v2538, %v2575
        %v2608 = vadd.f32 %v2539, %v2576
        %v2609 = vadd.f32 %v2540, %v2577
        %v2610 = vadd.f32 %v2541, %v2578
        %v2611 = vadd.f32 %v2542, %v2579
        %v2612 = vadd.f32 %v2543, %v2580
        %v2613 = vadd.f32 %v2544, %v2581
        %v2614 = vadd.f32 %v2545, %v2582
        %v2615 = vadd.f32 %v2546, %v2583
        %v2616 = vadd.f32 %v2547, %v2584
        %v2617 = vadd.f32 %v2548, %v2585
        %v2618 = vadd.f32 %v2549, %v2586
        %v2619 = vadd.f32 %v2550, %v2587
        %v2620 = vadd.f32 %v2551, %v2588
        %v2621 = vadd.f32 %v2552, %v2589
        %v2622 = vadd.f32 %v2553, %v2590
        %v2623 = vadd.f32 %v2554, %v2591
        %v2624 = vadd.f32 %v2555, %v2592
        %v2625 = vadd.f32 %v2556, %v2593
        %v2626 = vadd.f32 %v2557, %v2594
        %v2627 = vadd.f32 %v2558, %v2595
        %v2628 = vadd.f32 %v2559, %v2596
        %v2629 = vadd.f32 %v2560, %v2597
        %v2630 = vadd.f32 %v2561, %v2598
        %v2631 = vld [vmem:[%s192 + $0x30] sm:$0x1]
        %v2632 = vlaneseq
        %v2633 = vshrl.u32 %v2632, 7
        %v2634 = vsub.s32 0, %v2633
        %v2635 = vrot.slane %v2631, %v2634
        %v2636 = vmul.f32 %v2635, %v842
        %v2637 = vmul.f32 %v2635, %v844
        %v2638 = vmul.f32 %v2635, %v846
        %v2639 = vmul.f32 %v2635, %v848
        %v2640 = vmul.f32 %v2635, %v850
        %v2641 = vmul.f32 %v2635, %v852
        %v2642 = vmul.f32 %v2635, %v854
        %v2643 = vmul.f32 %v2635, %v856
        %v2644 = vmul.f32 %v2635, %v858
        %v2645 = vmul.f32 %v2635, %v860
        %v2646 = vmul.f32 %v2635, %v862
        %v2647 = vmul.f32 %v2635, %v864
        %v2648 = vmul.f32 %v2635, %v866
        %v2649 = vmul.f32 %v2635, %v868
        %v2650 = vmul.f32 %v2635, %v870
        %v2651 = vmul.f32 %v2635, %v872
        %v2652 = vmul.f32 %v2635, %v874
        %v2653 = vmul.f32 %v2635, %v876
        %v2654 = vmul.f32 %v2635, %v878
        %v2655 = vmul.f32 %v2635, %v880
        %v2656 = vmul.f32 %v2635, %v882
        %v2657 = vmul.f32 %v2635, %v884
        %v2658 = vmul.f32 %v2635, %v886
        %v2659 = vmul.f32 %v2635, %v888
        %v2660 = vmul.f32 %v2635, %v890
        %v2661 = vmul.f32 %v2635, %v892
        %v2662 = vmul.f32 %v2635, %v894
        %v2663 = vmul.f32 %v2635, %v896
        %v2664 = vmul.f32 %v2635, %v898
        %v2665 = vmul.f32 %v2635, %v900
        %v2666 = vmul.f32 %v2635, %v902
        %v2667 = vmul.f32 %v2635, %v904
        %v2668 = vadd.f32 %v2599, %v2636
        %v2669 = vadd.f32 %v2600, %v2637
        %v2670 = vadd.f32 %v2601, %v2638
        %v2671 = vadd.f32 %v2602, %v2639
        %v2672 = vadd.f32 %v2603, %v2640
        %v2673 = vadd.f32 %v2604, %v2641
        %v2674 = vadd.f32 %v2605, %v2642
        %v2675 = vadd.f32 %v2606, %v2643
        %v2676 = vadd.f32 %v2607, %v2644
        %v2677 = vadd.f32 %v2608, %v2645
        %v2678 = vadd.f32 %v2609, %v2646
        %v2679 = vadd.f32 %v2610, %v2647
        %v2680 = vadd.f32 %v2611, %v2648
        %v2681 = vadd.f32 %v2612, %v2649
        %v2682 = vadd.f32 %v2613, %v2650
        %v2683 = vadd.f32 %v2614, %v2651
        %v2684 = vadd.f32 %v2615, %v2652
        %v2685 = vadd.f32 %v2616, %v2653
        %v2686 = vadd.f32 %v2617, %v2654
        %v2687 = vadd.f32 %v2618, %v2655
        %v2688 = vadd.f32 %v2619, %v2656
        %v2689 = vadd.f32 %v2620, %v2657
        %v2690 = vadd.f32 %v2621, %v2658
        %v2691 = vadd.f32 %v2622, %v2659
        %v2692 = vadd.f32 %v2623, %v2660
        %v2693 = vadd.f32 %v2624, %v2661
        %v2694 = vadd.f32 %v2625, %v2662
        %v2695 = vadd.f32 %v2626, %v2663
        %v2696 = vadd.f32 %v2627, %v2664
        %v2697 = vadd.f32 %v2628, %v2665
        %v2698 = vadd.f32 %v2629, %v2666
        %v2699 = vadd.f32 %v2630, %v2667
        %v2700 = vld [vmem:[%s192 + $0x39] sm:$0x1]
        %v2701 = vlaneseq
        %v2702 = vshrl.u32 %v2701, 7
        %v2703 = vsub.s32 0, %v2702
        %v2704 = vrot.slane %v2700, %v2703
        %v2705 = vmul.f32 %v2704, %v971
        %v2706 = vmul.f32 %v2704, %v973
        %v2707 = vmul.f32 %v2704, %v975
        %v2708 = vmul.f32 %v2704, %v977
        %v2709 = vmul.f32 %v2704, %v979
        %v2710 = vmul.f32 %v2704, %v981
        %v2711 = vmul.f32 %v2704, %v983
        %v2712 = vmul.f32 %v2704, %v985
        %v2713 = vmul.f32 %v2704, %v987
        %v2714 = vmul.f32 %v2704, %v989
        %v2715 = vmul.f32 %v2704, %v991
        %v2716 = vmul.f32 %v2704, %v993
        %v2717 = vmul.f32 %v2704, %v995
        %v2718 = vmul.f32 %v2704, %v997
        %v2719 = vmul.f32 %v2704, %v999
        %v2720 = vmul.f32 %v2704, %v1001
        %v2721 = vmul.f32 %v2704, %v1003
        %v2722 = vmul.f32 %v2704, %v1005
        %v2723 = vmul.f32 %v2704, %v1007
        %v2724 = vmul.f32 %v2704, %v1009
        %v2725 = vmul.f32 %v2704, %v1011
        %v2726 = vmul.f32 %v2704, %v1013
        %v2727 = vmul.f32 %v2704, %v1015
        %v2728 = vmul.f32 %v2704, %v1017
        %v2729 = vmul.f32 %v2704, %v1019
        %v2730 = vmul.f32 %v2704, %v1021
        %v2731 = vmul.f32 %v2704, %v1023
        %v2732 = vmul.f32 %v2704, %v1025
        %v2733 = vmul.f32 %v2704, %v1027
        %v2734 = vmul.f32 %v2704, %v1029
        %v2735 = vmul.f32 %v2704, %v1031
        %v2736 = vmul.f32 %v2704, %v1033
        %v2737 = vadd.f32 %v2668, %v2705
        %v2738 = vadd.f32 %v2669, %v2706
        %v2739 = vadd.f32 %v2670, %v2707
        %v2740 = vadd.f32 %v2671, %v2708
        %v2741 = vadd.f32 %v2672, %v2709
        %v2742 = vadd.f32 %v2673, %v2710
        %v2743 = vadd.f32 %v2674, %v2711
        %v2744 = vadd.f32 %v2675, %v2712
        %v2745 = vadd.f32 %v2676, %v2713
        %v2746 = vadd.f32 %v2677, %v2714
        %v2747 = vadd.f32 %v2678, %v2715
        %v2748 = vadd.f32 %v2679, %v2716
        %v2749 = vadd.f32 %v2680, %v2717
        %v2750 = vadd.f32 %v2681, %v2718
        %v2751 = vadd.f32 %v2682, %v2719
        %v2752 = vadd.f32 %v2683, %v2720
        %v2753 = vadd.f32 %v2684, %v2721
        %v2754 = vadd.f32 %v2685, %v2722
        %v2755 = vadd.f32 %v2686, %v2723
        %v2756 = vadd.f32 %v2687, %v2724
        %v2757 = vadd.f32 %v2688, %v2725
        %v2758 = vadd.f32 %v2689, %v2726
        %v2759 = vadd.f32 %v2690, %v2727
        %v2760 = vadd.f32 %v2691, %v2728
        %v2761 = vadd.f32 %v2692, %v2729
        %v2762 = vadd.f32 %v2693, %v2730
        %v2763 = vadd.f32 %v2694, %v2731
        %v2764 = vadd.f32 %v2695, %v2732
        %v2765 = vadd.f32 %v2696, %v2733
        %v2766 = vadd.f32 %v2697, %v2734
        %v2767 = vadd.f32 %v2698, %v2735
        %v2768 = vadd.f32 %v2699, %v2736
        %v2769 = vrot.slane %v2737, 7
        %v2770 = vrot.slane %v2739, 7
        %v2771 = vrot.slane %v2741, 7
        %v2772 = vrot.slane %v2743, 7
        %v2773 = vrot.slane %v2745, 7
        %v2774 = vrot.slane %v2747, 7
        %v2775 = vrot.slane %v2749, 7
        %v2776 = vrot.slane %v2751, 7
        %v2777 = vrot.slane %v2753, 7
        %v2778 = vrot.slane %v2755, 7
        %v2779 = vrot.slane %v2757, 7
        %v2780 = vrot.slane %v2759, 7
        %v2781 = vrot.slane %v2761, 7
        %v2782 = vrot.slane %v2763, 7
        %v2783 = vrot.slane %v2765, 7
        %v2784 = vrot.slane %v2767, 7
        %v2785 = vrot.slane %v2738, 7
        %v2786 = vrot.slane %v2740, 7
        %v2787 = vrot.slane %v2742, 7
        %v2788 = vrot.slane %v2744, 7
        %v2789 = vrot.slane %v2746, 7
        %v2790 = vrot.slane %v2748, 7
        %v2791 = vrot.slane %v2750, 7
        %v2792 = vrot.slane %v2752, 7
        %v2793 = vrot.slane %v2754, 7
        %v2794 = vrot.slane %v2756, 7
        %v2795 = vrot.slane %v2758, 7
        %v2796 = vrot.slane %v2760, 7
        %v2797 = vrot.slane %v2762, 7
        %v2798 = vrot.slane %v2764, 7
        %v2799 = vrot.slane %v2766, 7
        %v2800 = vrot.slane %v2768, 7
        %v2801 = vsel %vm1128, %v2769, %v2785
        %v2802 = vsel %vm1128, %v2770, %v2786
        %v2803 = vsel %vm1128, %v2771, %v2787
        %v2804 = vsel %vm1128, %v2772, %v2788
        %v2805 = vsel %vm1128, %v2773, %v2789
        %v2806 = vsel %vm1128, %v2774, %v2790
        %v2807 = vsel %vm1128, %v2775, %v2791
        %v2808 = vsel %vm1128, %v2776, %v2792
        %v2809 = vsel %vm1128, %v2777, %v2793
        %v2810 = vsel %vm1128, %v2778, %v2794
        %v2811 = vsel %vm1128, %v2779, %v2795
        %v2812 = vsel %vm1128, %v2780, %v2796
        %v2813 = vsel %vm1128, %v2781, %v2797
        %v2814 = vsel %vm1128, %v2782, %v2798
        %v2815 = vsel %vm1128, %v2783, %v2799
        %v2816 = vsel %vm1128, %v2784, %v2800
        %v2817 = vsel %vm1128, %v2785, %v2769
        %v2818 = vsel %vm1128, %v2786, %v2770
        %v2819 = vsel %vm1128, %v2787, %v2771
        %v2820 = vsel %vm1128, %v2788, %v2772
        %v2821 = vsel %vm1128, %v2789, %v2773
        %v2822 = vsel %vm1128, %v2790, %v2774
        %v2823 = vsel %vm1128, %v2791, %v2775
        %v2824 = vsel %vm1128, %v2792, %v2776
        %v2825 = vsel %vm1128, %v2793, %v2777
        %v2826 = vsel %vm1128, %v2794, %v2778
        %v2827 = vsel %vm1128, %v2795, %v2779
        %v2828 = vsel %vm1128, %v2796, %v2780
        %v2829 = vsel %vm1128, %v2797, %v2781
        %v2830 = vsel %vm1128, %v2798, %v2782
        %v2831 = vsel %vm1128, %v2799, %v2783
        %v2832 = vsel %vm1128, %v2800, %v2784
        %v2833 = vsel %vm1128, 0.0, %v2817
        %v2834 = vsel %vm1159, 0.0, %v2801
        %v2835 = vsel %vm1128, 0.0, %v2818
        %v2836 = vsel %vm1159, 0.0, %v2802
        %v2837 = vsel %vm1128, 0.0, %v2819
        %v2838 = vsel %vm1159, 0.0, %v2803
        %v2839 = vsel %vm1128, 0.0, %v2820
        %v2840 = vsel %vm1159, 0.0, %v2804
        %v2841 = vsel %vm1128, 0.0, %v2821
        %v2842 = vsel %vm1159, 0.0, %v2805
        %v2843 = vsel %vm1128, 0.0, %v2822
        %v2844 = vsel %vm1159, 0.0, %v2806
        %v2845 = vsel %vm1128, 0.0, %v2823
        %v2846 = vsel %vm1159, 0.0, %v2807
        %v2847 = vsel %vm1128, 0.0, %v2824
        %v2848 = vsel %vm1159, 0.0, %v2808
        %v2849 = vsel %vm1128, 0.0, %v2825
        %v2850 = vsel %vm1159, 0.0, %v2809
        %v2851 = vsel %vm1128, 0.0, %v2826
        %v2852 = vsel %vm1159, 0.0, %v2810
        %v2853 = vsel %vm1128, 0.0, %v2827
        %v2854 = vsel %vm1159, 0.0, %v2811
        %v2855 = vsel %vm1128, 0.0, %v2828
        %v2856 = vsel %vm1159, 0.0, %v2812
        %v2857 = vsel %vm1128, 0.0, %v2829
        %v2858 = vsel %vm1159, 0.0, %v2813
        %v2859 = vsel %vm1128, 0.0, %v2830
        %v2860 = vsel %vm1159, 0.0, %v2814
        %v2861 = vsel %vm1128, 0.0, %v2831
        %v2862 = vsel %vm1159, 0.0, %v2815
        %v2863 = vsel %vm1128, 0.0, %v2832
        %v2864 = vsel %vm1159, 0.0, %v2816
        %v2865 = vadd.f32 %v2255, %v2833
        %v2866 = vadd.f32 %v2255, %v2834
        %v2867 = vadd.f32 %v2256, %v2835
        %v2868 = vadd.f32 %v2257, %v2836
        %v2869 = vadd.f32 %v2258, %v2837
        %v2870 = vadd.f32 %v2259, %v2838
        %v2871 = vadd.f32 %v2260, %v2839
        %v2872 = vadd.f32 %v2261, %v2840
        %v2873 = vadd.f32 %v2262, %v2841
        %v2874 = vadd.f32 %v2263, %v2842
        %v2875 = vadd.f32 %v2264, %v2843
        %v2876 = vadd.f32 %v2265, %v2844
        %v2877 = vadd.f32 %v2266, %v2845
        %v2878 = vadd.f32 %v2267, %v2846
        %v2879 = vadd.f32 %v2268, %v2847
        %v2880 = vadd.f32 %v2269, %v2848
        %v2881 = vadd.f32 %v2270, %v2849
        %v2882 = vadd.f32 %v2271, %v2850
        %v2883 = vadd.f32 %v2272, %v2851
        %v2884 = vadd.f32 %v2273, %v2852
        %v2885 = vadd.f32 %v2274, %v2853
        %v2886 = vadd.f32 %v2275, %v2854
        %v2887 = vadd.f32 %v2276, %v2855
        %v2888 = vadd.f32 %v2277, %v2856
        %v2889 = vadd.f32 %v2278, %v2857
        %v2890 = vadd.f32 %v2279, %v2858
        %v2891 = vadd.f32 %v2280, %v2859
        %v2892 = vadd.f32 %v2281, %v2860
        %v2893 = vadd.f32 %v2282, %v2861
        %v2894 = vadd.f32 %v2283, %v2862
        %v2895 = vadd.f32 %v2284, %v2863
        %v2896 = vadd.f32 %v2285, %v2864
        %v2897 = vld [vmem:[%s192 + $0x4] sm:$0x1]
        %v2898 = vlaneseq
        %v2899 = vshrl.u32 %v2898, 7
        %v2900 = vsub.s32 0, %v2899
        %v2901 = vrot.slane %v2897, %v2900
        %v2902 = vmul.f32 %v2901, %v261
        %v2903 = vmul.f32 %v2901, %v263
        %v2904 = vmul.f32 %v2901, %v265
        %v2905 = vmul.f32 %v2901, %v267
        %v2906 = vmul.f32 %v2901, %v269
        %v2907 = vmul.f32 %v2901, %v271
        %v2908 = vmul.f32 %v2901, %v273
        %v2909 = vmul.f32 %v2901, %v275
        %v2910 = vmul.f32 %v2901, %v277
        %v2911 = vmul.f32 %v2901, %v279
        %v2912 = vmul.f32 %v2901, %v281
        %v2913 = vmul.f32 %v2901, %v283
        %v2914 = vmul.f32 %v2901, %v285
        %v2915 = vmul.f32 %v2901, %v287
        %v2916 = vmul.f32 %v2901, %v289
        %v2917 = vmul.f32 %v2901, %v291
        %v2918 = vmul.f32 %v2901, %v293
        %v2919 = vmul.f32 %v2901, %v295
        %v2920 = vmul.f32 %v2901, %v297
        %v2921 = vmul.f32 %v2901, %v299
        %v2922 = vmul.f32 %v2901, %v301
        %v2923 = vmul.f32 %v2901, %v303
        %v2924 = vmul.f32 %v2901, %v305
        %v2925 = vmul.f32 %v2901, %v307
        %v2926 = vmul.f32 %v2901, %v309
        %v2927 = vmul.f32 %v2901, %v311
        %v2928 = vmul.f32 %v2901, %v313
        %v2929 = vmul.f32 %v2901, %v315
        %v2930 = vmul.f32 %v2901, %v317
        %v2931 = vmul.f32 %v2901, %v319
        %v2932 = vmul.f32 %v2901, %v321
        %v2933 = vmul.f32 %v2901, %v323
        %v2934 = vadd.f32 %v2902, 0.0
        %v2935 = vadd.f32 %v2903, 0.0
        %v2936 = vadd.f32 %v2904, 0.0
        %v2937 = vadd.f32 %v2905, 0.0
        %v2938 = vadd.f32 %v2906, 0.0
        %v2939 = vadd.f32 %v2907, 0.0
        %v2940 = vadd.f32 %v2908, 0.0
        %v2941 = vadd.f32 %v2909, 0.0
        %v2942 = vadd.f32 %v2910, 0.0
        %v2943 = vadd.f32 %v2911, 0.0
        %v2944 = vadd.f32 %v2912, 0.0
        %v2945 = vadd.f32 %v2913, 0.0
        %v2946 = vadd.f32 %v2914, 0.0
        %v2947 = vadd.f32 %v2915, 0.0
        %v2948 = vadd.f32 %v2916, 0.0
        %v2949 = vadd.f32 %v2917, 0.0
        %v2950 = vadd.f32 %v2918, 0.0
        %v2951 = vadd.f32 %v2919, 0.0
        %v2952 = vadd.f32 %v2920, 0.0
        %v2953 = vadd.f32 %v2921, 0.0
        %v2954 = vadd.f32 %v2922, 0.0
        %v2955 = vadd.f32 %v2923, 0.0
        %v2956 = vadd.f32 %v2924, 0.0
        %v2957 = vadd.f32 %v2925, 0.0
        %v2958 = vadd.f32 %v2926, 0.0
        %v2959 = vadd.f32 %v2927, 0.0
        %v2960 = vadd.f32 %v2928, 0.0
        %v2961 = vadd.f32 %v2929, 0.0
        %v2962 = vadd.f32 %v2930, 0.0
        %v2963 = vadd.f32 %v2931, 0.0
        %v2964 = vadd.f32 %v2932, 0.0
        %v2965 = vadd.f32 %v2933, 0.0
        %v2966 = vld [vmem:[%s192 + $0xd] sm:$0x1]
        %v2967 = vlaneseq
        %v2968 = vshrl.u32 %v2967, 7
        %v2969 = vsub.s32 0, %v2968
        %v2970 = vrot.slane %v2966, %v2969
        %v2971 = vmul.f32 %v2970, %v390
        %v2972 = vmul.f32 %v2970, %v392
        %v2973 = vmul.f32 %v2970, %v394
        %v2974 = vmul.f32 %v2970, %v396
        %v2975 = vmul.f32 %v2970, %v398
        %v2976 = vmul.f32 %v2970, %v400
        %v2977 = vmul.f32 %v2970, %v402
        %v2978 = vmul.f32 %v2970, %v404
        %v2979 = vmul.f32 %v2970, %v406
        %v2980 = vmul.f32 %v2970, %v408
        %v2981 = vmul.f32 %v2970, %v410
        %v2982 = vmul.f32 %v2970, %v412
        %v2983 = vmul.f32 %v2970, %v414
        %v2984 = vmul.f32 %v2970, %v416
        %v2985 = vmul.f32 %v2970, %v418
        %v2986 = vmul.f32 %v2970, %v420
        %v2987 = vmul.f32 %v2970, %v422
        %v2988 = vmul.f32 %v2970, %v424
        %v2989 = vmul.f32 %v2970, %v426
        %v2990 = vmul.f32 %v2970, %v428
        %v2991 = vmul.f32 %v2970, %v430
        %v2992 = vmul.f32 %v2970, %v432
        %v2993 = vmul.f32 %v2970, %v434
        %v2994 = vmul.f32 %v2970, %v436
        %v2995 = vmul.f32 %v2970, %v438
        %v2996 = vmul.f32 %v2970, %v440
        %v2997 = vmul.f32 %v2970, %v442
        %v2998 = vmul.f32 %v2970, %v444
        %v2999 = vmul.f32 %v2970, %v446
        %v3000 = vmul.f32 %v2970, %v448
        %v3001 = vmul.f32 %v2970, %v450
        %v3002 = vmul.f32 %v2970, %v452
        %v3003 = vadd.f32 %v2934, %v2971
        %v3004 = vadd.f32 %v2935, %v2972
        %v3005 = vadd.f32 %v2936, %v2973
        %v3006 = vadd.f32 %v2937, %v2974
        %v3007 = vadd.f32 %v2938, %v2975
        %v3008 = vadd.f32 %v2939, %v2976
        %v3009 = vadd.f32 %v2940, %v2977
        %v3010 = vadd.f32 %v2941, %v2978
        %v3011 = vadd.f32 %v2942, %v2979
        %v3012 = vadd.f32 %v2943, %v2980
        %v3013 = vadd.f32 %v2944, %v2981
        %v3014 = vadd.f32 %v2945, %v2982
        %v3015 = vadd.f32 %v2946, %v2983
        %v3016 = vadd.f32 %v2947, %v2984
        %v3017 = vadd.f32 %v2948, %v2985
        %v3018 = vadd.f32 %v2949, %v2986
        %v3019 = vadd.f32 %v2950, %v2987
        %v3020 = vadd.f32 %v2951, %v2988
        %v3021 = vadd.f32 %v2952, %v2989
        %v3022 = vadd.f32 %v2953, %v2990
        %v3023 = vadd.f32 %v2954, %v2991
        %v3024 = vadd.f32 %v2955, %v2992
        %v3025 = vadd.f32 %v2956, %v2993
        %v3026 = vadd.f32 %v2957, %v2994
        %v3027 = vadd.f32 %v2958, %v2995
        %v3028 = vadd.f32 %v2959, %v2996
        %v3029 = vadd.f32 %v2960, %v2997
        %v3030 = vadd.f32 %v2961, %v2998
        %v3031 = vadd.f32 %v2962, %v2999
        %v3032 = vadd.f32 %v2963, %v3000
        %v3033 = vadd.f32 %v2964, %v3001
        %v3034 = vadd.f32 %v2965, %v3002
        %v3035 = vld [vmem:[%s192 + $0x16] sm:$0x1]
        %v3036 = vlaneseq
        %v3037 = vshrl.u32 %v3036, 7
        %v3038 = vsub.s32 0, %v3037
        %v3039 = vrot.slane %v3035, %v3038
        %v3040 = vmul.f32 %v3039, %v519
        %v3041 = vmul.f32 %v3039, %v521
        %v3042 = vmul.f32 %v3039, %v523
        %v3043 = vmul.f32 %v3039, %v525
        %v3044 = vmul.f32 %v3039, %v527
        %v3045 = vmul.f32 %v3039, %v529
        %v3046 = vmul.f32 %v3039, %v531
        %v3047 = vmul.f32 %v3039, %v533
        %v3048 = vmul.f32 %v3039, %v535
        %v3049 = vmul.f32 %v3039, %v537
        %v3050 = vmul.f32 %v3039, %v539
        %v3051 = vmul.f32 %v3039, %v541
        %v3052 = vmul.f32 %v3039, %v543
        %v3053 = vmul.f32 %v3039, %v545
        %v3054 = vmul.f32 %v3039, %v547
        %v3055 = vmul.f32 %v3039, %v549
        %v3056 = vmul.f32 %v3039, %v551
        %v3057 = vmul.f32 %v3039, %v553
        %v3058 = vmul.f32 %v3039, %v555
        %v3059 = vmul.f32 %v3039, %v557
        %v3060 = vmul.f32 %v3039, %v559
        %v3061 = vmul.f32 %v3039, %v561
        %v3062 = vmul.f32 %v3039, %v563
        %v3063 = vmul.f32 %v3039, %v565
        %v3064 = vmul.f32 %v3039, %v567
        %v3065 = vmul.f32 %v3039, %v569
        %v3066 = vmul.f32 %v3039, %v571
        %v3067 = vmul.f32 %v3039, %v573
        %v3068 = vmul.f32 %v3039, %v575
        %v3069 = vmul.f32 %v3039, %v577
        %v3070 = vmul.f32 %v3039, %v579
        %v3071 = vmul.f32 %v3039, %v581
        %v3072 = vadd.f32 %v3003, %v3040
        %v3073 = vadd.f32 %v3004, %v3041
        %v3074 = vadd.f32 %v3005, %v3042
        %v3075 = vadd.f32 %v3006, %v3043
        %v3076 = vadd.f32 %v3007, %v3044
        %v3077 = vadd.f32 %v3008, %v3045
        %v3078 = vadd.f32 %v3009, %v3046
        %v3079 = vadd.f32 %v3010, %v3047
        %v3080 = vadd.f32 %v3011, %v3048
        %v3081 = vadd.f32 %v3012, %v3049
        %v3082 = vadd.f32 %v3013, %v3050
        %v3083 = vadd.f32 %v3014, %v3051
        %v3084 = vadd.f32 %v3015, %v3052
        %v3085 = vadd.f32 %v3016, %v3053
        %v3086 = vadd.f32 %v3017, %v3054
        %v3087 = vadd.f32 %v3018, %v3055
        %v3088 = vadd.f32 %v3019, %v3056
        %v3089 = vadd.f32 %v3020, %v3057
        %v3090 = vadd.f32 %v3021, %v3058
        %v3091 = vadd.f32 %v3022, %v3059
        %v3092 = vadd.f32 %v3023, %v3060
        %v3093 = vadd.f32 %v3024, %v3061
        %v3094 = vadd.f32 %v3025, %v3062
        %v3095 = vadd.f32 %v3026, %v3063
        %v3096 = vadd.f32 %v3027, %v3064
        %v3097 = vadd.f32 %v3028, %v3065
        %v3098 = vadd.f32 %v3029, %v3066
        %v3099 = vadd.f32 %v3030, %v3067
        %v3100 = vadd.f32 %v3031, %v3068
        %v3101 = vadd.f32 %v3032, %v3069
        %v3102 = vadd.f32 %v3033, %v3070
        %v3103 = vadd.f32 %v3034, %v3071
        %v3104 = vld [vmem:[%s192 + $0x1f] sm:$0x1]
        %v3105 = vlaneseq
        %v3106 = vshrl.u32 %v3105, 7
        %v3107 = vsub.s32 0, %v3106
        %v3108 = vrot.slane %v3104, %v3107
        %v3109 = vmul.f32 %v3108, %v218
        %v3110 = vmul.f32 %v3108, %v219
        %v3111 = vmul.f32 %v3108, %v220
        %v3112 = vmul.f32 %v3108, %v221
        %v3113 = vmul.f32 %v3108, %v222
        %v3114 = vmul.f32 %v3108, %v223
        %v3115 = vmul.f32 %v3108, %v224
        %v3116 = vmul.f32 %v3108, %v225
        %v3117 = vmul.f32 %v3108, %v226
        %v3118 = vmul.f32 %v3108, %v227
        %v3119 = vmul.f32 %v3108, %v228
        %v3120 = vmul.f32 %v3108, %v229
        %v3121 = vmul.f32 %v3108, %v230
        %v3122 = vmul.f32 %v3108, %v231
        %v3123 = vmul.f32 %v3108, %v232
        %v3124 = vmul.f32 %v3108, %v233
        %v3125 = vmul.f32 %v3108, %v234
        %v3126 = vmul.f32 %v3108, %v235
        %v3127 = vmul.f32 %v3108, %v236
        %v3128 = vmul.f32 %v3108, %v237
        %v3129 = vmul.f32 %v3108, %v238
        %v3130 = vmul.f32 %v3108, %v239
        %v3131 = vmul.f32 %v3108, %v240
        %v3132 = vmul.f32 %v3108, %v241
        %v3133 = vmul.f32 %v3108, %v242
        %v3134 = vmul.f32 %v3108, %v243
        %v3135 = vmul.f32 %v3108, %v244
        %v3136 = vmul.f32 %v3108, %v245
        %v3137 = vmul.f32 %v3108, %v246
        %v3138 = vmul.f32 %v3108, %v247
        %v3139 = vmul.f32 %v3108, %v248
        %v3140 = vmul.f32 %v3108, %v249
        %v3141 = vadd.f32 %v3072, %v3109
        %v3142 = vadd.f32 %v3073, %v3110
        %v3143 = vadd.f32 %v3074, %v3111
        %v3144 = vadd.f32 %v3075, %v3112
        %v3145 = vadd.f32 %v3076, %v3113
        %v3146 = vadd.f32 %v3077, %v3114
        %v3147 = vadd.f32 %v3078, %v3115
        %v3148 = vadd.f32 %v3079, %v3116
        %v3149 = vadd.f32 %v3080, %v3117
        %v3150 = vadd.f32 %v3081, %v3118
        %v3151 = vadd.f32 %v3082, %v3119
        %v3152 = vadd.f32 %v3083, %v3120
        %v3153 = vadd.f32 %v3084, %v3121
        %v3154 = vadd.f32 %v3085, %v3122
        %v3155 = vadd.f32 %v3086, %v3123
        %v3156 = vadd.f32 %v3087, %v3124
        %v3157 = vadd.f32 %v3088, %v3125
        %v3158 = vadd.f32 %v3089, %v3126
        %v3159 = vadd.f32 %v3090, %v3127
        %v3160 = vadd.f32 %v3091, %v3128
        %v3161 = vadd.f32 %v3092, %v3129
        %v3162 = vadd.f32 %v3093, %v3130
        %v3163 = vadd.f32 %v3094, %v3131
        %v3164 = vadd.f32 %v3095, %v3132
        %v3165 = vadd.f32 %v3096, %v3133
        %v3166 = vadd.f32 %v3097, %v3134
        %v3167 = vadd.f32 %v3098, %v3135
        %v3168 = vadd.f32 %v3099, %v3136
        %v3169 = vadd.f32 %v3100, %v3137
        %v3170 = vadd.f32 %v3101, %v3138
        %v3171 = vadd.f32 %v3102, %v3139
        %v3172 = vadd.f32 %v3103, %v3140
        %v3173 = vld [vmem:[%s192 + $0x28] sm:$0x1]
        %v3174 = vlaneseq
        %v3175 = vshrl.u32 %v3174, 7
        %v3176 = vsub.s32 0, %v3175
        %v3177 = vrot.slane %v3173, %v3176
        %v3178 = vmul.f32 %v3177, %v713
        %v3179 = vmul.f32 %v3177, %v715
        %v3180 = vmul.f32 %v3177, %v717
        %v3181 = vmul.f32 %v3177, %v719
        %v3182 = vmul.f32 %v3177, %v721
        %v3183 = vmul.f32 %v3177, %v723
        %v3184 = vmul.f32 %v3177, %v725
        %v3185 = vmul.f32 %v3177, %v727
        %v3186 = vmul.f32 %v3177, %v729
        %v3187 = vmul.f32 %v3177, %v731
        %v3188 = vmul.f32 %v3177, %v733
        %v3189 = vmul.f32 %v3177, %v735
        %v3190 = vmul.f32 %v3177, %v737
        %v3191 = vmul.f32 %v3177, %v739
        %v3192 = vmul.f32 %v3177, %v741
        %v3193 = vmul.f32 %v3177, %v743
        %v3194 = vmul.f32 %v3177, %v745
        %v3195 = vmul.f32 %v3177, %v747
        %v3196 = vmul.f32 %v3177, %v749
        %v3197 = vmul.f32 %v3177, %v751
        %v3198 = vmul.f32 %v3177, %v753
        %v3199 = vmul.f32 %v3177, %v755
        %v3200 = vmul.f32 %v3177, %v757
        %v3201 = vmul.f32 %v3177, %v759
        %v3202 = vmul.f32 %v3177, %v761
        %v3203 = vmul.f32 %v3177, %v763
        %v3204 = vmul.f32 %v3177, %v765
        %v3205 = vmul.f32 %v3177, %v767
        %v3206 = vmul.f32 %v3177, %v769
        %v3207 = vmul.f32 %v3177, %v771
        %v3208 = vmul.f32 %v3177, %v773
        %v3209 = vmul.f32 %v3177, %v775
        %v3210 = vadd.f32 %v3141, %v3178
        %v3211 = vadd.f32 %v3142, %v3179
        %v3212 = vadd.f32 %v3143, %v3180
        %v3213 = vadd.f32 %v3144, %v3181
        %v3214 = vadd.f32 %v3145, %v3182
        %v3215 = vadd.f32 %v3146, %v3183
        %v3216 = vadd.f32 %v3147, %v3184
        %v3217 = vadd.f32 %v3148, %v3185
        %v3218 = vadd.f32 %v3149, %v3186
        %v3219 = vadd.f32 %v3150, %v3187
        %v3220 = vadd.f32 %v3151, %v3188
        %v3221 = vadd.f32 %v3152, %v3189
        %v3222 = vadd.f32 %v3153, %v3190
        %v3223 = vadd.f32 %v3154, %v3191
        %v3224 = vadd.f32 %v3155, %v3192
        %v3225 = vadd.f32 %v3156, %v3193
        %v3226 = vadd.f32 %v3157, %v3194
        %v3227 = vadd.f32 %v3158, %v3195
        %v3228 = vadd.f32 %v3159, %v3196
        %v3229 = vadd.f32 %v3160, %v3197
        %v3230 = vadd.f32 %v3161, %v3198
        %v3231 = vadd.f32 %v3162, %v3199
        %v3232 = vadd.f32 %v3163, %v3200
        %v3233 = vadd.f32 %v3164, %v3201
        %v3234 = vadd.f32 %v3165, %v3202
        %v3235 = vadd.f32 %v3166, %v3203
        %v3236 = vadd.f32 %v3167, %v3204
        %v3237 = vadd.f32 %v3168, %v3205
        %v3238 = vadd.f32 %v3169, %v3206
        %v3239 = vadd.f32 %v3170, %v3207
        %v3240 = vadd.f32 %v3171, %v3208
        %v3241 = vadd.f32 %v3172, %v3209
        %v3242 = vld [vmem:[%s192 + $0x31] sm:$0x1]
        %v3243 = vlaneseq
        %v3244 = vshrl.u32 %v3243, 7
        %v3245 = vsub.s32 0, %v3244
        %v3246 = vrot.slane %v3242, %v3245
        %v3247 = vmul.f32 %v3246, %v842
        %v3248 = vmul.f32 %v3246, %v844
        %v3249 = vmul.f32 %v3246, %v846
        %v3250 = vmul.f32 %v3246, %v848
        %v3251 = vmul.f32 %v3246, %v850
        %v3252 = vmul.f32 %v3246, %v852
        %v3253 = vmul.f32 %v3246, %v854
        %v3254 = vmul.f32 %v3246, %v856
        %v3255 = vmul.f32 %v3246, %v858
        %v3256 = vmul.f32 %v3246, %v860
        %v3257 = vmul.f32 %v3246, %v862
        %v3258 = vmul.f32 %v3246, %v864
        %v3259 = vmul.f32 %v3246, %v866
        %v3260 = vmul.f32 %v3246, %v868
        %v3261 = vmul.f32 %v3246, %v870
        %v3262 = vmul.f32 %v3246, %v872
        %v3263 = vmul.f32 %v3246, %v874
        %v3264 = vmul.f32 %v3246, %v876
        %v3265 = vmul.f32 %v3246, %v878
        %v3266 = vmul.f32 %v3246, %v880
        %v3267 = vmul.f32 %v3246, %v882
        %v3268 = vmul.f32 %v3246, %v884
        %v3269 = vmul.f32 %v3246, %v886
        %v3270 = vmul.f32 %v3246, %v888
        %v3271 = vmul.f32 %v3246, %v890
        %v3272 = vmul.f32 %v3246, %v892
        %v3273 = vmul.f32 %v3246, %v894
        %v3274 = vmul.f32 %v3246, %v896
        %v3275 = vmul.f32 %v3246, %v898
        %v3276 = vmul.f32 %v3246, %v900
        %v3277 = vmul.f32 %v3246, %v902
        %v3278 = vmul.f32 %v3246, %v904
        %v3279 = vadd.f32 %v3210, %v3247
        %v3280 = vadd.f32 %v3211, %v3248
        %v3281 = vadd.f32 %v3212, %v3249
        %v3282 = vadd.f32 %v3213, %v3250
        %v3283 = vadd.f32 %v3214, %v3251
        %v3284 = vadd.f32 %v3215, %v3252
        %v3285 = vadd.f32 %v3216, %v3253
        %v3286 = vadd.f32 %v3217, %v3254
        %v3287 = vadd.f32 %v3218, %v3255
        %v3288 = vadd.f32 %v3219, %v3256
        %v3289 = vadd.f32 %v3220, %v3257
        %v3290 = vadd.f32 %v3221, %v3258
        %v3291 = vadd.f32 %v3222, %v3259
        %v3292 = vadd.f32 %v3223, %v3260
        %v3293 = vadd.f32 %v3224, %v3261
        %v3294 = vadd.f32 %v3225, %v3262
        %v3295 = vadd.f32 %v3226, %v3263
        %v3296 = vadd.f32 %v3227, %v3264
        %v3297 = vadd.f32 %v3228, %v3265
        %v3298 = vadd.f32 %v3229, %v3266
        %v3299 = vadd.f32 %v3230, %v3267
        %v3300 = vadd.f32 %v3231, %v3268
        %v3301 = vadd.f32 %v3232, %v3269
        %v3302 = vadd.f32 %v3233, %v3270
        %v3303 = vadd.f32 %v3234, %v3271
        %v3304 = vadd.f32 %v3235, %v3272
        %v3305 = vadd.f32 %v3236, %v3273
        %v3306 = vadd.f32 %v3237, %v3274
        %v3307 = vadd.f32 %v3238, %v3275
        %v3308 = vadd.f32 %v3239, %v3276
        %v3309 = vadd.f32 %v3240, %v3277
        %v3310 = vadd.f32 %v3241, %v3278
        %v3311 = vld [vmem:[%s192 + $0x3a] sm:$0x1]
        %v3312 = vlaneseq
        %v3313 = vshrl.u32 %v3312, 7
        %v3314 = vsub.s32 0, %v3313
        %v3315 = vrot.slane %v3311, %v3314
        %v3316 = vmul.f32 %v3315, %v971
        %v3317 = vmul.f32 %v3315, %v973
        %v3318 = vmul.f32 %v3315, %v975
        %v3319 = vmul.f32 %v3315, %v977
        %v3320 = vmul.f32 %v3315, %v979
        %v3321 = vmul.f32 %v3315, %v981
        %v3322 = vmul.f32 %v3315, %v983
        %v3323 = vmul.f32 %v3315, %v985
        %v3324 = vmul.f32 %v3315, %v987
        %v3325 = vmul.f32 %v3315, %v989
        %v3326 = vmul.f32 %v3315, %v991
        %v3327 = vmul.f32 %v3315, %v993
        %v3328 = vmul.f32 %v3315, %v995
        %v3329 = vmul.f32 %v3315, %v997
        %v3330 = vmul.f32 %v3315, %v999
        %v3331 = vmul.f32 %v3315, %v1001
        %v3332 = vmul.f32 %v3315, %v1003
        %v3333 = vmul.f32 %v3315, %v1005
        %v3334 = vmul.f32 %v3315, %v1007
        %v3335 = vmul.f32 %v3315, %v1009
        %v3336 = vmul.f32 %v3315, %v1011
        %v3337 = vmul.f32 %v3315, %v1013
        %v3338 = vmul.f32 %v3315, %v1015
        %v3339 = vmul.f32 %v3315, %v1017
        %v3340 = vmul.f32 %v3315, %v1019
        %v3341 = vmul.f32 %v3315, %v1021
        %v3342 = vmul.f32 %v3315, %v1023
        %v3343 = vmul.f32 %v3315, %v1025
        %v3344 = vmul.f32 %v3315, %v1027
        %v3345 = vmul.f32 %v3315, %v1029
        %v3346 = vmul.f32 %v3315, %v1031
        %v3347 = vmul.f32 %v3315, %v1033
        %v3348 = vadd.f32 %v3279, %v3316
        %v3349 = vadd.f32 %v3280, %v3317
        %v3350 = vadd.f32 %v3281, %v3318
        %v3351 = vadd.f32 %v3282, %v3319
        %v3352 = vadd.f32 %v3283, %v3320
        %v3353 = vadd.f32 %v3284, %v3321
        %v3354 = vadd.f32 %v3285, %v3322
        %v3355 = vadd.f32 %v3286, %v3323
        %v3356 = vadd.f32 %v3287, %v3324
        %v3357 = vadd.f32 %v3288, %v3325
        %v3358 = vadd.f32 %v3289, %v3326
        %v3359 = vadd.f32 %v3290, %v3327
        %v3360 = vadd.f32 %v3291, %v3328
        %v3361 = vadd.f32 %v3292, %v3329
        %v3362 = vadd.f32 %v3293, %v3330
        %v3363 = vadd.f32 %v3294, %v3331
        %v3364 = vadd.f32 %v3295, %v3332
        %v3365 = vadd.f32 %v3296, %v3333
        %v3366 = vadd.f32 %v3297, %v3334
        %v3367 = vadd.f32 %v3298, %v3335
        %v3368 = vadd.f32 %v3299, %v3336
        %v3369 = vadd.f32 %v3300, %v3337
        %v3370 = vadd.f32 %v3301, %v3338
        %v3371 = vadd.f32 %v3302, %v3339
        %v3372 = vadd.f32 %v3303, %v3340
        %v3373 = vadd.f32 %v3304, %v3341
        %v3374 = vadd.f32 %v3305, %v3342
        %v3375 = vadd.f32 %v3306, %v3343
        %v3376 = vadd.f32 %v3307, %v3344
        %v3377 = vadd.f32 %v3308, %v3345
        %v3378 = vadd.f32 %v3309, %v3346
        %v3379 = vadd.f32 %v3310, %v3347
        %v3380 = vadd.f32 %v2865, %v3348
        %v3381 = vadd.f32 %v2866, %v3349
        %v3382 = vadd.f32 %v2867, %v3350
        %v3383 = vadd.f32 %v2868, %v3351
        %v3384 = vadd.f32 %v2869, %v3352
        %v3385 = vadd.f32 %v2870, %v3353
        %v3386 = vadd.f32 %v2871, %v3354
        %v3387 = vadd.f32 %v2872, %v3355
        %v3388 = vadd.f32 %v2873, %v3356
        %v3389 = vadd.f32 %v2874, %v3357
        %v3390 = vadd.f32 %v2875, %v3358
        %v3391 = vadd.f32 %v2876, %v3359
        %v3392 = vadd.f32 %v2877, %v3360
        %v3393 = vadd.f32 %v2878, %v3361
        %v3394 = vadd.f32 %v2879, %v3362
        %v3395 = vadd.f32 %v2880, %v3363
        %v3396 = vadd.f32 %v2881, %v3364
        %v3397 = vadd.f32 %v2882, %v3365
        %v3398 = vadd.f32 %v2883, %v3366
        %v3399 = vadd.f32 %v2884, %v3367
        %v3400 = vadd.f32 %v2885, %v3368
        %v3401 = vadd.f32 %v2886, %v3369
        %v3402 = vadd.f32 %v2887, %v3370
        %v3403 = vadd.f32 %v2888, %v3371
        %v3404 = vadd.f32 %v2889, %v3372
        %v3405 = vadd.f32 %v2890, %v3373
        %v3406 = vadd.f32 %v2891, %v3374
        %v3407 = vadd.f32 %v2892, %v3375
        %v3408 = vadd.f32 %v2893, %v3376
        %v3409 = vadd.f32 %v2894, %v3377
        %v3410 = vadd.f32 %v2895, %v3378
        %v3411 = vadd.f32 %v2896, %v3379
        %v3412 = vld [vmem:[%s192 + $0x5] sm:$0x1]
        %v3413 = vlaneseq
        %v3414 = vshrl.u32 %v3413, 7
        %v3415 = vsub.s32 0, %v3414
        %v3416 = vrot.slane %v3412, %v3415
        %v3417 = vmul.f32 %v3416, %v261
        %v3418 = vmul.f32 %v3416, %v263
        %v3419 = vmul.f32 %v3416, %v265
        %v3420 = vmul.f32 %v3416, %v267
        %v3421 = vmul.f32 %v3416, %v269
        %v3422 = vmul.f32 %v3416, %v271
        %v3423 = vmul.f32 %v3416, %v273
        %v3424 = vmul.f32 %v3416, %v275
        %v3425 = vmul.f32 %v3416, %v277
        %v3426 = vmul.f32 %v3416, %v279
        %v3427 = vmul.f32 %v3416, %v281
        %v3428 = vmul.f32 %v3416, %v283
        %v3429 = vmul.f32 %v3416, %v285
        %v3430 = vmul.f32 %v3416, %v287
        %v3431 = vmul.f32 %v3416, %v289
        %v3432 = vmul.f32 %v3416, %v291
        %v3433 = vmul.f32 %v3416, %v293
        %v3434 = vmul.f32 %v3416, %v295
        %v3435 = vmul.f32 %v3416, %v297
        %v3436 = vmul.f32 %v3416, %v299
        %v3437 = vmul.f32 %v3416, %v301
        %v3438 = vmul.f32 %v3416, %v303
        %v3439 = vmul.f32 %v3416, %v305
        %v3440 = vmul.f32 %v3416, %v307
        %v3441 = vmul.f32 %v3416, %v309
        %v3442 = vmul.f32 %v3416, %v311
        %v3443 = vmul.f32 %v3416, %v313
        %v3444 = vmul.f32 %v3416, %v315
        %v3445 = vmul.f32 %v3416, %v317
        %v3446 = vmul.f32 %v3416, %v319
        %v3447 = vmul.f32 %v3416, %v321
        %v3448 = vmul.f32 %v3416, %v323
        %v3449 = vadd.f32 %v3417, 0.0
        %v3450 = vadd.f32 %v3418, 0.0
        %v3451 = vadd.f32 %v3419, 0.0
        %v3452 = vadd.f32 %v3420, 0.0
        %v3453 = vadd.f32 %v3421, 0.0
        %v3454 = vadd.f32 %v3422, 0.0
        %v3455 = vadd.f32 %v3423, 0.0
        %v3456 = vadd.f32 %v3424, 0.0
        %v3457 = vadd.f32 %v3425, 0.0
        %v3458 = vadd.f32 %v3426, 0.0
        %v3459 = vadd.f32 %v3427, 0.0
        %v3460 = vadd.f32 %v3428, 0.0
        %v3461 = vadd.f32 %v3429, 0.0
        %v3462 = vadd.f32 %v3430, 0.0
        %v3463 = vadd.f32 %v3431, 0.0
        %v3464 = vadd.f32 %v3432, 0.0
        %v3465 = vadd.f32 %v3433, 0.0
        %v3466 = vadd.f32 %v3434, 0.0
        %v3467 = vadd.f32 %v3435, 0.0
        %v3468 = vadd.f32 %v3436, 0.0
        %v3469 = vadd.f32 %v3437, 0.0
        %v3470 = vadd.f32 %v3438, 0.0
        %v3471 = vadd.f32 %v3439, 0.0
        %v3472 = vadd.f32 %v3440, 0.0
        %v3473 = vadd.f32 %v3441, 0.0
        %v3474 = vadd.f32 %v3442, 0.0
        %v3475 = vadd.f32 %v3443, 0.0
        %v3476 = vadd.f32 %v3444, 0.0
        %v3477 = vadd.f32 %v3445, 0.0
        %v3478 = vadd.f32 %v3446, 0.0
        %v3479 = vadd.f32 %v3447, 0.0
        %v3480 = vadd.f32 %v3448, 0.0
        %v3481 = vld [vmem:[%s192 + $0xe] sm:$0x1]
        %v3482 = vlaneseq
        %v3483 = vshrl.u32 %v3482, 7
        %v3484 = vsub.s32 0, %v3483
        %v3485 = vrot.slane %v3481, %v3484
        %v3486 = vmul.f32 %v3485, %v390
        %v3487 = vmul.f32 %v3485, %v392
        %v3488 = vmul.f32 %v3485, %v394
        %v3489 = vmul.f32 %v3485, %v396
        %v3490 = vmul.f32 %v3485, %v398
        %v3491 = vmul.f32 %v3485, %v400
        %v3492 = vmul.f32 %v3485, %v402
        %v3493 = vmul.f32 %v3485, %v404
        %v3494 = vmul.f32 %v3485, %v406
        %v3495 = vmul.f32 %v3485, %v408
        %v3496 = vmul.f32 %v3485, %v410
        %v3497 = vmul.f32 %v3485, %v412
        %v3498 = vmul.f32 %v3485, %v414
        %v3499 = vmul.f32 %v3485, %v416
        %v3500 = vmul.f32 %v3485, %v418
        %v3501 = vmul.f32 %v3485, %v420
        %v3502 = vmul.f32 %v3485, %v422
        %v3503 = vmul.f32 %v3485, %v424
        %v3504 = vmul.f32 %v3485, %v426
        %v3505 = vmul.f32 %v3485, %v428
        %v3506 = vmul.f32 %v3485, %v430
        %v3507 = vmul.f32 %v3485, %v432
        %v3508 = vmul.f32 %v3485, %v434
        %v3509 = vmul.f32 %v3485, %v436
        %v3510 = vmul.f32 %v3485, %v438
        %v3511 = vmul.f32 %v3485, %v440
        %v3512 = vmul.f32 %v3485, %v442
        %v3513 = vmul.f32 %v3485, %v444
        %v3514 = vmul.f32 %v3485, %v446
        %v3515 = vmul.f32 %v3485, %v448
        %v3516 = vmul.f32 %v3485, %v450
        %v3517 = vmul.f32 %v3485, %v452
        %v3518 = vadd.f32 %v3449, %v3486
        %v3519 = vadd.f32 %v3450, %v3487
        %v3520 = vadd.f32 %v3451, %v3488
        %v3521 = vadd.f32 %v3452, %v3489
        %v3522 = vadd.f32 %v3453, %v3490
        %v3523 = vadd.f32 %v3454, %v3491
        %v3524 = vadd.f32 %v3455, %v3492
        %v3525 = vadd.f32 %v3456, %v3493
        %v3526 = vadd.f32 %v3457, %v3494
        %v3527 = vadd.f32 %v3458, %v3495
        %v3528 = vadd.f32 %v3459, %v3496
        %v3529 = vadd.f32 %v3460, %v3497
        %v3530 = vadd.f32 %v3461, %v3498
        %v3531 = vadd.f32 %v3462, %v3499
        %v3532 = vadd.f32 %v3463, %v3500
        %v3533 = vadd.f32 %v3464, %v3501
        %v3534 = vadd.f32 %v3465, %v3502
        %v3535 = vadd.f32 %v3466, %v3503
        %v3536 = vadd.f32 %v3467, %v3504
        %v3537 = vadd.f32 %v3468, %v3505
        %v3538 = vadd.f32 %v3469, %v3506
        %v3539 = vadd.f32 %v3470, %v3507
        %v3540 = vadd.f32 %v3471, %v3508
        %v3541 = vadd.f32 %v3472, %v3509
        %v3542 = vadd.f32 %v3473, %v3510
        %v3543 = vadd.f32 %v3474, %v3511
        %v3544 = vadd.f32 %v3475, %v3512
        %v3545 = vadd.f32 %v3476, %v3513
        %v3546 = vadd.f32 %v3477, %v3514
        %v3547 = vadd.f32 %v3478, %v3515
        %v3548 = vadd.f32 %v3479, %v3516
        %v3549 = vadd.f32 %v3480, %v3517
        %v3550 = vld [vmem:[%s192 + $0x17] sm:$0x1]
        %v3551 = vlaneseq
        %v3552 = vshrl.u32 %v3551, 7
        %v3553 = vsub.s32 0, %v3552
        %v3554 = vrot.slane %v3550, %v3553
        %v3555 = vmul.f32 %v3554, %v519
        %v3556 = vmul.f32 %v3554, %v521
        %v3557 = vmul.f32 %v3554, %v523
        %v3558 = vmul.f32 %v3554, %v525
        %v3559 = vmul.f32 %v3554, %v527
        %v3560 = vmul.f32 %v3554, %v529
        %v3561 = vmul.f32 %v3554, %v531
        %v3562 = vmul.f32 %v3554, %v533
        %v3563 = vmul.f32 %v3554, %v535
        %v3564 = vmul.f32 %v3554, %v537
        %v3565 = vmul.f32 %v3554, %v539
        %v3566 = vmul.f32 %v3554, %v541
        %v3567 = vmul.f32 %v3554, %v543
        %v3568 = vmul.f32 %v3554, %v545
        %v3569 = vmul.f32 %v3554, %v547
        %v3570 = vmul.f32 %v3554, %v549
        %v3571 = vmul.f32 %v3554, %v551
        %v3572 = vmul.f32 %v3554, %v553
        %v3573 = vmul.f32 %v3554, %v555
        %v3574 = vmul.f32 %v3554, %v557
        %v3575 = vmul.f32 %v3554, %v559
        %v3576 = vmul.f32 %v3554, %v561
        %v3577 = vmul.f32 %v3554, %v563
        %v3578 = vmul.f32 %v3554, %v565
        %v3579 = vmul.f32 %v3554, %v567
        %v3580 = vmul.f32 %v3554, %v569
        %v3581 = vmul.f32 %v3554, %v571
        %v3582 = vmul.f32 %v3554, %v573
        %v3583 = vmul.f32 %v3554, %v575
        %v3584 = vmul.f32 %v3554, %v577
        %v3585 = vmul.f32 %v3554, %v579
        %v3586 = vmul.f32 %v3554, %v581
        %v3587 = vadd.f32 %v3518, %v3555
        %v3588 = vadd.f32 %v3519, %v3556
        %v3589 = vadd.f32 %v3520, %v3557
        %v3590 = vadd.f32 %v3521, %v3558
        %v3591 = vadd.f32 %v3522, %v3559
        %v3592 = vadd.f32 %v3523, %v3560
        %v3593 = vadd.f32 %v3524, %v3561
        %v3594 = vadd.f32 %v3525, %v3562
        %v3595 = vadd.f32 %v3526, %v3563
        %v3596 = vadd.f32 %v3527, %v3564
        %v3597 = vadd.f32 %v3528, %v3565
        %v3598 = vadd.f32 %v3529, %v3566
        %v3599 = vadd.f32 %v3530, %v3567
        %v3600 = vadd.f32 %v3531, %v3568
        %v3601 = vadd.f32 %v3532, %v3569
        %v3602 = vadd.f32 %v3533, %v3570
        %v3603 = vadd.f32 %v3534, %v3571
        %v3604 = vadd.f32 %v3535, %v3572
        %v3605 = vadd.f32 %v3536, %v3573
        %v3606 = vadd.f32 %v3537, %v3574
        %v3607 = vadd.f32 %v3538, %v3575
        %v3608 = vadd.f32 %v3539, %v3576
        %v3609 = vadd.f32 %v3540, %v3577
        %v3610 = vadd.f32 %v3541, %v3578
        %v3611 = vadd.f32 %v3542, %v3579
        %v3612 = vadd.f32 %v3543, %v3580
        %v3613 = vadd.f32 %v3544, %v3581
        %v3614 = vadd.f32 %v3545, %v3582
        %v3615 = vadd.f32 %v3546, %v3583
        %v3616 = vadd.f32 %v3547, %v3584
        %v3617 = vadd.f32 %v3548, %v3585
        %v3618 = vadd.f32 %v3549, %v3586
        %v3619 = vld [vmem:[%s192 + $0x20] sm:$0x1]
        %v3620 = vlaneseq
        %v3621 = vshrl.u32 %v3620, 7
        %v3622 = vsub.s32 0, %v3621
        %v3623 = vrot.slane %v3619, %v3622
        %v3624 = vmul.f32 %v3623, %v218
        %v3625 = vmul.f32 %v3623, %v219
        %v3626 = vmul.f32 %v3623, %v220
        %v3627 = vmul.f32 %v3623, %v221
        %v3628 = vmul.f32 %v3623, %v222
        %v3629 = vmul.f32 %v3623, %v223
        %v3630 = vmul.f32 %v3623, %v224
        %v3631 = vmul.f32 %v3623, %v225
        %v3632 = vmul.f32 %v3623, %v226
        %v3633 = vmul.f32 %v3623, %v227
        %v3634 = vmul.f32 %v3623, %v228
        %v3635 = vmul.f32 %v3623, %v229
        %v3636 = vmul.f32 %v3623, %v230
        %v3637 = vmul.f32 %v3623, %v231
        %v3638 = vmul.f32 %v3623, %v232
        %v3639 = vmul.f32 %v3623, %v233
        %v3640 = vmul.f32 %v3623, %v234
        %v3641 = vmul.f32 %v3623, %v235
        %v3642 = vmul.f32 %v3623, %v236
        %v3643 = vmul.f32 %v3623, %v237
        %v3644 = vmul.f32 %v3623, %v238
        %v3645 = vmul.f32 %v3623, %v239
        %v3646 = vmul.f32 %v3623, %v240
        %v3647 = vmul.f32 %v3623, %v241
        %v3648 = vmul.f32 %v3623, %v242
        %v3649 = vmul.f32 %v3623, %v243
        %v3650 = vmul.f32 %v3623, %v244
        %v3651 = vmul.f32 %v3623, %v245
        %v3652 = vmul.f32 %v3623, %v246
        %v3653 = vmul.f32 %v3623, %v247
        %v3654 = vmul.f32 %v3623, %v248
        %v3655 = vmul.f32 %v3623, %v249
        %v3656 = vadd.f32 %v3587, %v3624
        %v3657 = vadd.f32 %v3588, %v3625
        %v3658 = vadd.f32 %v3589, %v3626
        %v3659 = vadd.f32 %v3590, %v3627
        %v3660 = vadd.f32 %v3591, %v3628
        %v3661 = vadd.f32 %v3592, %v3629
        %v3662 = vadd.f32 %v3593, %v3630
        %v3663 = vadd.f32 %v3594, %v3631
        %v3664 = vadd.f32 %v3595, %v3632
        %v3665 = vadd.f32 %v3596, %v3633
        %v3666 = vadd.f32 %v3597, %v3634
        %v3667 = vadd.f32 %v3598, %v3635
        %v3668 = vadd.f32 %v3599, %v3636
        %v3669 = vadd.f32 %v3600, %v3637
        %v3670 = vadd.f32 %v3601, %v3638
        %v3671 = vadd.f32 %v3602, %v3639
        %v3672 = vadd.f32 %v3603, %v3640
        %v3673 = vadd.f32 %v3604, %v3641
        %v3674 = vadd.f32 %v3605, %v3642
        %v3675 = vadd.f32 %v3606, %v3643
        %v3676 = vadd.f32 %v3607, %v3644
        %v3677 = vadd.f32 %v3608, %v3645
        %v3678 = vadd.f32 %v3609, %v3646
        %v3679 = vadd.f32 %v3610, %v3647
        %v3680 = vadd.f32 %v3611, %v3648
        %v3681 = vadd.f32 %v3612, %v3649
        %v3682 = vadd.f32 %v3613, %v3650
        %v3683 = vadd.f32 %v3614, %v3651
        %v3684 = vadd.f32 %v3615, %v3652
        %v3685 = vadd.f32 %v3616, %v3653
        %v3686 = vadd.f32 %v3617, %v3654
        %v3687 = vadd.f32 %v3618, %v3655
        %v3688 = vld [vmem:[%s192 + $0x29] sm:$0x1]
        %v3689 = vlaneseq
        %v3690 = vshrl.u32 %v3689, 7
        %v3691 = vsub.s32 0, %v3690
        %v3692 = vrot.slane %v3688, %v3691
        %v3693 = vmul.f32 %v3692, %v713
        %v3694 = vmul.f32 %v3692, %v715
        %v3695 = vmul.f32 %v3692, %v717
        %v3696 = vmul.f32 %v3692, %v719
        %v3697 = vmul.f32 %v3692, %v721
        %v3698 = vmul.f32 %v3692, %v723
        %v3699 = vmul.f32 %v3692, %v725
        %v3700 = vmul.f32 %v3692, %v727
        %v3701 = vmul.f32 %v3692, %v729
        %v3702 = vmul.f32 %v3692, %v731
        %v3703 = vmul.f32 %v3692, %v733
        %v3704 = vmul.f32 %v3692, %v735
        %v3705 = vmul.f32 %v3692, %v737
        %v3706 = vmul.f32 %v3692, %v739
        %v3707 = vmul.f32 %v3692, %v741
        %v3708 = vmul.f32 %v3692, %v743
        %v3709 = vmul.f32 %v3692, %v745
        %v3710 = vmul.f32 %v3692, %v747
        %v3711 = vmul.f32 %v3692, %v749
        %v3712 = vmul.f32 %v3692, %v751
        %v3713 = vmul.f32 %v3692, %v753
        %v3714 = vmul.f32 %v3692, %v755
        %v3715 = vmul.f32 %v3692, %v757
        %v3716 = vmul.f32 %v3692, %v759
        %v3717 = vmul.f32 %v3692, %v761
        %v3718 = vmul.f32 %v3692, %v763
        %v3719 = vmul.f32 %v3692, %v765
        %v3720 = vmul.f32 %v3692, %v767
        %v3721 = vmul.f32 %v3692, %v769
        %v3722 = vmul.f32 %v3692, %v771
        %v3723 = vmul.f32 %v3692, %v773
        %v3724 = vmul.f32 %v3692, %v775
        %v3725 = vadd.f32 %v3656, %v3693
        %v3726 = vadd.f32 %v3657, %v3694
        %v3727 = vadd.f32 %v3658, %v3695
        %v3728 = vadd.f32 %v3659, %v3696
        %v3729 = vadd.f32 %v3660, %v3697
        %v3730 = vadd.f32 %v3661, %v3698
        %v3731 = vadd.f32 %v3662, %v3699
        %v3732 = vadd.f32 %v3663, %v3700
        %v3733 = vadd.f32 %v3664, %v3701
        %v3734 = vadd.f32 %v3665, %v3702
        %v3735 = vadd.f32 %v3666, %v3703
        %v3736 = vadd.f32 %v3667, %v3704
        %v3737 = vadd.f32 %v3668, %v3705
        %v3738 = vadd.f32 %v3669, %v3706
        %v3739 = vadd.f32 %v3670, %v3707
        %v3740 = vadd.f32 %v3671, %v3708
        %v3741 = vadd.f32 %v3672, %v3709
        %v3742 = vadd.f32 %v3673, %v3710
        %v3743 = vadd.f32 %v3674, %v3711
        %v3744 = vadd.f32 %v3675, %v3712
        %v3745 = vadd.f32 %v3676, %v3713
        %v3746 = vadd.f32 %v3677, %v3714
        %v3747 = vadd.f32 %v3678, %v3715
        %v3748 = vadd.f32 %v3679, %v3716
        %v3749 = vadd.f32 %v3680, %v3717
        %v3750 = vadd.f32 %v3681, %v3718
        %v3751 = vadd.f32 %v3682, %v3719
        %v3752 = vadd.f32 %v3683, %v3720
        %v3753 = vadd.f32 %v3684, %v3721
        %v3754 = vadd.f32 %v3685, %v3722
        %v3755 = vadd.f32 %v3686, %v3723
        %v3756 = vadd.f32 %v3687, %v3724
        %v3757 = vld [vmem:[%s192 + $0x32] sm:$0x1]
        %v3758 = vlaneseq
        %v3759 = vshrl.u32 %v3758, 7
        %v3760 = vsub.s32 0, %v3759
        %v3761 = vrot.slane %v3757, %v3760
        %v3762 = vmul.f32 %v3761, %v842
        %v3763 = vmul.f32 %v3761, %v844
        %v3764 = vmul.f32 %v3761, %v846
        %v3765 = vmul.f32 %v3761, %v848
        %v3766 = vmul.f32 %v3761, %v850
        %v3767 = vmul.f32 %v3761, %v852
        %v3768 = vmul.f32 %v3761, %v854
        %v3769 = vmul.f32 %v3761, %v856
        %v3770 = vmul.f32 %v3761, %v858
        %v3771 = vmul.f32 %v3761, %v860
        %v3772 = vmul.f32 %v3761, %v862
        %v3773 = vmul.f32 %v3761, %v864
        %v3774 = vmul.f32 %v3761, %v866
        %v3775 = vmul.f32 %v3761, %v868
        %v3776 = vmul.f32 %v3761, %v870
        %v3777 = vmul.f32 %v3761, %v872
        %v3778 = vmul.f32 %v3761, %v874
        %v3779 = vmul.f32 %v3761, %v876
        %v3780 = vmul.f32 %v3761, %v878
        %v3781 = vmul.f32 %v3761, %v880
        %v3782 = vmul.f32 %v3761, %v882
        %v3783 = vmul.f32 %v3761, %v884
        %v3784 = vmul.f32 %v3761, %v886
        %v3785 = vmul.f32 %v3761, %v888
        %v3786 = vmul.f32 %v3761, %v890
        %v3787 = vmul.f32 %v3761, %v892
        %v3788 = vmul.f32 %v3761, %v894
        %v3789 = vmul.f32 %v3761, %v896
        %v3790 = vmul.f32 %v3761, %v898
        %v3791 = vmul.f32 %v3761, %v900
        %v3792 = vmul.f32 %v3761, %v902
        %v3793 = vmul.f32 %v3761, %v904
        %v3794 = vadd.f32 %v3725, %v3762
        %v3795 = vadd.f32 %v3726, %v3763
        %v3796 = vadd.f32 %v3727, %v3764
        %v3797 = vadd.f32 %v3728, %v3765
        %v3798 = vadd.f32 %v3729, %v3766
        %v3799 = vadd.f32 %v3730, %v3767
        %v3800 = vadd.f32 %v3731, %v3768
        %v3801 = vadd.f32 %v3732, %v3769
        %v3802 = vadd.f32 %v3733, %v3770
        %v3803 = vadd.f32 %v3734, %v3771
        %v3804 = vadd.f32 %v3735, %v3772
        %v3805 = vadd.f32 %v3736, %v3773
        %v3806 = vadd.f32 %v3737, %v3774
        %v3807 = vadd.f32 %v3738, %v3775
        %v3808 = vadd.f32 %v3739, %v3776
        %v3809 = vadd.f32 %v3740, %v3777
        %v3810 = vadd.f32 %v3741, %v3778
        %v3811 = vadd.f32 %v3742, %v3779
        %v3812 = vadd.f32 %v3743, %v3780
        %v3813 = vadd.f32 %v3744, %v3781
        %v3814 = vadd.f32 %v3745, %v3782
        %v3815 = vadd.f32 %v3746, %v3783
        %v3816 = vadd.f32 %v3747, %v3784
        %v3817 = vadd.f32 %v3748, %v3785
        %v3818 = vadd.f32 %v3749, %v3786
        %v3819 = vadd.f32 %v3750, %v3787
        %v3820 = vadd.f32 %v3751, %v3788
        %v3821 = vadd.f32 %v3752, %v3789
        %v3822 = vadd.f32 %v3753, %v3790
        %v3823 = vadd.f32 %v3754, %v3791
        %v3824 = vadd.f32 %v3755, %v3792
        %v3825 = vadd.f32 %v3756, %v3793
        %v3826 = vld [vmem:[%s192 + $0x3b] sm:$0x1]
        %v3827 = vlaneseq
        %v3828 = vshrl.u32 %v3827, 7
        %v3829 = vsub.s32 0, %v3828
        %v3830 = vrot.slane %v3826, %v3829
        %v3831 = vmul.f32 %v3830, %v971
        %v3832 = vmul.f32 %v3830, %v973
        %v3833 = vmul.f32 %v3830, %v975
        %v3834 = vmul.f32 %v3830, %v977
        %v3835 = vmul.f32 %v3830, %v979
        %v3836 = vmul.f32 %v3830, %v981
        %v3837 = vmul.f32 %v3830, %v983
        %v3838 = vmul.f32 %v3830, %v985
        %v3839 = vmul.f32 %v3830, %v987
        %v3840 = vmul.f32 %v3830, %v989
        %v3841 = vmul.f32 %v3830, %v991
        %v3842 = vmul.f32 %v3830, %v993
        %v3843 = vmul.f32 %v3830, %v995
        %v3844 = vmul.f32 %v3830, %v997
        %v3845 = vmul.f32 %v3830, %v999
        %v3846 = vmul.f32 %v3830, %v1001
        %v3847 = vmul.f32 %v3830, %v1003
        %v3848 = vmul.f32 %v3830, %v1005
        %v3849 = vmul.f32 %v3830, %v1007
        %v3850 = vmul.f32 %v3830, %v1009
        %v3851 = vmul.f32 %v3830, %v1011
        %v3852 = vmul.f32 %v3830, %v1013
        %v3853 = vmul.f32 %v3830, %v1015
        %v3854 = vmul.f32 %v3830, %v1017
        %v3855 = vmul.f32 %v3830, %v1019
        %v3856 = vmul.f32 %v3830, %v1021
        %v3857 = vmul.f32 %v3830, %v1023
        %v3858 = vmul.f32 %v3830, %v1025
        %v3859 = vmul.f32 %v3830, %v1027
        %v3860 = vmul.f32 %v3830, %v1029
        %v3861 = vmul.f32 %v3830, %v1031
        %v3862 = vmul.f32 %v3830, %v1033
        %v3863 = vadd.f32 %v3794, %v3831
        %v3864 = vadd.f32 %v3795, %v3832
        %v3865 = vadd.f32 %v3796, %v3833
        %v3866 = vadd.f32 %v3797, %v3834
        %v3867 = vadd.f32 %v3798, %v3835
        %v3868 = vadd.f32 %v3799, %v3836
        %v3869 = vadd.f32 %v3800, %v3837
        %v3870 = vadd.f32 %v3801, %v3838
        %v3871 = vadd.f32 %v3802, %v3839
        %v3872 = vadd.f32 %v3803, %v3840
        %v3873 = vadd.f32 %v3804, %v3841
        %v3874 = vadd.f32 %v3805, %v3842
        %v3875 = vadd.f32 %v3806, %v3843
        %v3876 = vadd.f32 %v3807, %v3844
        %v3877 = vadd.f32 %v3808, %v3845
        %v3878 = vadd.f32 %v3809, %v3846
        %v3879 = vadd.f32 %v3810, %v3847
        %v3880 = vadd.f32 %v3811, %v3848
        %v3881 = vadd.f32 %v3812, %v3849
        %v3882 = vadd.f32 %v3813, %v3850
        %v3883 = vadd.f32 %v3814, %v3851
        %v3884 = vadd.f32 %v3815, %v3852
        %v3885 = vadd.f32 %v3816, %v3853
        %v3886 = vadd.f32 %v3817, %v3854
        %v3887 = vadd.f32 %v3818, %v3855
        %v3888 = vadd.f32 %v3819, %v3856
        %v3889 = vadd.f32 %v3820, %v3857
        %v3890 = vadd.f32 %v3821, %v3858
        %v3891 = vadd.f32 %v3822, %v3859
        %v3892 = vadd.f32 %v3823, %v3860
        %v3893 = vadd.f32 %v3824, %v3861
        %v3894 = vadd.f32 %v3825, %v3862
        %v3895 = vrot.slane %v3863, 1
        %v3896 = vrot.slane %v3865, 1
        %v3897 = vrot.slane %v3867, 1
        %v3898 = vrot.slane %v3869, 1
        %v3899 = vrot.slane %v3871, 1
        %v3900 = vrot.slane %v3873, 1
        %v3901 = vrot.slane %v3875, 1
        %v3902 = vrot.slane %v3877, 1
        %v3903 = vrot.slane %v3879, 1
        %v3904 = vrot.slane %v3881, 1
        %v3905 = vrot.slane %v3883, 1
        %v3906 = vrot.slane %v3885, 1
        %v3907 = vrot.slane %v3887, 1
        %v3908 = vrot.slane %v3889, 1
        %v3909 = vrot.slane %v3891, 1
        %v3910 = vrot.slane %v3893, 1
        %v3911 = vrot.slane %v3864, 1
        %v3912 = vrot.slane %v3866, 1
        %v3913 = vrot.slane %v3868, 1
        %v3914 = vrot.slane %v3870, 1
        %v3915 = vrot.slane %v3872, 1
        %v3916 = vrot.slane %v3874, 1
        %v3917 = vrot.slane %v3876, 1
        %v3918 = vrot.slane %v3878, 1
        %v3919 = vrot.slane %v3880, 1
        %v3920 = vrot.slane %v3882, 1
        %v3921 = vrot.slane %v3884, 1
        %v3922 = vrot.slane %v3886, 1
        %v3923 = vrot.slane %v3888, 1
        %v3924 = vrot.slane %v3890, 1
        %v3925 = vrot.slane %v3892, 1
        %v3926 = vrot.slane %v3894, 1
        %v3927 = vsel %vm2192, %v3895, %v3911
        %v3928 = vsel %vm2192, %v3896, %v3912
        %v3929 = vsel %vm2192, %v3897, %v3913
        %v3930 = vsel %vm2192, %v3898, %v3914
        %v3931 = vsel %vm2192, %v3899, %v3915
        %v3932 = vsel %vm2192, %v3900, %v3916
        %v3933 = vsel %vm2192, %v3901, %v3917
        %v3934 = vsel %vm2192, %v3902, %v3918
        %v3935 = vsel %vm2192, %v3903, %v3919
        %v3936 = vsel %vm2192, %v3904, %v3920
        %v3937 = vsel %vm2192, %v3905, %v3921
        %v3938 = vsel %vm2192, %v3906, %v3922
        %v3939 = vsel %vm2192, %v3907, %v3923
        %v3940 = vsel %vm2192, %v3908, %v3924
        %v3941 = vsel %vm2192, %v3909, %v3925
        %v3942 = vsel %vm2192, %v3910, %v3926
        %v3943 = vsel %vm2192, %v3911, %v3895
        %v3944 = vsel %vm2192, %v3912, %v3896
        %v3945 = vsel %vm2192, %v3913, %v3897
        %v3946 = vsel %vm2192, %v3914, %v3898
        %v3947 = vsel %vm2192, %v3915, %v3899
        %v3948 = vsel %vm2192, %v3916, %v3900
        %v3949 = vsel %vm2192, %v3917, %v3901
        %v3950 = vsel %vm2192, %v3918, %v3902
        %v3951 = vsel %vm2192, %v3919, %v3903
        %v3952 = vsel %vm2192, %v3920, %v3904
        %v3953 = vsel %vm2192, %v3921, %v3905
        %v3954 = vsel %vm2192, %v3922, %v3906
        %v3955 = vsel %vm2192, %v3923, %v3907
        %v3956 = vsel %vm2192, %v3924, %v3908
        %v3957 = vsel %vm2192, %v3925, %v3909
        %v3958 = vsel %vm2192, %v3926, %v3910
        %v3959 = vsel %vm2223, 0.0, %v3927
        %v3960 = vsel %vm2224, 0.0, %v3943
        %v3961 = vsel %vm2223, 0.0, %v3928
        %v3962 = vsel %vm2224, 0.0, %v3944
        %v3963 = vsel %vm2223, 0.0, %v3929
        %v3964 = vsel %vm2224, 0.0, %v3945
        %v3965 = vsel %vm2223, 0.0, %v3930
        %v3966 = vsel %vm2224, 0.0, %v3946
        %v3967 = vsel %vm2223, 0.0, %v3931
        %v3968 = vsel %vm2224, 0.0, %v3947
        %v3969 = vsel %vm2223, 0.0, %v3932
        %v3970 = vsel %vm2224, 0.0, %v3948
        %v3971 = vsel %vm2223, 0.0, %v3933
        %v3972 = vsel %vm2224, 0.0, %v3949
        %v3973 = vsel %vm2223, 0.0, %v3934
        %v3974 = vsel %vm2224, 0.0, %v3950
        %v3975 = vsel %vm2223, 0.0, %v3935
        %v3976 = vsel %vm2224, 0.0, %v3951
        %v3977 = vsel %vm2223, 0.0, %v3936
        %v3978 = vsel %vm2224, 0.0, %v3952
        %v3979 = vsel %vm2223, 0.0, %v3937
        %v3980 = vsel %vm2224, 0.0, %v3953
        %v3981 = vsel %vm2223, 0.0, %v3938
        %v3982 = vsel %vm2224, 0.0, %v3954
        %v3983 = vsel %vm2223, 0.0, %v3939
        %v3984 = vsel %vm2224, 0.0, %v3955
        %v3985 = vsel %vm2223, 0.0, %v3940
        %v3986 = vsel %vm2224, 0.0, %v3956
        %v3987 = vsel %vm2223, 0.0, %v3941
        %v3988 = vsel %vm2224, 0.0, %v3957
        %v3989 = vsel %vm2223, 0.0, %v3942
        %v3990 = vsel %vm2224, 0.0, %v3958
        %v3991 = vadd.f32 %v3380, %v3959
        %v3992 = vadd.f32 %v3381, %v3960
        %v3993 = vadd.f32 %v3382, %v3961
        %v3994 = vadd.f32 %v3383, %v3962
        %v3995 = vadd.f32 %v3384, %v3963
        %v3996 = vadd.f32 %v3385, %v3964
        %v3997 = vadd.f32 %v3386, %v3965
        %v3998 = vadd.f32 %v3387, %v3966
        %v3999 = vadd.f32 %v3388, %v3967
        %v4000 = vadd.f32 %v3389, %v3968
        %v4001 = vadd.f32 %v3390, %v3969
        %v4002 = vadd.f32 %v3391, %v3970
        %v4003 = vadd.f32 %v3392, %v3971
        %v4004 = vadd.f32 %v3393, %v3972
        %v4005 = vadd.f32 %v3394, %v3973
        %v4006 = vadd.f32 %v3395, %v3974
        %v4007 = vadd.f32 %v3396, %v3975
        %v4008 = vadd.f32 %v3397, %v3976
        %v4009 = vadd.f32 %v3398, %v3977
        %v4010 = vadd.f32 %v3399, %v3978
        %v4011 = vadd.f32 %v3400, %v3979
        %v4012 = vadd.f32 %v3401, %v3980
        %v4013 = vadd.f32 %v3402, %v3981
        %v4014 = vadd.f32 %v3403, %v3982
        %v4015 = vadd.f32 %v3404, %v3983
        %v4016 = vadd.f32 %v3405, %v3984
        %v4017 = vadd.f32 %v3406, %v3985
        %v4018 = vadd.f32 %v3407, %v3986
        %v4019 = vadd.f32 %v3408, %v3987
        %v4020 = vadd.f32 %v3409, %v3988
        %v4021 = vadd.f32 %v3410, %v3989
        %v4022 = vadd.f32 %v3411, %v3990
        %v4023 = vld [vmem:[%s192 + $0x6] sm:$0x1]
        %v4024 = vlaneseq
        %v4025 = vshrl.u32 %v4024, 7
        %v4026 = vsub.s32 0, %v4025
        %v4027 = vrot.slane %v4023, %v4026
        %v4028 = vmul.f32 %v4027, %v265
        %v4029 = vmul.f32 %v4027, %v267
        %v4030 = vmul.f32 %v4027, %v269
        %v4031 = vmul.f32 %v4027, %v271
        %v4032 = vmul.f32 %v4027, %v273
        %v4033 = vmul.f32 %v4027, %v275
        %v4034 = vmul.f32 %v4027, %v277
        %v4035 = vmul.f32 %v4027, %v279
        %v4036 = vmul.f32 %v4027, %v281
        %v4037 = vmul.f32 %v4027, %v283
        %v4038 = vmul.f32 %v4027, %v285
        %v4039 = vmul.f32 %v4027, %v287
        %v4040 = vmul.f32 %v4027, %v289
        %v4041 = vmul.f32 %v4027, %v291
        %v4042 = vmul.f32 %v4027, %v293
        %v4043 = vmul.f32 %v4027, %v295
        %v4044 = vmul.f32 %v4027, %v297
        %v4045 = vmul.f32 %v4027, %v299
        %v4046 = vmul.f32 %v4027, %v301
        %v4047 = vmul.f32 %v4027, %v303
        %v4048 = vmul.f32 %v4027, %v305
        %v4049 = vmul.f32 %v4027, %v307
        %v4050 = vmul.f32 %v4027, %v309
        %v4051 = vmul.f32 %v4027, %v311
        %v4052 = vmul.f32 %v4027, %v313
        %v4053 = vmul.f32 %v4027, %v315
        %v4054 = vmul.f32 %v4027, %v317
        %v4055 = vmul.f32 %v4027, %v319
        %v4056 = vmul.f32 %v4027, %v321
        %v4057 = vmul.f32 %v4027, %v323
        %v4058 = vadd.f32 %v4028, 0.0
        %v4059 = vadd.f32 %v4029, 0.0
        %v4060 = vadd.f32 %v4030, 0.0
        %v4061 = vadd.f32 %v4031, 0.0
        %v4062 = vadd.f32 %v4032, 0.0
        %v4063 = vadd.f32 %v4033, 0.0
        %v4064 = vadd.f32 %v4034, 0.0
        %v4065 = vadd.f32 %v4035, 0.0
        %v4066 = vadd.f32 %v4036, 0.0
        %v4067 = vadd.f32 %v4037, 0.0
        %v4068 = vadd.f32 %v4038, 0.0
        %v4069 = vadd.f32 %v4039, 0.0
        %v4070 = vadd.f32 %v4040, 0.0
        %v4071 = vadd.f32 %v4041, 0.0
        %v4072 = vadd.f32 %v4042, 0.0
        %v4073 = vadd.f32 %v4043, 0.0
        %v4074 = vadd.f32 %v4044, 0.0
        %v4075 = vadd.f32 %v4045, 0.0
        %v4076 = vadd.f32 %v4046, 0.0
        %v4077 = vadd.f32 %v4047, 0.0
        %v4078 = vadd.f32 %v4048, 0.0
        %v4079 = vadd.f32 %v4049, 0.0
        %v4080 = vadd.f32 %v4050, 0.0
        %v4081 = vadd.f32 %v4051, 0.0
        %v4082 = vadd.f32 %v4052, 0.0
        %v4083 = vadd.f32 %v4053, 0.0
        %v4084 = vadd.f32 %v4054, 0.0
        %v4085 = vadd.f32 %v4055, 0.0
        %v4086 = vadd.f32 %v4056, 0.0
        %v4087 = vadd.f32 %v4057, 0.0
        %v4088 = vld [vmem:[%s192 + $0xf] sm:$0x1]
        %v4089 = vlaneseq
        %v4090 = vshrl.u32 %v4089, 7
        %v4091 = vsub.s32 0, %v4090
        %v4092 = vrot.slane %v4088, %v4091
        %v4093 = vmul.f32 %v4092, %v394
        %v4094 = vmul.f32 %v4092, %v396
        %v4095 = vmul.f32 %v4092, %v398
        %v4096 = vmul.f32 %v4092, %v400
        %v4097 = vmul.f32 %v4092, %v402
        %v4098 = vmul.f32 %v4092, %v404
        %v4099 = vmul.f32 %v4092, %v406
        %v4100 = vmul.f32 %v4092, %v408
        %v4101 = vmul.f32 %v4092, %v410
        %v4102 = vmul.f32 %v4092, %v412
        %v4103 = vmul.f32 %v4092, %v414
        %v4104 = vmul.f32 %v4092, %v416
        %v4105 = vmul.f32 %v4092, %v418
        %v4106 = vmul.f32 %v4092, %v420
        %v4107 = vmul.f32 %v4092, %v422
        %v4108 = vmul.f32 %v4092, %v424
        %v4109 = vmul.f32 %v4092, %v426
        %v4110 = vmul.f32 %v4092, %v428
        %v4111 = vmul.f32 %v4092, %v430
        %v4112 = vmul.f32 %v4092, %v432
        %v4113 = vmul.f32 %v4092, %v434
        %v4114 = vmul.f32 %v4092, %v436
        %v4115 = vmul.f32 %v4092, %v438
        %v4116 = vmul.f32 %v4092, %v440
        %v4117 = vmul.f32 %v4092, %v442
        %v4118 = vmul.f32 %v4092, %v444
        %v4119 = vmul.f32 %v4092, %v446
        %v4120 = vmul.f32 %v4092, %v448
        %v4121 = vmul.f32 %v4092, %v450
        %v4122 = vmul.f32 %v4092, %v452
        %v4123 = vadd.f32 %v4058, %v4093
        %v4124 = vadd.f32 %v4059, %v4094
        %v4125 = vadd.f32 %v4060, %v4095
        %v4126 = vadd.f32 %v4061, %v4096
        %v4127 = vadd.f32 %v4062, %v4097
        %v4128 = vadd.f32 %v4063, %v4098
        %v4129 = vadd.f32 %v4064, %v4099
        %v4130 = vadd.f32 %v4065, %v4100
        %v4131 = vadd.f32 %v4066, %v4101
        %v4132 = vadd.f32 %v4067, %v4102
        %v4133 = vadd.f32 %v4068, %v4103
        %v4134 = vadd.f32 %v4069, %v4104
        %v4135 = vadd.f32 %v4070, %v4105
        %v4136 = vadd.f32 %v4071, %v4106
        %v4137 = vadd.f32 %v4072, %v4107
        %v4138 = vadd.f32 %v4073, %v4108
        %v4139 = vadd.f32 %v4074, %v4109
        %v4140 = vadd.f32 %v4075, %v4110
        %v4141 = vadd.f32 %v4076, %v4111
        %v4142 = vadd.f32 %v4077, %v4112
        %v4143 = vadd.f32 %v4078, %v4113
        %v4144 = vadd.f32 %v4079, %v4114
        %v4145 = vadd.f32 %v4080, %v4115
        %v4146 = vadd.f32 %v4081, %v4116
        %v4147 = vadd.f32 %v4082, %v4117
        %v4148 = vadd.f32 %v4083, %v4118
        %v4149 = vadd.f32 %v4084, %v4119
        %v4150 = vadd.f32 %v4085, %v4120
        %v4151 = vadd.f32 %v4086, %v4121
        %v4152 = vadd.f32 %v4087, %v4122
        %v4153 = vld [vmem:[%s192 + $0x18] sm:$0x1]
        %v4154 = vlaneseq
        %v4155 = vshrl.u32 %v4154, 7
        %v4156 = vsub.s32 0, %v4155
        %v4157 = vrot.slane %v4153, %v4156
        %v4158 = vmul.f32 %v4157, %v523
        %v4159 = vmul.f32 %v4157, %v525
        %v4160 = vmul.f32 %v4157, %v527
        %v4161 = vmul.f32 %v4157, %v529
        %v4162 = vmul.f32 %v4157, %v531
        %v4163 = vmul.f32 %v4157, %v533
        %v4164 = vmul.f32 %v4157, %v535
        %v4165 = vmul.f32 %v4157, %v537
        %v4166 = vmul.f32 %v4157, %v539
        %v4167 = vmul.f32 %v4157, %v541
        %v4168 = vmul.f32 %v4157, %v543
        %v4169 = vmul.f32 %v4157, %v545
        %v4170 = vmul.f32 %v4157, %v547
        %v4171 = vmul.f32 %v4157, %v549
        %v4172 = vmul.f32 %v4157, %v551
        %v4173 = vmul.f32 %v4157, %v553
        %v4174 = vmul.f32 %v4157, %v555
        %v4175 = vmul.f32 %v4157, %v557
        %v4176 = vmul.f32 %v4157, %v559
        %v4177 = vmul.f32 %v4157, %v561
        %v4178 = vmul.f32 %v4157, %v563
        %v4179 = vmul.f32 %v4157, %v565
        %v4180 = vmul.f32 %v4157, %v567
        %v4181 = vmul.f32 %v4157, %v569
        %v4182 = vmul.f32 %v4157, %v571
        %v4183 = vmul.f32 %v4157, %v573
        %v4184 = vmul.f32 %v4157, %v575
        %v4185 = vmul.f32 %v4157, %v577
        %v4186 = vmul.f32 %v4157, %v579
        %v4187 = vmul.f32 %v4157, %v581
        %v4188 = vadd.f32 %v4123, %v4158
        %v4189 = vadd.f32 %v4124, %v4159
        %v4190 = vadd.f32 %v4125, %v4160
        %v4191 = vadd.f32 %v4126, %v4161
        %v4192 = vadd.f32 %v4127, %v4162
        %v4193 = vadd.f32 %v4128, %v4163
        %v4194 = vadd.f32 %v4129, %v4164
        %v4195 = vadd.f32 %v4130, %v4165
        %v4196 = vadd.f32 %v4131, %v4166
        %v4197 = vadd.f32 %v4132, %v4167
        %v4198 = vadd.f32 %v4133, %v4168
        %v4199 = vadd.f32 %v4134, %v4169
        %v4200 = vadd.f32 %v4135, %v4170
        %v4201 = vadd.f32 %v4136, %v4171
        %v4202 = vadd.f32 %v4137, %v4172
        %v4203 = vadd.f32 %v4138, %v4173
        %v4204 = vadd.f32 %v4139, %v4174
        %v4205 = vadd.f32 %v4140, %v4175
        %v4206 = vadd.f32 %v4141, %v4176
        %v4207 = vadd.f32 %v4142, %v4177
        %v4208 = vadd.f32 %v4143, %v4178
        %v4209 = vadd.f32 %v4144, %v4179
        %v4210 = vadd.f32 %v4145, %v4180
        %v4211 = vadd.f32 %v4146, %v4181
        %v4212 = vadd.f32 %v4147, %v4182
        %v4213 = vadd.f32 %v4148, %v4183
        %v4214 = vadd.f32 %v4149, %v4184
        %v4215 = vadd.f32 %v4150, %v4185
        %v4216 = vadd.f32 %v4151, %v4186
        %v4217 = vadd.f32 %v4152, %v4187
        %v4218 = vld [vmem:[%s192 + $0x21] sm:$0x1]
        %v4219 = vlaneseq
        %v4220 = vshrl.u32 %v4219, 7
        %v4221 = vsub.s32 0, %v4220
        %v4222 = vrot.slane %v4218, %v4221
        %v4223 = vmul.f32 %v4222, %v220
        %v4224 = vmul.f32 %v4222, %v221
        %v4225 = vmul.f32 %v4222, %v222
        %v4226 = vmul.f32 %v4222, %v223
        %v4227 = vmul.f32 %v4222, %v224
        %v4228 = vmul.f32 %v4222, %v225
        %v4229 = vmul.f32 %v4222, %v226
        %v4230 = vmul.f32 %v4222, %v227
        %v4231 = vmul.f32 %v4222, %v228
        %v4232 = vmul.f32 %v4222, %v229
        %v4233 = vmul.f32 %v4222, %v230
        %v4234 = vmul.f32 %v4222, %v231
        %v4235 = vmul.f32 %v4222, %v232
        %v4236 = vmul.f32 %v4222, %v233
        %v4237 = vmul.f32 %v4222, %v234
        %v4238 = vmul.f32 %v4222, %v235
        %v4239 = vmul.f32 %v4222, %v236
        %v4240 = vmul.f32 %v4222, %v237
        %v4241 = vmul.f32 %v4222, %v238
        %v4242 = vmul.f32 %v4222, %v239
        %v4243 = vmul.f32 %v4222, %v240
        %v4244 = vmul.f32 %v4222, %v241
        %v4245 = vmul.f32 %v4222, %v242
        %v4246 = vmul.f32 %v4222, %v243
        %v4247 = vmul.f32 %v4222, %v244
        %v4248 = vmul.f32 %v4222, %v245
        %v4249 = vmul.f32 %v4222, %v246
        %v4250 = vmul.f32 %v4222, %v247
        %v4251 = vmul.f32 %v4222, %v248
        %v4252 = vmul.f32 %v4222, %v249
        %v4253 = vadd.f32 %v4188, %v4223
        %v4254 = vadd.f32 %v4189, %v4224
        %v4255 = vadd.f32 %v4190, %v4225
        %v4256 = vadd.f32 %v4191, %v4226
        %v4257 = vadd.f32 %v4192, %v4227
        %v4258 = vadd.f32 %v4193, %v4228
        %v4259 = vadd.f32 %v4194, %v4229
        %v4260 = vadd.f32 %v4195, %v4230
        %v4261 = vadd.f32 %v4196, %v4231
        %v4262 = vadd.f32 %v4197, %v4232
        %v4263 = vadd.f32 %v4198, %v4233
        %v4264 = vadd.f32 %v4199, %v4234
        %v4265 = vadd.f32 %v4200, %v4235
        %v4266 = vadd.f32 %v4201, %v4236
        %v4267 = vadd.f32 %v4202, %v4237
        %v4268 = vadd.f32 %v4203, %v4238
        %v4269 = vadd.f32 %v4204, %v4239
        %v4270 = vadd.f32 %v4205, %v4240
        %v4271 = vadd.f32 %v4206, %v4241
        %v4272 = vadd.f32 %v4207, %v4242
        %v4273 = vadd.f32 %v4208, %v4243
        %v4274 = vadd.f32 %v4209, %v4244
        %v4275 = vadd.f32 %v4210, %v4245
        %v4276 = vadd.f32 %v4211, %v4246
        %v4277 = vadd.f32 %v4212, %v4247
        %v4278 = vadd.f32 %v4213, %v4248
        %v4279 = vadd.f32 %v4214, %v4249
        %v4280 = vadd.f32 %v4215, %v4250
        %v4281 = vadd.f32 %v4216, %v4251
        %v4282 = vadd.f32 %v4217, %v4252
        %v4283 = vld [vmem:[%s192 + $0x2a] sm:$0x1]
        %v4284 = vlaneseq
        %v4285 = vshrl.u32 %v4284, 7
        %v4286 = vsub.s32 0, %v4285
        %v4287 = vrot.slane %v4283, %v4286
        %v4288 = vmul.f32 %v4287, %v717
        %v4289 = vmul.f32 %v4287, %v719
        %v4290 = vmul.f32 %v4287, %v721
        %v4291 = vmul.f32 %v4287, %v723
        %v4292 = vmul.f32 %v4287, %v725
        %v4293 = vmul.f32 %v4287, %v727
        %v4294 = vmul.f32 %v4287, %v729
        %v4295 = vmul.f32 %v4287, %v731
        %v4296 = vmul.f32 %v4287, %v733
        %v4297 = vmul.f32 %v4287, %v735
        %v4298 = vmul.f32 %v4287, %v737
        %v4299 = vmul.f32 %v4287, %v739
        %v4300 = vmul.f32 %v4287, %v741
        %v4301 = vmul.f32 %v4287, %v743
        %v4302 = vmul.f32 %v4287, %v745
        %v4303 = vmul.f32 %v4287, %v747
        %v4304 = vmul.f32 %v4287, %v749
        %v4305 = vmul.f32 %v4287, %v751
        %v4306 = vmul.f32 %v4287, %v753
        %v4307 = vmul.f32 %v4287, %v755
        %v4308 = vmul.f32 %v4287, %v757
        %v4309 = vmul.f32 %v4287, %v759
        %v4310 = vmul.f32 %v4287, %v761
        %v4311 = vmul.f32 %v4287, %v763
        %v4312 = vmul.f32 %v4287, %v765
        %v4313 = vmul.f32 %v4287, %v767
        %v4314 = vmul.f32 %v4287, %v769
        %v4315 = vmul.f32 %v4287, %v771
        %v4316 = vmul.f32 %v4287, %v773
        %v4317 = vmul.f32 %v4287, %v775
        %v4318 = vadd.f32 %v4253, %v4288
        %v4319 = vadd.f32 %v4254, %v4289
        %v4320 = vadd.f32 %v4255, %v4290
        %v4321 = vadd.f32 %v4256, %v4291
        %v4322 = vadd.f32 %v4257, %v4292
        %v4323 = vadd.f32 %v4258, %v4293
        %v4324 = vadd.f32 %v4259, %v4294
        %v4325 = vadd.f32 %v4260, %v4295
        %v4326 = vadd.f32 %v4261, %v4296
        %v4327 = vadd.f32 %v4262, %v4297
        %v4328 = vadd.f32 %v4263, %v4298
        %v4329 = vadd.f32 %v4264, %v4299
        %v4330 = vadd.f32 %v4265, %v4300
        %v4331 = vadd.f32 %v4266, %v4301
        %v4332 = vadd.f32 %v4267, %v4302
        %v4333 = vadd.f32 %v4268, %v4303
        %v4334 = vadd.f32 %v4269, %v4304
        %v4335 = vadd.f32 %v4270, %v4305
        %v4336 = vadd.f32 %v4271, %v4306
        %v4337 = vadd.f32 %v4272, %v4307
        %v4338 = vadd.f32 %v4273, %v4308
        %v4339 = vadd.f32 %v4274, %v4309
        %v4340 = vadd.f32 %v4275, %v4310
        %v4341 = vadd.f32 %v4276, %v4311
        %v4342 = vadd.f32 %v4277, %v4312
        %v4343 = vadd.f32 %v4278, %v4313
        %v4344 = vadd.f32 %v4279, %v4314
        %v4345 = vadd.f32 %v4280, %v4315
        %v4346 = vadd.f32 %v4281, %v4316
        %v4347 = vadd.f32 %v4282, %v4317
        %v4348 = vld [vmem:[%s192 + $0x33] sm:$0x1]
        %v4349 = vlaneseq
        %v4350 = vshrl.u32 %v4349, 7
        %v4351 = vsub.s32 0, %v4350
        %v4352 = vrot.slane %v4348, %v4351
        %v4353 = vmul.f32 %v4352, %v846
        %v4354 = vmul.f32 %v4352, %v848
        %v4355 = vmul.f32 %v4352, %v850
        %v4356 = vmul.f32 %v4352, %v852
        %v4357 = vmul.f32 %v4352, %v854
        %v4358 = vmul.f32 %v4352, %v856
        %v4359 = vmul.f32 %v4352, %v858
        %v4360 = vmul.f32 %v4352, %v860
        %v4361 = vmul.f32 %v4352, %v862
        %v4362 = vmul.f32 %v4352, %v864
        %v4363 = vmul.f32 %v4352, %v866
        %v4364 = vmul.f32 %v4352, %v868
        %v4365 = vmul.f32 %v4352, %v870
        %v4366 = vmul.f32 %v4352, %v872
        %v4367 = vmul.f32 %v4352, %v874
        %v4368 = vmul.f32 %v4352, %v876
        %v4369 = vmul.f32 %v4352, %v878
        %v4370 = vmul.f32 %v4352, %v880
        %v4371 = vmul.f32 %v4352, %v882
        %v4372 = vmul.f32 %v4352, %v884
        %v4373 = vmul.f32 %v4352, %v886
        %v4374 = vmul.f32 %v4352, %v888
        %v4375 = vmul.f32 %v4352, %v890
        %v4376 = vmul.f32 %v4352, %v892
        %v4377 = vmul.f32 %v4352, %v894
        %v4378 = vmul.f32 %v4352, %v896
        %v4379 = vmul.f32 %v4352, %v898
        %v4380 = vmul.f32 %v4352, %v900
        %v4381 = vmul.f32 %v4352, %v902
        %v4382 = vmul.f32 %v4352, %v904
        %v4383 = vadd.f32 %v4318, %v4353
        %v4384 = vadd.f32 %v4319, %v4354
        %v4385 = vadd.f32 %v4320, %v4355
        %v4386 = vadd.f32 %v4321, %v4356
        %v4387 = vadd.f32 %v4322, %v4357
        %v4388 = vadd.f32 %v4323, %v4358
        %v4389 = vadd.f32 %v4324, %v4359
        %v4390 = vadd.f32 %v4325, %v4360
        %v4391 = vadd.f32 %v4326, %v4361
        %v4392 = vadd.f32 %v4327, %v4362
        %v4393 = vadd.f32 %v4328, %v4363
        %v4394 = vadd.f32 %v4329, %v4364
        %v4395 = vadd.f32 %v4330, %v4365
        %v4396 = vadd.f32 %v4331, %v4366
        %v4397 = vadd.f32 %v4332, %v4367
        %v4398 = vadd.f32 %v4333, %v4368
        %v4399 = vadd.f32 %v4334, %v4369
        %v4400 = vadd.f32 %v4335, %v4370
        %v4401 = vadd.f32 %v4336, %v4371
        %v4402 = vadd.f32 %v4337, %v4372
        %v4403 = vadd.f32 %v4338, %v4373
        %v4404 = vadd.f32 %v4339, %v4374
        %v4405 = vadd.f32 %v4340, %v4375
        %v4406 = vadd.f32 %v4341, %v4376
        %v4407 = vadd.f32 %v4342, %v4377
        %v4408 = vadd.f32 %v4343, %v4378
        %v4409 = vadd.f32 %v4344, %v4379
        %v4410 = vadd.f32 %v4345, %v4380
        %v4411 = vadd.f32 %v4346, %v4381
        %v4412 = vadd.f32 %v4347, %v4382
        %v4413 = vld [vmem:[%s192 + $0x3c] sm:$0x1]
        %v4414 = vlaneseq
        %v4415 = vshrl.u32 %v4414, 7
        %v4416 = vsub.s32 0, %v4415
        %v4417 = vrot.slane %v4413, %v4416
        %v4418 = vmul.f32 %v4417, %v975
        %v4419 = vmul.f32 %v4417, %v977
        %v4420 = vmul.f32 %v4417, %v979
        %v4421 = vmul.f32 %v4417, %v981
        %v4422 = vmul.f32 %v4417, %v983
        %v4423 = vmul.f32 %v4417, %v985
        %v4424 = vmul.f32 %v4417, %v987
        %v4425 = vmul.f32 %v4417, %v989
        %v4426 = vmul.f32 %v4417, %v991
        %v4427 = vmul.f32 %v4417, %v993
        %v4428 = vmul.f32 %v4417, %v995
        %v4429 = vmul.f32 %v4417, %v997
        %v4430 = vmul.f32 %v4417, %v999
        %v4431 = vmul.f32 %v4417, %v1001
        %v4432 = vmul.f32 %v4417, %v1003
        %v4433 = vmul.f32 %v4417, %v1005
        %v4434 = vmul.f32 %v4417, %v1007
        %v4435 = vmul.f32 %v4417, %v1009
        %v4436 = vmul.f32 %v4417, %v1011
        %v4437 = vmul.f32 %v4417, %v1013
        %v4438 = vmul.f32 %v4417, %v1015
        %v4439 = vmul.f32 %v4417, %v1017
        %v4440 = vmul.f32 %v4417, %v1019
        %v4441 = vmul.f32 %v4417, %v1021
        %v4442 = vmul.f32 %v4417, %v1023
        %v4443 = vmul.f32 %v4417, %v1025
        %v4444 = vmul.f32 %v4417, %v1027
        %v4445 = vmul.f32 %v4417, %v1029
        %v4446 = vmul.f32 %v4417, %v1031
        %v4447 = vmul.f32 %v4417, %v1033
        %v4448 = vadd.f32 %v4383, %v4418
        %v4449 = vadd.f32 %v4384, %v4419
        %v4450 = vadd.f32 %v4385, %v4420
        %v4451 = vadd.f32 %v4386, %v4421
        %v4452 = vadd.f32 %v4387, %v4422
        %v4453 = vadd.f32 %v4388, %v4423
        %v4454 = vadd.f32 %v4389, %v4424
        %v4455 = vadd.f32 %v4390, %v4425
        %v4456 = vadd.f32 %v4391, %v4426
        %v4457 = vadd.f32 %v4392, %v4427
        %v4458 = vadd.f32 %v4393, %v4428
        %v4459 = vadd.f32 %v4394, %v4429
        %v4460 = vadd.f32 %v4395, %v4430
        %v4461 = vadd.f32 %v4396, %v4431
        %v4462 = vadd.f32 %v4397, %v4432
        %v4463 = vadd.f32 %v4398, %v4433
        %v4464 = vadd.f32 %v4399, %v4434
        %v4465 = vadd.f32 %v4400, %v4435
        %v4466 = vadd.f32 %v4401, %v4436
        %v4467 = vadd.f32 %v4402, %v4437
        %v4468 = vadd.f32 %v4403, %v4438
        %v4469 = vadd.f32 %v4404, %v4439
        %v4470 = vadd.f32 %v4405, %v4440
        %v4471 = vadd.f32 %v4406, %v4441
        %v4472 = vadd.f32 %v4407, %v4442
        %v4473 = vadd.f32 %v4408, %v4443
        %v4474 = vadd.f32 %v4409, %v4444
        %v4475 = vadd.f32 %v4410, %v4445
        %v4476 = vadd.f32 %v4411, %v4446
        %v4477 = vadd.f32 %v4412, %v4447
        %v4478 = vrot.slane %v4448, 7
        %v4479 = vrot.slane %v4450, 7
        %v4480 = vrot.slane %v4452, 7
        %v4481 = vrot.slane %v4454, 7
        %v4482 = vrot.slane %v4456, 7
        %v4483 = vrot.slane %v4458, 7
        %v4484 = vrot.slane %v4460, 7
        %v4485 = vrot.slane %v4462, 7
        %v4486 = vrot.slane %v4464, 7
        %v4487 = vrot.slane %v4466, 7
        %v4488 = vrot.slane %v4468, 7
        %v4489 = vrot.slane %v4470, 7
        %v4490 = vrot.slane %v4472, 7
        %v4491 = vrot.slane %v4474, 7
        %v4492 = vrot.slane %v4476, 7
        %v4493 = vrot.slane %v4449, 7
        %v4494 = vrot.slane %v4451, 7
        %v4495 = vrot.slane %v4453, 7
        %v4496 = vrot.slane %v4455, 7
        %v4497 = vrot.slane %v4457, 7
        %v4498 = vrot.slane %v4459, 7
        %v4499 = vrot.slane %v4461, 7
        %v4500 = vrot.slane %v4463, 7
        %v4501 = vrot.slane %v4465, 7
        %v4502 = vrot.slane %v4467, 7
        %v4503 = vrot.slane %v4469, 7
        %v4504 = vrot.slane %v4471, 7
        %v4505 = vrot.slane %v4473, 7
        %v4506 = vrot.slane %v4475, 7
        %v4507 = vrot.slane %v4477, 7
        %v4508 = vsel %vm1128, %v4478, %v4493
        %v4509 = vsel %vm1128, %v4479, %v4494
        %v4510 = vsel %vm1128, %v4480, %v4495
        %v4511 = vsel %vm1128, %v4481, %v4496
        %v4512 = vsel %vm1128, %v4482, %v4497
        %v4513 = vsel %vm1128, %v4483, %v4498
        %v4514 = vsel %vm1128, %v4484, %v4499
        %v4515 = vsel %vm1128, %v4485, %v4500
        %v4516 = vsel %vm1128, %v4486, %v4501
        %v4517 = vsel %vm1128, %v4487, %v4502
        %v4518 = vsel %vm1128, %v4488, %v4503
        %v4519 = vsel %vm1128, %v4489, %v4504
        %v4520 = vsel %vm1128, %v4490, %v4505
        %v4521 = vsel %vm1128, %v4491, %v4506
        %v4522 = vsel %vm1128, %v4492, %v4507
        %v4523 = vsel %vm1128, %v4493, %v4478
        %v4524 = vsel %vm1128, %v4494, %v4479
        %v4525 = vsel %vm1128, %v4495, %v4480
        %v4526 = vsel %vm1128, %v4496, %v4481
        %v4527 = vsel %vm1128, %v4497, %v4482
        %v4528 = vsel %vm1128, %v4498, %v4483
        %v4529 = vsel %vm1128, %v4499, %v4484
        %v4530 = vsel %vm1128, %v4500, %v4485
        %v4531 = vsel %vm1128, %v4501, %v4486
        %v4532 = vsel %vm1128, %v4502, %v4487
        %v4533 = vsel %vm1128, %v4503, %v4488
        %v4534 = vsel %vm1128, %v4504, %v4489
        %v4535 = vsel %vm1128, %v4505, %v4490
        %v4536 = vsel %vm1128, %v4506, %v4491
        %v4537 = vsel %vm1128, %v4507, %v4492
        %v4538 = vsel %vm1128, 0.0, %v4523
        %v4539 = vsel %vm1159, 0.0, %v4508
        %v4540 = vsel %vm1128, 0.0, %v4524
        %v4541 = vsel %vm1159, 0.0, %v4509
        %v4542 = vsel %vm1128, 0.0, %v4525
        %v4543 = vsel %vm1159, 0.0, %v4510
        %v4544 = vsel %vm1128, 0.0, %v4526
        %v4545 = vsel %vm1159, 0.0, %v4511
        %v4546 = vsel %vm1128, 0.0, %v4527
        %v4547 = vsel %vm1159, 0.0, %v4512
        %v4548 = vsel %vm1128, 0.0, %v4528
        %v4549 = vsel %vm1159, 0.0, %v4513
        %v4550 = vsel %vm1128, 0.0, %v4529
        %v4551 = vsel %vm1159, 0.0, %v4514
        %v4552 = vsel %vm1128, 0.0, %v4530
        %v4553 = vsel %vm1159, 0.0, %v4515
        %v4554 = vsel %vm1128, 0.0, %v4531
        %v4555 = vsel %vm1159, 0.0, %v4516
        %v4556 = vsel %vm1128, 0.0, %v4532
        %v4557 = vsel %vm1159, 0.0, %v4517
        %v4558 = vsel %vm1128, 0.0, %v4533
        %v4559 = vsel %vm1159, 0.0, %v4518
        %v4560 = vsel %vm1128, 0.0, %v4534
        %v4561 = vsel %vm1159, 0.0, %v4519
        %v4562 = vsel %vm1128, 0.0, %v4535
        %v4563 = vsel %vm1159, 0.0, %v4520
        %v4564 = vsel %vm1128, 0.0, %v4536
        %v4565 = vsel %vm1159, 0.0, %v4521
        %v4566 = vsel %vm1128, 0.0, %v4537
        %v4567 = vsel %vm1159, 0.0, %v4522
        %v4568 = vadd.f32 %v3991, %v4538
        %v4569 = vadd.f32 %v3992, %v4539
        %v4570 = vadd.f32 %v3993, %v4540
        %v4571 = vadd.f32 %v3994, %v4541
        %v4572 = vadd.f32 %v3995, %v4542
        %v4573 = vadd.f32 %v3996, %v4543
        %v4574 = vadd.f32 %v3997, %v4544
        %v4575 = vadd.f32 %v3998, %v4545
        %v4576 = vadd.f32 %v3999, %v4546
        %v4577 = vadd.f32 %v4000, %v4547
        %v4578 = vadd.f32 %v4001, %v4548
        %v4579 = vadd.f32 %v4002, %v4549
        %v4580 = vadd.f32 %v4003, %v4550
        %v4581 = vadd.f32 %v4004, %v4551
        %v4582 = vadd.f32 %v4005, %v4552
        %v4583 = vadd.f32 %v4006, %v4553
        %v4584 = vadd.f32 %v4007, %v4554
        %v4585 = vadd.f32 %v4008, %v4555
        %v4586 = vadd.f32 %v4009, %v4556
        %v4587 = vadd.f32 %v4010, %v4557
        %v4588 = vadd.f32 %v4011, %v4558
        %v4589 = vadd.f32 %v4012, %v4559
        %v4590 = vadd.f32 %v4013, %v4560
        %v4591 = vadd.f32 %v4014, %v4561
        %v4592 = vadd.f32 %v4015, %v4562
        %v4593 = vadd.f32 %v4016, %v4563
        %v4594 = vadd.f32 %v4017, %v4564
        %v4595 = vadd.f32 %v4018, %v4565
        %v4596 = vadd.f32 %v4019, %v4566
        %v4597 = vadd.f32 %v4020, %v4567
        %v4598 = vadd.f32 %v4021, 0.0
        %v4599 = vadd.f32 %v4022, 0.0
        %v4600 = vld [vmem:[%s192 + $0x7] sm:$0x1]
        %v4601 = vlaneseq
        %v4602 = vshrl.u32 %v4601, 7
        %v4603 = vsub.s32 0, %v4602
        %v4604 = vrot.slane %v4600, %v4603
        %v4605 = vmul.f32 %v4604, %v265
        %v4606 = vmul.f32 %v4604, %v267
        %v4607 = vmul.f32 %v4604, %v269
        %v4608 = vmul.f32 %v4604, %v271
        %v4609 = vmul.f32 %v4604, %v273
        %v4610 = vmul.f32 %v4604, %v275
        %v4611 = vmul.f32 %v4604, %v277
        %v4612 = vmul.f32 %v4604, %v279
        %v4613 = vmul.f32 %v4604, %v281
        %v4614 = vmul.f32 %v4604, %v283
        %v4615 = vmul.f32 %v4604, %v285
        %v4616 = vmul.f32 %v4604, %v287
        %v4617 = vmul.f32 %v4604, %v289
        %v4618 = vmul.f32 %v4604, %v291
        %v4619 = vmul.f32 %v4604, %v293
        %v4620 = vmul.f32 %v4604, %v295
        %v4621 = vmul.f32 %v4604, %v297
        %v4622 = vmul.f32 %v4604, %v299
        %v4623 = vmul.f32 %v4604, %v301
        %v4624 = vmul.f32 %v4604, %v303
        %v4625 = vmul.f32 %v4604, %v305
        %v4626 = vmul.f32 %v4604, %v307
        %v4627 = vmul.f32 %v4604, %v309
        %v4628 = vmul.f32 %v4604, %v311
        %v4629 = vmul.f32 %v4604, %v313
        %v4630 = vmul.f32 %v4604, %v315
        %v4631 = vmul.f32 %v4604, %v317
        %v4632 = vmul.f32 %v4604, %v319
        %v4633 = vmul.f32 %v4604, %v321
        %v4634 = vmul.f32 %v4604, %v323
        %v4635 = vadd.f32 %v4605, 0.0
        %v4636 = vadd.f32 %v4606, 0.0
        %v4637 = vadd.f32 %v4607, 0.0
        %v4638 = vadd.f32 %v4608, 0.0
        %v4639 = vadd.f32 %v4609, 0.0
        %v4640 = vadd.f32 %v4610, 0.0
        %v4641 = vadd.f32 %v4611, 0.0
        %v4642 = vadd.f32 %v4612, 0.0
        %v4643 = vadd.f32 %v4613, 0.0
        %v4644 = vadd.f32 %v4614, 0.0
        %v4645 = vadd.f32 %v4615, 0.0
        %v4646 = vadd.f32 %v4616, 0.0
        %v4647 = vadd.f32 %v4617, 0.0
        %v4648 = vadd.f32 %v4618, 0.0
        %v4649 = vadd.f32 %v4619, 0.0
        %v4650 = vadd.f32 %v4620, 0.0
        %v4651 = vadd.f32 %v4621, 0.0
        %v4652 = vadd.f32 %v4622, 0.0
        %v4653 = vadd.f32 %v4623, 0.0
        %v4654 = vadd.f32 %v4624, 0.0
        %v4655 = vadd.f32 %v4625, 0.0
        %v4656 = vadd.f32 %v4626, 0.0
        %v4657 = vadd.f32 %v4627, 0.0
        %v4658 = vadd.f32 %v4628, 0.0
        %v4659 = vadd.f32 %v4629, 0.0
        %v4660 = vadd.f32 %v4630, 0.0
        %v4661 = vadd.f32 %v4631, 0.0
        %v4662 = vadd.f32 %v4632, 0.0
        %v4663 = vadd.f32 %v4633, 0.0
        %v4664 = vadd.f32 %v4634, 0.0
        %v4665 = vld [vmem:[%s192 + $0x10] sm:$0x1]
        %v4666 = vlaneseq
        %v4667 = vshrl.u32 %v4666, 7
        %v4668 = vsub.s32 0, %v4667
        %v4669 = vrot.slane %v4665, %v4668
        %v4670 = vmul.f32 %v4669, %v394
        %v4671 = vmul.f32 %v4669, %v396
        %v4672 = vmul.f32 %v4669, %v398
        %v4673 = vmul.f32 %v4669, %v400
        %v4674 = vmul.f32 %v4669, %v402
        %v4675 = vmul.f32 %v4669, %v404
        %v4676 = vmul.f32 %v4669, %v406
        %v4677 = vmul.f32 %v4669, %v408
        %v4678 = vmul.f32 %v4669, %v410
        %v4679 = vmul.f32 %v4669, %v412
        %v4680 = vmul.f32 %v4669, %v414
        %v4681 = vmul.f32 %v4669, %v416
        %v4682 = vmul.f32 %v4669, %v418
        %v4683 = vmul.f32 %v4669, %v420
        %v4684 = vmul.f32 %v4669, %v422
        %v4685 = vmul.f32 %v4669, %v424
        %v4686 = vmul.f32 %v4669, %v426
        %v4687 = vmul.f32 %v4669, %v428
        %v4688 = vmul.f32 %v4669, %v430
        %v4689 = vmul.f32 %v4669, %v432
        %v4690 = vmul.f32 %v4669, %v434
        %v4691 = vmul.f32 %v4669, %v436
        %v4692 = vmul.f32 %v4669, %v438
        %v4693 = vmul.f32 %v4669, %v440
        %v4694 = vmul.f32 %v4669, %v442
        %v4695 = vmul.f32 %v4669, %v444
        %v4696 = vmul.f32 %v4669, %v446
        %v4697 = vmul.f32 %v4669, %v448
        %v4698 = vmul.f32 %v4669, %v450
        %v4699 = vmul.f32 %v4669, %v452
        %v4700 = vadd.f32 %v4635, %v4670
        %v4701 = vadd.f32 %v4636, %v4671
        %v4702 = vadd.f32 %v4637, %v4672
        %v4703 = vadd.f32 %v4638, %v4673
        %v4704 = vadd.f32 %v4639, %v4674
        %v4705 = vadd.f32 %v4640, %v4675
        %v4706 = vadd.f32 %v4641, %v4676
        %v4707 = vadd.f32 %v4642, %v4677
        %v4708 = vadd.f32 %v4643, %v4678
        %v4709 = vadd.f32 %v4644, %v4679
        %v4710 = vadd.f32 %v4645, %v4680
        %v4711 = vadd.f32 %v4646, %v4681
        %v4712 = vadd.f32 %v4647, %v4682
        %v4713 = vadd.f32 %v4648, %v4683
        %v4714 = vadd.f32 %v4649, %v4684
        %v4715 = vadd.f32 %v4650, %v4685
        %v4716 = vadd.f32 %v4651, %v4686
        %v4717 = vadd.f32 %v4652, %v4687
        %v4718 = vadd.f32 %v4653, %v4688
        %v4719 = vadd.f32 %v4654, %v4689
        %v4720 = vadd.f32 %v4655, %v4690
        %v4721 = vadd.f32 %v4656, %v4691
        %v4722 = vadd.f32 %v4657, %v4692
        %v4723 = vadd.f32 %v4658, %v4693
        %v4724 = vadd.f32 %v4659, %v4694
        %v4725 = vadd.f32 %v4660, %v4695
        %v4726 = vadd.f32 %v4661, %v4696
        %v4727 = vadd.f32 %v4662, %v4697
        %v4728 = vadd.f32 %v4663, %v4698
        %v4729 = vadd.f32 %v4664, %v4699
        %v4730 = vld [vmem:[%s192 + $0x19] sm:$0x1]
        %v4731 = vlaneseq
        %v4732 = vshrl.u32 %v4731, 7
        %v4733 = vsub.s32 0, %v4732
        %v4734 = vrot.slane %v4730, %v4733
        %v4735 = vmul.f32 %v4734, %v523
        %v4736 = vmul.f32 %v4734, %v525
        %v4737 = vmul.f32 %v4734, %v527
        %v4738 = vmul.f32 %v4734, %v529
        %v4739 = vmul.f32 %v4734, %v531
        %v4740 = vmul.f32 %v4734, %v533
        %v4741 = vmul.f32 %v4734, %v535
        %v4742 = vmul.f32 %v4734, %v537
        %v4743 = vmul.f32 %v4734, %v539
        %v4744 = vmul.f32 %v4734, %v541
        %v4745 = vmul.f32 %v4734, %v543
        %v4746 = vmul.f32 %v4734, %v545
        %v4747 = vmul.f32 %v4734, %v547
        %v4748 = vmul.f32 %v4734, %v549
        %v4749 = vmul.f32 %v4734, %v551
        %v4750 = vmul.f32 %v4734, %v553
        %v4751 = vmul.f32 %v4734, %v555
        %v4752 = vmul.f32 %v4734, %v557
        %v4753 = vmul.f32 %v4734, %v559
        %v4754 = vmul.f32 %v4734, %v561
        %v4755 = vmul.f32 %v4734, %v563
        %v4756 = vmul.f32 %v4734, %v565
        %v4757 = vmul.f32 %v4734, %v567
        %v4758 = vmul.f32 %v4734, %v569
        %v4759 = vmul.f32 %v4734, %v571
        %v4760 = vmul.f32 %v4734, %v573
        %v4761 = vmul.f32 %v4734, %v575
        %v4762 = vmul.f32 %v4734, %v577
        %v4763 = vmul.f32 %v4734, %v579
        %v4764 = vmul.f32 %v4734, %v581
        %v4765 = vadd.f32 %v4700, %v4735
        %v4766 = vadd.f32 %v4701, %v4736
        %v4767 = vadd.f32 %v4702, %v4737
        %v4768 = vadd.f32 %v4703, %v4738
        %v4769 = vadd.f32 %v4704, %v4739
        %v4770 = vadd.f32 %v4705, %v4740
        %v4771 = vadd.f32 %v4706, %v4741
        %v4772 = vadd.f32 %v4707, %v4742
        %v4773 = vadd.f32 %v4708, %v4743
        %v4774 = vadd.f32 %v4709, %v4744
        %v4775 = vadd.f32 %v4710, %v4745
        %v4776 = vadd.f32 %v4711, %v4746
        %v4777 = vadd.f32 %v4712, %v4747
        %v4778 = vadd.f32 %v4713, %v4748
        %v4779 = vadd.f32 %v4714, %v4749
        %v4780 = vadd.f32 %v4715, %v4750
        %v4781 = vadd.f32 %v4716, %v4751
        %v4782 = vadd.f32 %v4717, %v4752
        %v4783 = vadd.f32 %v4718, %v4753
        %v4784 = vadd.f32 %v4719, %v4754
        %v4785 = vadd.f32 %v4720, %v4755
        %v4786 = vadd.f32 %v4721, %v4756
        %v4787 = vadd.f32 %v4722, %v4757
        %v4788 = vadd.f32 %v4723, %v4758
        %v4789 = vadd.f32 %v4724, %v4759
        %v4790 = vadd.f32 %v4725, %v4760
        %v4791 = vadd.f32 %v4726, %v4761
        %v4792 = vadd.f32 %v4727, %v4762
        %v4793 = vadd.f32 %v4728, %v4763
        %v4794 = vadd.f32 %v4729, %v4764
        %v4795 = vld [vmem:[%s192 + $0x22] sm:$0x1]
        %v4796 = vlaneseq
        %v4797 = vshrl.u32 %v4796, 7
        %v4798 = vsub.s32 0, %v4797
        %v4799 = vrot.slane %v4795, %v4798
        %v4800 = vmul.f32 %v4799, %v220
        %v4801 = vmul.f32 %v4799, %v221
        %v4802 = vmul.f32 %v4799, %v222
        %v4803 = vmul.f32 %v4799, %v223
        %v4804 = vmul.f32 %v4799, %v224
        %v4805 = vmul.f32 %v4799, %v225
        %v4806 = vmul.f32 %v4799, %v226
        %v4807 = vmul.f32 %v4799, %v227
        %v4808 = vmul.f32 %v4799, %v228
        %v4809 = vmul.f32 %v4799, %v229
        %v4810 = vmul.f32 %v4799, %v230
        %v4811 = vmul.f32 %v4799, %v231
        %v4812 = vmul.f32 %v4799, %v232
        %v4813 = vmul.f32 %v4799, %v233
        %v4814 = vmul.f32 %v4799, %v234
        %v4815 = vmul.f32 %v4799, %v235
        %v4816 = vmul.f32 %v4799, %v236
        %v4817 = vmul.f32 %v4799, %v237
        %v4818 = vmul.f32 %v4799, %v238
        %v4819 = vmul.f32 %v4799, %v239
        %v4820 = vmul.f32 %v4799, %v240
        %v4821 = vmul.f32 %v4799, %v241
        %v4822 = vmul.f32 %v4799, %v242
        %v4823 = vmul.f32 %v4799, %v243
        %v4824 = vmul.f32 %v4799, %v244
        %v4825 = vmul.f32 %v4799, %v245
        %v4826 = vmul.f32 %v4799, %v246
        %v4827 = vmul.f32 %v4799, %v247
        %v4828 = vmul.f32 %v4799, %v248
        %v4829 = vmul.f32 %v4799, %v249
        %v4830 = vadd.f32 %v4765, %v4800
        %v4831 = vadd.f32 %v4766, %v4801
        %v4832 = vadd.f32 %v4767, %v4802
        %v4833 = vadd.f32 %v4768, %v4803
        %v4834 = vadd.f32 %v4769, %v4804
        %v4835 = vadd.f32 %v4770, %v4805
        %v4836 = vadd.f32 %v4771, %v4806
        %v4837 = vadd.f32 %v4772, %v4807
        %v4838 = vadd.f32 %v4773, %v4808
        %v4839 = vadd.f32 %v4774, %v4809
        %v4840 = vadd.f32 %v4775, %v4810
        %v4841 = vadd.f32 %v4776, %v4811
        %v4842 = vadd.f32 %v4777, %v4812
        %v4843 = vadd.f32 %v4778, %v4813
        %v4844 = vadd.f32 %v4779, %v4814
        %v4845 = vadd.f32 %v4780, %v4815
        %v4846 = vadd.f32 %v4781, %v4816
        %v4847 = vadd.f32 %v4782, %v4817
        %v4848 = vadd.f32 %v4783, %v4818
        %v4849 = vadd.f32 %v4784, %v4819
        %v4850 = vadd.f32 %v4785, %v4820
        %v4851 = vadd.f32 %v4786, %v4821
        %v4852 = vadd.f32 %v4787, %v4822
        %v4853 = vadd.f32 %v4788, %v4823
        %v4854 = vadd.f32 %v4789, %v4824
        %v4855 = vadd.f32 %v4790, %v4825
        %v4856 = vadd.f32 %v4791, %v4826
        %v4857 = vadd.f32 %v4792, %v4827
        %v4858 = vadd.f32 %v4793, %v4828
        %v4859 = vadd.f32 %v4794, %v4829
        %v4860 = vld [vmem:[%s192 + $0x2b] sm:$0x1]
        %v4861 = vlaneseq
        %v4862 = vshrl.u32 %v4861, 7
        %v4863 = vsub.s32 0, %v4862
        %v4864 = vrot.slane %v4860, %v4863
        %v4865 = vmul.f32 %v4864, %v717
        %v4866 = vmul.f32 %v4864, %v719
        %v4867 = vmul.f32 %v4864, %v721
        %v4868 = vmul.f32 %v4864, %v723
        %v4869 = vmul.f32 %v4864, %v725
        %v4870 = vmul.f32 %v4864, %v727
        %v4871 = vmul.f32 %v4864, %v729
        %v4872 = vmul.f32 %v4864, %v731
        %v4873 = vmul.f32 %v4864, %v733
        %v4874 = vmul.f32 %v4864, %v735
        %v4875 = vmul.f32 %v4864, %v737
        %v4876 = vmul.f32 %v4864, %v739
        %v4877 = vmul.f32 %v4864, %v741
        %v4878 = vmul.f32 %v4864, %v743
        %v4879 = vmul.f32 %v4864, %v745
        %v4880 = vmul.f32 %v4864, %v747
        %v4881 = vmul.f32 %v4864, %v749
        %v4882 = vmul.f32 %v4864, %v751
        %v4883 = vmul.f32 %v4864, %v753
        %v4884 = vmul.f32 %v4864, %v755
        %v4885 = vmul.f32 %v4864, %v757
        %v4886 = vmul.f32 %v4864, %v759
        %v4887 = vmul.f32 %v4864, %v761
        %v4888 = vmul.f32 %v4864, %v763
        %v4889 = vmul.f32 %v4864, %v765
        %v4890 = vmul.f32 %v4864, %v767
        %v4891 = vmul.f32 %v4864, %v769
        %v4892 = vmul.f32 %v4864, %v771
        %v4893 = vmul.f32 %v4864, %v773
        %v4894 = vmul.f32 %v4864, %v775
        %v4895 = vadd.f32 %v4830, %v4865
        %v4896 = vadd.f32 %v4831, %v4866
        %v4897 = vadd.f32 %v4832, %v4867
        %v4898 = vadd.f32 %v4833, %v4868
        %v4899 = vadd.f32 %v4834, %v4869
        %v4900 = vadd.f32 %v4835, %v4870
        %v4901 = vadd.f32 %v4836, %v4871
        %v4902 = vadd.f32 %v4837, %v4872
        %v4903 = vadd.f32 %v4838, %v4873
        %v4904 = vadd.f32 %v4839, %v4874
        %v4905 = vadd.f32 %v4840, %v4875
        %v4906 = vadd.f32 %v4841, %v4876
        %v4907 = vadd.f32 %v4842, %v4877
        %v4908 = vadd.f32 %v4843, %v4878
        %v4909 = vadd.f32 %v4844, %v4879
        %v4910 = vadd.f32 %v4845, %v4880
        %v4911 = vadd.f32 %v4846, %v4881
        %v4912 = vadd.f32 %v4847, %v4882
        %v4913 = vadd.f32 %v4848, %v4883
        %v4914 = vadd.f32 %v4849, %v4884
        %v4915 = vadd.f32 %v4850, %v4885
        %v4916 = vadd.f32 %v4851, %v4886
        %v4917 = vadd.f32 %v4852, %v4887
        %v4918 = vadd.f32 %v4853, %v4888
        %v4919 = vadd.f32 %v4854, %v4889
        %v4920 = vadd.f32 %v4855, %v4890
        %v4921 = vadd.f32 %v4856, %v4891
        %v4922 = vadd.f32 %v4857, %v4892
        %v4923 = vadd.f32 %v4858, %v4893
        %v4924 = vadd.f32 %v4859, %v4894
        %v4925 = vld [vmem:[%s192 + $0x34] sm:$0x1]
        %v4926 = vlaneseq
        %v4927 = vshrl.u32 %v4926, 7
        %v4928 = vsub.s32 0, %v4927
        %v4929 = vrot.slane %v4925, %v4928
        %v4930 = vmul.f32 %v4929, %v846
        %v4931 = vmul.f32 %v4929, %v848
        %v4932 = vmul.f32 %v4929, %v850
        %v4933 = vmul.f32 %v4929, %v852
        %v4934 = vmul.f32 %v4929, %v854
        %v4935 = vmul.f32 %v4929, %v856
        %v4936 = vmul.f32 %v4929, %v858
        %v4937 = vmul.f32 %v4929, %v860
        %v4938 = vmul.f32 %v4929, %v862
        %v4939 = vmul.f32 %v4929, %v864
        %v4940 = vmul.f32 %v4929, %v866
        %v4941 = vmul.f32 %v4929, %v868
        %v4942 = vmul.f32 %v4929, %v870
        %v4943 = vmul.f32 %v4929, %v872
        %v4944 = vmul.f32 %v4929, %v874
        %v4945 = vmul.f32 %v4929, %v876
        %v4946 = vmul.f32 %v4929, %v878
        %v4947 = vmul.f32 %v4929, %v880
        %v4948 = vmul.f32 %v4929, %v882
        %v4949 = vmul.f32 %v4929, %v884
        %v4950 = vmul.f32 %v4929, %v886
        %v4951 = vmul.f32 %v4929, %v888
        %v4952 = vmul.f32 %v4929, %v890
        %v4953 = vmul.f32 %v4929, %v892
        %v4954 = vmul.f32 %v4929, %v894
        %v4955 = vmul.f32 %v4929, %v896
        %v4956 = vmul.f32 %v4929, %v898
        %v4957 = vmul.f32 %v4929, %v900
        %v4958 = vmul.f32 %v4929, %v902
        %v4959 = vmul.f32 %v4929, %v904
        %v4960 = vadd.f32 %v4895, %v4930
        %v4961 = vadd.f32 %v4896, %v4931
        %v4962 = vadd.f32 %v4897, %v4932
        %v4963 = vadd.f32 %v4898, %v4933
        %v4964 = vadd.f32 %v4899, %v4934
        %v4965 = vadd.f32 %v4900, %v4935
        %v4966 = vadd.f32 %v4901, %v4936
        %v4967 = vadd.f32 %v4902, %v4937
        %v4968 = vadd.f32 %v4903, %v4938
        %v4969 = vadd.f32 %v4904, %v4939
        %v4970 = vadd.f32 %v4905, %v4940
        %v4971 = vadd.f32 %v4906, %v4941
        %v4972 = vadd.f32 %v4907, %v4942
        %v4973 = vadd.f32 %v4908, %v4943
        %v4974 = vadd.f32 %v4909, %v4944
        %v4975 = vadd.f32 %v4910, %v4945
        %v4976 = vadd.f32 %v4911, %v4946
        %v4977 = vadd.f32 %v4912, %v4947
        %v4978 = vadd.f32 %v4913, %v4948
        %v4979 = vadd.f32 %v4914, %v4949
        %v4980 = vadd.f32 %v4915, %v4950
        %v4981 = vadd.f32 %v4916, %v4951
        %v4982 = vadd.f32 %v4917, %v4952
        %v4983 = vadd.f32 %v4918, %v4953
        %v4984 = vadd.f32 %v4919, %v4954
        %v4985 = vadd.f32 %v4920, %v4955
        %v4986 = vadd.f32 %v4921, %v4956
        %v4987 = vadd.f32 %v4922, %v4957
        %v4988 = vadd.f32 %v4923, %v4958
        %v4989 = vadd.f32 %v4924, %v4959
        %v4990 = vld [vmem:[%s192 + $0x3d] sm:$0x1]
        %v4991 = vlaneseq
        %v4992 = vshrl.u32 %v4991, 7
        %v4993 = vsub.s32 0, %v4992
        %v4994 = vrot.slane %v4990, %v4993
        %v4995 = vmul.f32 %v4994, %v975
        %v4996 = vmul.f32 %v4994, %v977
        %v4997 = vmul.f32 %v4994, %v979
        %v4998 = vmul.f32 %v4994, %v981
        %v4999 = vmul.f32 %v4994, %v983
        %v5000 = vmul.f32 %v4994, %v985
        %v5001 = vmul.f32 %v4994, %v987
        %v5002 = vmul.f32 %v4994, %v989
        %v5003 = vmul.f32 %v4994, %v991
        %v5004 = vmul.f32 %v4994, %v993
        %v5005 = vmul.f32 %v4994, %v995
        %v5006 = vmul.f32 %v4994, %v997
        %v5007 = vmul.f32 %v4994, %v999
        %v5008 = vmul.f32 %v4994, %v1001
        %v5009 = vmul.f32 %v4994, %v1003
        %v5010 = vmul.f32 %v4994, %v1005
        %v5011 = vmul.f32 %v4994, %v1007
        %v5012 = vmul.f32 %v4994, %v1009
        %v5013 = vmul.f32 %v4994, %v1011
        %v5014 = vmul.f32 %v4994, %v1013
        %v5015 = vmul.f32 %v4994, %v1015
        %v5016 = vmul.f32 %v4994, %v1017
        %v5017 = vmul.f32 %v4994, %v1019
        %v5018 = vmul.f32 %v4994, %v1021
        %v5019 = vmul.f32 %v4994, %v1023
        %v5020 = vmul.f32 %v4994, %v1025
        %v5021 = vmul.f32 %v4994, %v1027
        %v5022 = vmul.f32 %v4994, %v1029
        %v5023 = vmul.f32 %v4994, %v1031
        %v5024 = vmul.f32 %v4994, %v1033
        %v5025 = vadd.f32 %v4960, %v4995
        %v5026 = vadd.f32 %v4961, %v4996
        %v5027 = vadd.f32 %v4962, %v4997
        %v5028 = vadd.f32 %v4963, %v4998
        %v5029 = vadd.f32 %v4964, %v4999
        %v5030 = vadd.f32 %v4965, %v5000
        %v5031 = vadd.f32 %v4966, %v5001
        %v5032 = vadd.f32 %v4967, %v5002
        %v5033 = vadd.f32 %v4968, %v5003
        %v5034 = vadd.f32 %v4969, %v5004
        %v5035 = vadd.f32 %v4970, %v5005
        %v5036 = vadd.f32 %v4971, %v5006
        %v5037 = vadd.f32 %v4972, %v5007
        %v5038 = vadd.f32 %v4973, %v5008
        %v5039 = vadd.f32 %v4974, %v5009
        %v5040 = vadd.f32 %v4975, %v5010
        %v5041 = vadd.f32 %v4976, %v5011
        %v5042 = vadd.f32 %v4977, %v5012
        %v5043 = vadd.f32 %v4978, %v5013
        %v5044 = vadd.f32 %v4979, %v5014
        %v5045 = vadd.f32 %v4980, %v5015
        %v5046 = vadd.f32 %v4981, %v5016
        %v5047 = vadd.f32 %v4982, %v5017
        %v5048 = vadd.f32 %v4983, %v5018
        %v5049 = vadd.f32 %v4984, %v5019
        %v5050 = vadd.f32 %v4985, %v5020
        %v5051 = vadd.f32 %v4986, %v5021
        %v5052 = vadd.f32 %v4987, %v5022
        %v5053 = vadd.f32 %v4988, %v5023
        %v5054 = vadd.f32 %v4989, %v5024
        %v5055 = vadd.f32 %v4568, %v5025
        %v5056 = vadd.f32 %v4569, %v5026
        %v5057 = vadd.f32 %v4570, %v5027
        %v5058 = vadd.f32 %v4571, %v5028
        %v5059 = vadd.f32 %v4572, %v5029
        %v5060 = vadd.f32 %v4573, %v5030
        %v5061 = vadd.f32 %v4574, %v5031
        %v5062 = vadd.f32 %v4575, %v5032
        %v5063 = vadd.f32 %v4576, %v5033
        %v5064 = vadd.f32 %v4577, %v5034
        %v5065 = vadd.f32 %v4578, %v5035
        %v5066 = vadd.f32 %v4579, %v5036
        %v5067 = vadd.f32 %v4580, %v5037
        %v5068 = vadd.f32 %v4581, %v5038
        %v5069 = vadd.f32 %v4582, %v5039
        %v5070 = vadd.f32 %v4583, %v5040
        %v5071 = vadd.f32 %v4584, %v5041
        %v5072 = vadd.f32 %v4585, %v5042
        %v5073 = vadd.f32 %v4586, %v5043
        %v5074 = vadd.f32 %v4587, %v5044
        %v5075 = vadd.f32 %v4588, %v5045
        %v5076 = vadd.f32 %v4589, %v5046
        %v5077 = vadd.f32 %v4590, %v5047
        %v5078 = vadd.f32 %v4591, %v5048
        %v5079 = vadd.f32 %v4592, %v5049
        %v5080 = vadd.f32 %v4593, %v5050
        %v5081 = vadd.f32 %v4594, %v5051
        %v5082 = vadd.f32 %v4595, %v5052
        %v5083 = vadd.f32 %v4596, %v5053
        %v5084 = vadd.f32 %v4597, %v5054
        %v5085 = vadd.f32 %v4598, 0.0
        %v5086 = vadd.f32 %v4599, 0.0
        %v5087 = vld [vmem:[%s192 + $0x8] sm:$0x1]
        %v5088 = vlaneseq
        %v5089 = vshrl.u32 %v5088, 7
        %v5090 = vsub.s32 0, %v5089
        %v5091 = vrot.slane %v5087, %v5090
        %v5092 = vmul.f32 %v5091, %v265
        %v5093 = vmul.f32 %v5091, %v267
        %v5094 = vmul.f32 %v5091, %v269
        %v5095 = vmul.f32 %v5091, %v271
        %v5096 = vmul.f32 %v5091, %v273
        %v5097 = vmul.f32 %v5091, %v275
        %v5098 = vmul.f32 %v5091, %v277
        %v5099 = vmul.f32 %v5091, %v279
        %v5100 = vmul.f32 %v5091, %v281
        %v5101 = vmul.f32 %v5091, %v283
        %v5102 = vmul.f32 %v5091, %v285
        %v5103 = vmul.f32 %v5091, %v287
        %v5104 = vmul.f32 %v5091, %v289
        %v5105 = vmul.f32 %v5091, %v291
        %v5106 = vmul.f32 %v5091, %v293
        %v5107 = vmul.f32 %v5091, %v295
        %v5108 = vmul.f32 %v5091, %v297
        %v5109 = vmul.f32 %v5091, %v299
        %v5110 = vmul.f32 %v5091, %v301
        %v5111 = vmul.f32 %v5091, %v303
        %v5112 = vmul.f32 %v5091, %v305
        %v5113 = vmul.f32 %v5091, %v307
        %v5114 = vmul.f32 %v5091, %v309
        %v5115 = vmul.f32 %v5091, %v311
        %v5116 = vmul.f32 %v5091, %v313
        %v5117 = vmul.f32 %v5091, %v315
        %v5118 = vmul.f32 %v5091, %v317
        %v5119 = vmul.f32 %v5091, %v319
        %v5120 = vmul.f32 %v5091, %v321
        %v5121 = vmul.f32 %v5091, %v323
        %v5122 = vadd.f32 %v5092, 0.0
        %v5123 = vadd.f32 %v5093, 0.0
        %v5124 = vadd.f32 %v5094, 0.0
        %v5125 = vadd.f32 %v5095, 0.0
        %v5126 = vadd.f32 %v5096, 0.0
        %v5127 = vadd.f32 %v5097, 0.0
        %v5128 = vadd.f32 %v5098, 0.0
        %v5129 = vadd.f32 %v5099, 0.0
        %v5130 = vadd.f32 %v5100, 0.0
        %v5131 = vadd.f32 %v5101, 0.0
        %v5132 = vadd.f32 %v5102, 0.0
        %v5133 = vadd.f32 %v5103, 0.0
        %v5134 = vadd.f32 %v5104, 0.0
        %v5135 = vadd.f32 %v5105, 0.0
        %v5136 = vadd.f32 %v5106, 0.0
        %v5137 = vadd.f32 %v5107, 0.0
        %v5138 = vadd.f32 %v5108, 0.0
        %v5139 = vadd.f32 %v5109, 0.0
        %v5140 = vadd.f32 %v5110, 0.0
        %v5141 = vadd.f32 %v5111, 0.0
        %v5142 = vadd.f32 %v5112, 0.0
        %v5143 = vadd.f32 %v5113, 0.0
        %v5144 = vadd.f32 %v5114, 0.0
        %v5145 = vadd.f32 %v5115, 0.0
        %v5146 = vadd.f32 %v5116, 0.0
        %v5147 = vadd.f32 %v5117, 0.0
        %v5148 = vadd.f32 %v5118, 0.0
        %v5149 = vadd.f32 %v5119, 0.0
        %v5150 = vadd.f32 %v5120, 0.0
        %v5151 = vadd.f32 %v5121, 0.0
        %v5152 = vld [vmem:[%s192 + $0x11] sm:$0x1]
        %v5153 = vlaneseq
        %v5154 = vshrl.u32 %v5153, 7
        %v5155 = vsub.s32 0, %v5154
        %v5156 = vrot.slane %v5152, %v5155
        %v5157 = vmul.f32 %v5156, %v394
        %v5158 = vmul.f32 %v5156, %v396
        %v5159 = vmul.f32 %v5156, %v398
        %v5160 = vmul.f32 %v5156, %v400
        %v5161 = vmul.f32 %v5156, %v402
        %v5162 = vmul.f32 %v5156, %v404
        %v5163 = vmul.f32 %v5156, %v406
        %v5164 = vmul.f32 %v5156, %v408
        %v5165 = vmul.f32 %v5156, %v410
        %v5166 = vmul.f32 %v5156, %v412
        %v5167 = vmul.f32 %v5156, %v414
        %v5168 = vmul.f32 %v5156, %v416
        %v5169 = vmul.f32 %v5156, %v418
        %v5170 = vmul.f32 %v5156, %v420
        %v5171 = vmul.f32 %v5156, %v422
        %v5172 = vmul.f32 %v5156, %v424
        %v5173 = vmul.f32 %v5156, %v426
        %v5174 = vmul.f32 %v5156, %v428
        %v5175 = vmul.f32 %v5156, %v430
        %v5176 = vmul.f32 %v5156, %v432
        %v5177 = vmul.f32 %v5156, %v434
        %v5178 = vmul.f32 %v5156, %v436
        %v5179 = vmul.f32 %v5156, %v438
        %v5180 = vmul.f32 %v5156, %v440
        %v5181 = vmul.f32 %v5156, %v442
        %v5182 = vmul.f32 %v5156, %v444
        %v5183 = vmul.f32 %v5156, %v446
        %v5184 = vmul.f32 %v5156, %v448
        %v5185 = vmul.f32 %v5156, %v450
        %v5186 = vmul.f32 %v5156, %v452
        %v5187 = vadd.f32 %v5122, %v5157
        %v5188 = vadd.f32 %v5123, %v5158
        %v5189 = vadd.f32 %v5124, %v5159
        %v5190 = vadd.f32 %v5125, %v5160
        %v5191 = vadd.f32 %v5126, %v5161
        %v5192 = vadd.f32 %v5127, %v5162
        %v5193 = vadd.f32 %v5128, %v5163
        %v5194 = vadd.f32 %v5129, %v5164
        %v5195 = vadd.f32 %v5130, %v5165
        %v5196 = vadd.f32 %v5131, %v5166
        %v5197 = vadd.f32 %v5132, %v5167
        %v5198 = vadd.f32 %v5133, %v5168
        %v5199 = vadd.f32 %v5134, %v5169
        %v5200 = vadd.f32 %v5135, %v5170
        %v5201 = vadd.f32 %v5136, %v5171
        %v5202 = vadd.f32 %v5137, %v5172
        %v5203 = vadd.f32 %v5138, %v5173
        %v5204 = vadd.f32 %v5139, %v5174
        %v5205 = vadd.f32 %v5140, %v5175
        %v5206 = vadd.f32 %v5141, %v5176
        %v5207 = vadd.f32 %v5142, %v5177
        %v5208 = vadd.f32 %v5143, %v5178
        %v5209 = vadd.f32 %v5144, %v5179
        %v5210 = vadd.f32 %v5145, %v5180
        %v5211 = vadd.f32 %v5146, %v5181
        %v5212 = vadd.f32 %v5147, %v5182
        %v5213 = vadd.f32 %v5148, %v5183
        %v5214 = vadd.f32 %v5149, %v5184
        %v5215 = vadd.f32 %v5150, %v5185
        %v5216 = vadd.f32 %v5151, %v5186
        %v5217 = vld [vmem:[%s192 + $0x1a] sm:$0x1]
        %v5218 = vlaneseq
        %v5219 = vshrl.u32 %v5218, 7
        %v5220 = vsub.s32 0, %v5219
        %v5221 = vrot.slane %v5217, %v5220
        %v5222 = vmul.f32 %v5221, %v523
        %v5223 = vmul.f32 %v5221, %v525
        %v5224 = vmul.f32 %v5221, %v527
        %v5225 = vmul.f32 %v5221, %v529
        %v5226 = vmul.f32 %v5221, %v531
        %v5227 = vmul.f32 %v5221, %v533
        %v5228 = vmul.f32 %v5221, %v535
        %v5229 = vmul.f32 %v5221, %v537
        %v5230 = vmul.f32 %v5221, %v539
        %v5231 = vmul.f32 %v5221, %v541
        %v5232 = vmul.f32 %v5221, %v543
        %v5233 = vmul.f32 %v5221, %v545
        %v5234 = vmul.f32 %v5221, %v547
        %v5235 = vmul.f32 %v5221, %v549
        %v5236 = vmul.f32 %v5221, %v551
        %v5237 = vmul.f32 %v5221, %v553
        %v5238 = vmul.f32 %v5221, %v555
        %v5239 = vmul.f32 %v5221, %v557
        %v5240 = vmul.f32 %v5221, %v559
        %v5241 = vmul.f32 %v5221, %v561
        %v5242 = vmul.f32 %v5221, %v563
        %v5243 = vmul.f32 %v5221, %v565
        %v5244 = vmul.f32 %v5221, %v567
        %v5245 = vmul.f32 %v5221, %v569
        %v5246 = vmul.f32 %v5221, %v571
        %v5247 = vmul.f32 %v5221, %v573
        %v5248 = vmul.f32 %v5221, %v575
        %v5249 = vmul.f32 %v5221, %v577
        %v5250 = vmul.f32 %v5221, %v579
        %v5251 = vmul.f32 %v5221, %v581
        %v5252 = vadd.f32 %v5187, %v5222
        %v5253 = vadd.f32 %v5188, %v5223
        %v5254 = vadd.f32 %v5189, %v5224
        %v5255 = vadd.f32 %v5190, %v5225
        %v5256 = vadd.f32 %v5191, %v5226
        %v5257 = vadd.f32 %v5192, %v5227
        %v5258 = vadd.f32 %v5193, %v5228
        %v5259 = vadd.f32 %v5194, %v5229
        %v5260 = vadd.f32 %v5195, %v5230
        %v5261 = vadd.f32 %v5196, %v5231
        %v5262 = vadd.f32 %v5197, %v5232
        %v5263 = vadd.f32 %v5198, %v5233
        %v5264 = vadd.f32 %v5199, %v5234
        %v5265 = vadd.f32 %v5200, %v5235
        %v5266 = vadd.f32 %v5201, %v5236
        %v5267 = vadd.f32 %v5202, %v5237
        %v5268 = vadd.f32 %v5203, %v5238
        %v5269 = vadd.f32 %v5204, %v5239
        %v5270 = vadd.f32 %v5205, %v5240
        %v5271 = vadd.f32 %v5206, %v5241
        %v5272 = vadd.f32 %v5207, %v5242
        %v5273 = vadd.f32 %v5208, %v5243
        %v5274 = vadd.f32 %v5209, %v5244
        %v5275 = vadd.f32 %v5210, %v5245
        %v5276 = vadd.f32 %v5211, %v5246
        %v5277 = vadd.f32 %v5212, %v5247
        %v5278 = vadd.f32 %v5213, %v5248
        %v5279 = vadd.f32 %v5214, %v5249
        %v5280 = vadd.f32 %v5215, %v5250
        %v5281 = vadd.f32 %v5216, %v5251
        %v5282 = vld [vmem:[%s192 + $0x23] sm:$0x1]
        %v5283 = vlaneseq
        %v5284 = vshrl.u32 %v5283, 7
        %v5285 = vsub.s32 0, %v5284
        %v5286 = vrot.slane %v5282, %v5285
        %v5287 = vmul.f32 %v5286, %v220
        %v5288 = vmul.f32 %v5286, %v221
        %v5289 = vmul.f32 %v5286, %v222
        %v5290 = vmul.f32 %v5286, %v223
        %v5291 = vmul.f32 %v5286, %v224
        %v5292 = vmul.f32 %v5286, %v225
        %v5293 = vmul.f32 %v5286, %v226
        %v5294 = vmul.f32 %v5286, %v227
        %v5295 = vmul.f32 %v5286, %v228
        %v5296 = vmul.f32 %v5286, %v229
        %v5297 = vmul.f32 %v5286, %v230
        %v5298 = vmul.f32 %v5286, %v231
        %v5299 = vmul.f32 %v5286, %v232
        %v5300 = vmul.f32 %v5286, %v233
        %v5301 = vmul.f32 %v5286, %v234
        %v5302 = vmul.f32 %v5286, %v235
        %v5303 = vmul.f32 %v5286, %v236
        %v5304 = vmul.f32 %v5286, %v237
        %v5305 = vmul.f32 %v5286, %v238
        %v5306 = vmul.f32 %v5286, %v239
        %v5307 = vmul.f32 %v5286, %v240
        %v5308 = vmul.f32 %v5286, %v241
        %v5309 = vmul.f32 %v5286, %v242
        %v5310 = vmul.f32 %v5286, %v243
        %v5311 = vmul.f32 %v5286, %v244
        %v5312 = vmul.f32 %v5286, %v245
        %v5313 = vmul.f32 %v5286, %v246
        %v5314 = vmul.f32 %v5286, %v247
        %v5315 = vmul.f32 %v5286, %v248
        %v5316 = vmul.f32 %v5286, %v249
        %v5317 = vadd.f32 %v5252, %v5287
        %v5318 = vadd.f32 %v5253, %v5288
        %v5319 = vadd.f32 %v5254, %v5289
        %v5320 = vadd.f32 %v5255, %v5290
        %v5321 = vadd.f32 %v5256, %v5291
        %v5322 = vadd.f32 %v5257, %v5292
        %v5323 = vadd.f32 %v5258, %v5293
        %v5324 = vadd.f32 %v5259, %v5294
        %v5325 = vadd.f32 %v5260, %v5295
        %v5326 = vadd.f32 %v5261, %v5296
        %v5327 = vadd.f32 %v5262, %v5297
        %v5328 = vadd.f32 %v5263, %v5298
        %v5329 = vadd.f32 %v5264, %v5299
        %v5330 = vadd.f32 %v5265, %v5300
        %v5331 = vadd.f32 %v5266, %v5301
        %v5332 = vadd.f32 %v5267, %v5302
        %v5333 = vadd.f32 %v5268, %v5303
        %v5334 = vadd.f32 %v5269, %v5304
        %v5335 = vadd.f32 %v5270, %v5305
        %v5336 = vadd.f32 %v5271, %v5306
        %v5337 = vadd.f32 %v5272, %v5307
        %v5338 = vadd.f32 %v5273, %v5308
        %v5339 = vadd.f32 %v5274, %v5309
        %v5340 = vadd.f32 %v5275, %v5310
        %v5341 = vadd.f32 %v5276, %v5311
        %v5342 = vadd.f32 %v5277, %v5312
        %v5343 = vadd.f32 %v5278, %v5313
        %v5344 = vadd.f32 %v5279, %v5314
        %v5345 = vadd.f32 %v5280, %v5315
        %v5346 = vadd.f32 %v5281, %v5316
        %v5347 = vld [vmem:[%s192 + $0x2c] sm:$0x1]
        %v5348 = vlaneseq
        %v5349 = vshrl.u32 %v5348, 7
        %v5350 = vsub.s32 0, %v5349
        %v5351 = vrot.slane %v5347, %v5350
        %v5352 = vmul.f32 %v5351, %v717
        %v5353 = vmul.f32 %v5351, %v719
        %v5354 = vmul.f32 %v5351, %v721
        %v5355 = vmul.f32 %v5351, %v723
        %v5356 = vmul.f32 %v5351, %v725
        %v5357 = vmul.f32 %v5351, %v727
        %v5358 = vmul.f32 %v5351, %v729
        %v5359 = vmul.f32 %v5351, %v731
        %v5360 = vmul.f32 %v5351, %v733
        %v5361 = vmul.f32 %v5351, %v735
        %v5362 = vmul.f32 %v5351, %v737
        %v5363 = vmul.f32 %v5351, %v739
        %v5364 = vmul.f32 %v5351, %v741
        %v5365 = vmul.f32 %v5351, %v743
        %v5366 = vmul.f32 %v5351, %v745
        %v5367 = vmul.f32 %v5351, %v747
        %v5368 = vmul.f32 %v5351, %v749
        %v5369 = vmul.f32 %v5351, %v751
        %v5370 = vmul.f32 %v5351, %v753
        %v5371 = vmul.f32 %v5351, %v755
        %v5372 = vmul.f32 %v5351, %v757
        %v5373 = vmul.f32 %v5351, %v759
        %v5374 = vmul.f32 %v5351, %v761
        %v5375 = vmul.f32 %v5351, %v763
        %v5376 = vmul.f32 %v5351, %v765
        %v5377 = vmul.f32 %v5351, %v767
        %v5378 = vmul.f32 %v5351, %v769
        %v5379 = vmul.f32 %v5351, %v771
        %v5380 = vmul.f32 %v5351, %v773
        %v5381 = vmul.f32 %v5351, %v775
        %v5382 = vadd.f32 %v5317, %v5352
        %v5383 = vadd.f32 %v5318, %v5353
        %v5384 = vadd.f32 %v5319, %v5354
        %v5385 = vadd.f32 %v5320, %v5355
        %v5386 = vadd.f32 %v5321, %v5356
        %v5387 = vadd.f32 %v5322, %v5357
        %v5388 = vadd.f32 %v5323, %v5358
        %v5389 = vadd.f32 %v5324, %v5359
        %v5390 = vadd.f32 %v5325, %v5360
        %v5391 = vadd.f32 %v5326, %v5361
        %v5392 = vadd.f32 %v5327, %v5362
        %v5393 = vadd.f32 %v5328, %v5363
        %v5394 = vadd.f32 %v5329, %v5364
        %v5395 = vadd.f32 %v5330, %v5365
        %v5396 = vadd.f32 %v5331, %v5366
        %v5397 = vadd.f32 %v5332, %v5367
        %v5398 = vadd.f32 %v5333, %v5368
        %v5399 = vadd.f32 %v5334, %v5369
        %v5400 = vadd.f32 %v5335, %v5370
        %v5401 = vadd.f32 %v5336, %v5371
        %v5402 = vadd.f32 %v5337, %v5372
        %v5403 = vadd.f32 %v5338, %v5373
        %v5404 = vadd.f32 %v5339, %v5374
        %v5405 = vadd.f32 %v5340, %v5375
        %v5406 = vadd.f32 %v5341, %v5376
        %v5407 = vadd.f32 %v5342, %v5377
        %v5408 = vadd.f32 %v5343, %v5378
        %v5409 = vadd.f32 %v5344, %v5379
        %v5410 = vadd.f32 %v5345, %v5380
        %v5411 = vadd.f32 %v5346, %v5381
        %v5412 = vld [vmem:[%s192 + $0x35] sm:$0x1]
        %v5413 = vlaneseq
        %v5414 = vshrl.u32 %v5413, 7
        %v5415 = vsub.s32 0, %v5414
        %v5416 = vrot.slane %v5412, %v5415
        %v5417 = vmul.f32 %v5416, %v846
        %v5418 = vmul.f32 %v5416, %v848
        %v5419 = vmul.f32 %v5416, %v850
        %v5420 = vmul.f32 %v5416, %v852
        %v5421 = vmul.f32 %v5416, %v854
        %v5422 = vmul.f32 %v5416, %v856
        %v5423 = vmul.f32 %v5416, %v858
        %v5424 = vmul.f32 %v5416, %v860
        %v5425 = vmul.f32 %v5416, %v862
        %v5426 = vmul.f32 %v5416, %v864
        %v5427 = vmul.f32 %v5416, %v866
        %v5428 = vmul.f32 %v5416, %v868
        %v5429 = vmul.f32 %v5416, %v870
        %v5430 = vmul.f32 %v5416, %v872
        %v5431 = vmul.f32 %v5416, %v874
        %v5432 = vmul.f32 %v5416, %v876
        %v5433 = vmul.f32 %v5416, %v878
        %v5434 = vmul.f32 %v5416, %v880
        %v5435 = vmul.f32 %v5416, %v882
        %v5436 = vmul.f32 %v5416, %v884
        %v5437 = vmul.f32 %v5416, %v886
        %v5438 = vmul.f32 %v5416, %v888
        %v5439 = vmul.f32 %v5416, %v890
        %v5440 = vmul.f32 %v5416, %v892
        %v5441 = vmul.f32 %v5416, %v894
        %v5442 = vmul.f32 %v5416, %v896
        %v5443 = vmul.f32 %v5416, %v898
        %v5444 = vmul.f32 %v5416, %v900
        %v5445 = vmul.f32 %v5416, %v902
        %v5446 = vmul.f32 %v5416, %v904
        %v5447 = vadd.f32 %v5382, %v5417
        %v5448 = vadd.f32 %v5383, %v5418
        %v5449 = vadd.f32 %v5384, %v5419
        %v5450 = vadd.f32 %v5385, %v5420
        %v5451 = vadd.f32 %v5386, %v5421
        %v5452 = vadd.f32 %v5387, %v5422
        %v5453 = vadd.f32 %v5388, %v5423
        %v5454 = vadd.f32 %v5389, %v5424
        %v5455 = vadd.f32 %v5390, %v5425
        %v5456 = vadd.f32 %v5391, %v5426
        %v5457 = vadd.f32 %v5392, %v5427
        %v5458 = vadd.f32 %v5393, %v5428
        %v5459 = vadd.f32 %v5394, %v5429
        %v5460 = vadd.f32 %v5395, %v5430
        %v5461 = vadd.f32 %v5396, %v5431
        %v5462 = vadd.f32 %v5397, %v5432
        %v5463 = vadd.f32 %v5398, %v5433
        %v5464 = vadd.f32 %v5399, %v5434
        %v5465 = vadd.f32 %v5400, %v5435
        %v5466 = vadd.f32 %v5401, %v5436
        %v5467 = vadd.f32 %v5402, %v5437
        %v5468 = vadd.f32 %v5403, %v5438
        %v5469 = vadd.f32 %v5404, %v5439
        %v5470 = vadd.f32 %v5405, %v5440
        %v5471 = vadd.f32 %v5406, %v5441
        %v5472 = vadd.f32 %v5407, %v5442
        %v5473 = vadd.f32 %v5408, %v5443
        %v5474 = vadd.f32 %v5409, %v5444
        %v5475 = vadd.f32 %v5410, %v5445
        %v5476 = vadd.f32 %v5411, %v5446
        %v5477 = vld [vmem:[%s192 + $0x3e] sm:$0x1]
        %v5478 = vlaneseq
        %v5479 = vshrl.u32 %v5478, 7
        %v5480 = vsub.s32 0, %v5479
        %v5481 = vrot.slane %v5477, %v5480
        %v5482 = vmul.f32 %v5481, %v975
        %v5483 = vmul.f32 %v5481, %v977
        %v5484 = vmul.f32 %v5481, %v979
        %v5485 = vmul.f32 %v5481, %v981
        %v5486 = vmul.f32 %v5481, %v983
        %v5487 = vmul.f32 %v5481, %v985
        %v5488 = vmul.f32 %v5481, %v987
        %v5489 = vmul.f32 %v5481, %v989
        %v5490 = vmul.f32 %v5481, %v991
        %v5491 = vmul.f32 %v5481, %v993
        %v5492 = vmul.f32 %v5481, %v995
        %v5493 = vmul.f32 %v5481, %v997
        %v5494 = vmul.f32 %v5481, %v999
        %v5495 = vmul.f32 %v5481, %v1001
        %v5496 = vmul.f32 %v5481, %v1003
        %v5497 = vmul.f32 %v5481, %v1005
        %v5498 = vmul.f32 %v5481, %v1007
        %v5499 = vmul.f32 %v5481, %v1009
        %v5500 = vmul.f32 %v5481, %v1011
        %v5501 = vmul.f32 %v5481, %v1013
        %v5502 = vmul.f32 %v5481, %v1015
        %v5503 = vmul.f32 %v5481, %v1017
        %v5504 = vmul.f32 %v5481, %v1019
        %v5505 = vmul.f32 %v5481, %v1021
        %v5506 = vmul.f32 %v5481, %v1023
        %v5507 = vmul.f32 %v5481, %v1025
        %v5508 = vmul.f32 %v5481, %v1027
        %v5509 = vmul.f32 %v5481, %v1029
        %v5510 = vmul.f32 %v5481, %v1031
        %v5511 = vmul.f32 %v5481, %v1033
        %v5512 = vadd.f32 %v5447, %v5482
        %v5513 = vadd.f32 %v5448, %v5483
        %v5514 = vadd.f32 %v5449, %v5484
        %v5515 = vadd.f32 %v5450, %v5485
        %v5516 = vadd.f32 %v5451, %v5486
        %v5517 = vadd.f32 %v5452, %v5487
        %v5518 = vadd.f32 %v5453, %v5488
        %v5519 = vadd.f32 %v5454, %v5489
        %v5520 = vadd.f32 %v5455, %v5490
        %v5521 = vadd.f32 %v5456, %v5491
        %v5522 = vadd.f32 %v5457, %v5492
        %v5523 = vadd.f32 %v5458, %v5493
        %v5524 = vadd.f32 %v5459, %v5494
        %v5525 = vadd.f32 %v5460, %v5495
        %v5526 = vadd.f32 %v5461, %v5496
        %v5527 = vadd.f32 %v5462, %v5497
        %v5528 = vadd.f32 %v5463, %v5498
        %v5529 = vadd.f32 %v5464, %v5499
        %v5530 = vadd.f32 %v5465, %v5500
        %v5531 = vadd.f32 %v5466, %v5501
        %v5532 = vadd.f32 %v5467, %v5502
        %v5533 = vadd.f32 %v5468, %v5503
        %v5534 = vadd.f32 %v5469, %v5504
        %v5535 = vadd.f32 %v5470, %v5505
        %v5536 = vadd.f32 %v5471, %v5506
        %v5537 = vadd.f32 %v5472, %v5507
        %v5538 = vadd.f32 %v5473, %v5508
        %v5539 = vadd.f32 %v5474, %v5509
        %v5540 = vadd.f32 %v5475, %v5510
        %v5541 = vadd.f32 %v5476, %v5511
        %v5542 = vrot.slane %v5512, 1
        %v5543 = vrot.slane %v5514, 1
        %v5544 = vrot.slane %v5516, 1
        %v5545 = vrot.slane %v5518, 1
        %v5546 = vrot.slane %v5520, 1
        %v5547 = vrot.slane %v5522, 1
        %v5548 = vrot.slane %v5524, 1
        %v5549 = vrot.slane %v5526, 1
        %v5550 = vrot.slane %v5528, 1
        %v5551 = vrot.slane %v5530, 1
        %v5552 = vrot.slane %v5532, 1
        %v5553 = vrot.slane %v5534, 1
        %v5554 = vrot.slane %v5536, 1
        %v5555 = vrot.slane %v5538, 1
        %v5556 = vrot.slane %v5540, 1
        %v5557 = vrot.slane %v5513, 1
        %v5558 = vrot.slane %v5515, 1
        %v5559 = vrot.slane %v5517, 1
        %v5560 = vrot.slane %v5519, 1
        %v5561 = vrot.slane %v5521, 1
        %v5562 = vrot.slane %v5523, 1
        %v5563 = vrot.slane %v5525, 1
        %v5564 = vrot.slane %v5527, 1
        %v5565 = vrot.slane %v5529, 1
        %v5566 = vrot.slane %v5531, 1
        %v5567 = vrot.slane %v5533, 1
        %v5568 = vrot.slane %v5535, 1
        %v5569 = vrot.slane %v5537, 1
        %v5570 = vrot.slane %v5539, 1
        %v5571 = vrot.slane %v5541, 1
        %v5572 = vsel %vm2192, %v5542, %v5557
        %v5573 = vsel %vm2192, %v5543, %v5558
        %v5574 = vsel %vm2192, %v5544, %v5559
        %v5575 = vsel %vm2192, %v5545, %v5560
        %v5576 = vsel %vm2192, %v5546, %v5561
        %v5577 = vsel %vm2192, %v5547, %v5562
        %v5578 = vsel %vm2192, %v5548, %v5563
        %v5579 = vsel %vm2192, %v5549, %v5564
        %v5580 = vsel %vm2192, %v5550, %v5565
        %v5581 = vsel %vm2192, %v5551, %v5566
        %v5582 = vsel %vm2192, %v5552, %v5567
        %v5583 = vsel %vm2192, %v5553, %v5568
        %v5584 = vsel %vm2192, %v5554, %v5569
        %v5585 = vsel %vm2192, %v5555, %v5570
        %v5586 = vsel %vm2192, %v5556, %v5571
        %v5587 = vsel %vm2192, %v5557, %v5542
        %v5588 = vsel %vm2192, %v5558, %v5543
        %v5589 = vsel %vm2192, %v5559, %v5544
        %v5590 = vsel %vm2192, %v5560, %v5545
        %v5591 = vsel %vm2192, %v5561, %v5546
        %v5592 = vsel %vm2192, %v5562, %v5547
        %v5593 = vsel %vm2192, %v5563, %v5548
        %v5594 = vsel %vm2192, %v5564, %v5549
        %v5595 = vsel %vm2192, %v5565, %v5550
        %v5596 = vsel %vm2192, %v5566, %v5551
        %v5597 = vsel %vm2192, %v5567, %v5552
        %v5598 = vsel %vm2192, %v5568, %v5553
        %v5599 = vsel %vm2192, %v5569, %v5554
        %v5600 = vsel %vm2192, %v5570, %v5555
        %v5601 = vsel %vm2192, %v5571, %v5556
        %v5602 = vsel %vm2223, 0.0, %v5572
        %v5603 = vsel %vm2224, 0.0, %v5587
        %v5604 = vsel %vm2223, 0.0, %v5573
        %v5605 = vsel %vm2224, 0.0, %v5588
        %v5606 = vsel %vm2223, 0.0, %v5574
        %v5607 = vsel %vm2224, 0.0, %v5589
        %v5608 = vsel %vm2223, 0.0, %v5575
        %v5609 = vsel %vm2224, 0.0, %v5590
        %v5610 = vsel %vm2223, 0.0, %v5576
        %v5611 = vsel %vm2224, 0.0, %v5591
        %v5612 = vsel %vm2223, 0.0, %v5577
        %v5613 = vsel %vm2224, 0.0, %v5592
        %v5614 = vsel %vm2223, 0.0, %v5578
        %v5615 = vsel %vm2224, 0.0, %v5593
        %v5616 = vsel %vm2223, 0.0, %v5579
        %v5617 = vsel %vm2224, 0.0, %v5594
        %v5618 = vsel %vm2223, 0.0, %v5580
        %v5619 = vsel %vm2224, 0.0, %v5595
        %v5620 = vsel %vm2223, 0.0, %v5581
        %v5621 = vsel %vm2224, 0.0, %v5596
        %v5622 = vsel %vm2223, 0.0, %v5582
        %v5623 = vsel %vm2224, 0.0, %v5597
        %v5624 = vsel %vm2223, 0.0, %v5583
        %v5625 = vsel %vm2224, 0.0, %v5598
        %v5626 = vsel %vm2223, 0.0, %v5584
        %v5627 = vsel %vm2224, 0.0, %v5599
        %v5628 = vsel %vm2223, 0.0, %v5585
        %v5629 = vsel %vm2224, 0.0, %v5600
        %v5630 = vsel %vm2223, 0.0, %v5586
        %v5631 = vsel %vm2224, 0.0, %v5601
        %v5632 = vadd.f32 %v5055, %v5602
        %v5633 = vadd.f32 %v5056, %v5603
        %v5634 = vadd.f32 %v5057, %v5604
        %v5635 = vadd.f32 %v5058, %v5605
        %v5636 = vadd.f32 %v5059, %v5606
        %v5637 = vadd.f32 %v5060, %v5607
        %v5638 = vadd.f32 %v5061, %v5608
        %v5639 = vadd.f32 %v5062, %v5609
        %v5640 = vadd.f32 %v5063, %v5610
        %v5641 = vadd.f32 %v5064, %v5611
        %v5642 = vadd.f32 %v5065, %v5612
        %v5643 = vadd.f32 %v5066, %v5613
        %v5644 = vadd.f32 %v5067, %v5614
        %v5645 = vadd.f32 %v5068, %v5615
        %v5646 = vadd.f32 %v5069, %v5616
        %v5647 = vadd.f32 %v5070, %v5617
        %v5648 = vadd.f32 %v5071, %v5618
        %v5649 = vadd.f32 %v5072, %v5619
        %v5650 = vadd.f32 %v5073, %v5620
        %v5651 = vadd.f32 %v5074, %v5621
        %v5652 = vadd.f32 %v5075, %v5622
        %v5653 = vadd.f32 %v5076, %v5623
        %v5654 = vadd.f32 %v5077, %v5624
        %v5655 = vadd.f32 %v5078, %v5625
        %v5656 = vadd.f32 %v5079, %v5626
        %v5657 = vadd.f32 %v5080, %v5627
        %v5658 = vadd.f32 %v5081, %v5628
        %v5659 = vadd.f32 %v5082, %v5629
        %v5660 = vadd.f32 %v5083, %v5630
        %v5661 = vadd.f32 %v5084, %v5631
        %v5662 = vadd.f32 %v5085, 0.0
        %v5663 = vadd.f32 %v5086, 0.0
        %5664 = vst [vmem:[%s217] sm:$0xff] %v5632
        %5665 = vst [vmem:[%s217 + $0x8] sm:$0xff] %v5633
        %5666 = vst [vmem:[%s217 + $0x10] sm:$0xff] %v5634
        %5667 = vst [vmem:[%s217 + $0x18] sm:$0xff] %v5635
        %5668 = vst [vmem:[%s217 + $0x20] sm:$0xff] %v5636
        %5669 = vst [vmem:[%s217 + $0x28] sm:$0xff] %v5637
        %5670 = vst [vmem:[%s217 + $0x30] sm:$0xff] %v5638
        %5671 = vst [vmem:[%s217 + $0x38] sm:$0xff] %v5639
        %5672 = vst [vmem:[%s217 + $0x40] sm:$0xff] %v5640
        %5673 = vst [vmem:[%s217 + $0x48] sm:$0xff] %v5641
        %5674 = vst [vmem:[%s217 + $0x50] sm:$0xff] %v5642
        %5675 = vst [vmem:[%s217 + $0x58] sm:$0xff] %v5643
        %5676 = vst [vmem:[%s217 + $0x60] sm:$0xff] %v5644
        %5677 = vst [vmem:[%s217 + $0x68] sm:$0xff] %v5645
        %5678 = vst [vmem:[%s217 + $0x70] sm:$0xff] %v5646
        %5679 = vst [vmem:[%s217 + $0x78] sm:$0xff] %v5647
        %5680 = vst [vmem:[%s217 + $0x80] sm:$0xff] %v5648
        %5681 = vst [vmem:[%s217 + $0x88] sm:$0xff] %v5649
        %5682 = vst [vmem:[%s217 + $0x90] sm:$0xff] %v5650
        %5683 = vst [vmem:[%s217 + $0x98] sm:$0xff] %v5651
        %5684 = vst [vmem:[%s217 + $0xa0] sm:$0xff] %v5652
        %5685 = vst [vmem:[%s217 + $0xa8] sm:$0xff] %v5653
        %5686 = vst [vmem:[%s217 + $0xb0] sm:$0xff] %v5654
        %5687 = vst [vmem:[%s217 + $0xb8] sm:$0xff] %v5655
        %5688 = vst [vmem:[%s217 + $0xc0] sm:$0xff] %v5656
        %5689 = vst [vmem:[%s217 + $0xc8] sm:$0xff] %v5657
        %5690 = vst [vmem:[%s217 + $0xd0] sm:$0xff] %v5658
        %5691 = vst [vmem:[%s217 + $0xd8] sm:$0xff] %v5659
        %5692 = vst [vmem:[%s217 + $0xe0] sm:$0xff] %v5660
        %5693 = vst [vmem:[%s217 + $0xe8] sm:$0xff] %v5661
        %5694 = vst [vmem:[%s217 + $0xf0] sm:$0xff] %v5662
        %5695 = vst [vmem:[%s217 + $0xf8] sm:$0xff] %v5663
        %s5696 = sand.u32 %s98, 1
        %s5697 = scalar_lea.sflag [#allocation4], %s5696
        %s5698 = sand.u32 %s98, 1
        %s5699 = smul.addr %s5698, 256
        %s5700 = scalar_lea.vmem [#allocation7], %s5699
        // Predicated region
        $region37: #{tpu_custom_call.1} parent=27 // pred_check
          %p5701 = pneg %p108
        $region38: #{tpu_custom_call.1} parent=27 // pred_check_branch
          %5703 = sbr.rel (%p5701) target = $region40
        $region39: #{tpu_custom_call.1} parent=27 // pred_region
          %s5705 = ssub.s32 4096, 4096
          %5706 = vsyncadd %s5697, %s5705
          %s5707 = smul.addr %s26, 64
          %s5708 = sadd.s32 %s27, %s5707
          %s5709 = smul.addr %s5708, 128
          %s5710 = scalar_lea.hbm %s2, %s5709
          %s5711 = sshll.u32 %s5700, 4
          %s5712 = int_to_ptr.vmem [resolvable:$true] %s5711
          %5717 = dma.vmem_to_hbm [thread:$0]  %s5712, 4096, %s5710, %s5697, 128, 256, 8
        $region40: #{tpu_custom_call.1} parent=27 // pred_fallthru
          _
      $region28: #{tpu_custom_call.1} parent=5 // pred_fallthru
        _
      %p5718 = scmp.le.s32.totalorder 2, %s17
      // Predicated region
      $region41: #{tpu_custom_call.1} parent=5 // pred_check
        %p5719 = pneg %p5718
      $region42: #{tpu_custom_call.1} parent=5 // pred_check_branch
        %5721 = sbr.rel (%p5719) target = $region44
      $region43: #{tpu_custom_call.1} parent=5 // pred_region
        %s5722 = ssub.s32 %s17, 2
        // Predicated region
        $region45: #{tpu_custom_call.1} parent=43 // pred_check
          %p5723 = pneg %p114
        $region46: #{tpu_custom_call.1} parent=43 // pred_check_branch
          %5725 = sbr.rel (%p5723) target = $region48
        $region47: #{tpu_custom_call.1} parent=43 // pred_region
          %s5726 = sand.u32 %s99, 1
          %s5727 = scalar_lea.sflag [#allocation4], %s5726
          %s5728 = sand.u32 %s99, 1
          %s5729 = smul.addr %s5728, 256
          %s5730 = scalar_lea.vmem [#allocation7], %s5729
          %5731 = dma.done %s5727, 4096
        $region48: #{tpu_custom_call.1} parent=43 // pred_fallthru
          _
      $region44: #{tpu_custom_call.1} parent=5 // pred_fallthru
        _
    $region6: #{tpu_custom_call.1} parent=1 // loop_footer
      %s21 = sadd.s32 1, %s17
    $region7: #{tpu_custom_call.1} parent=1 // loop_footer_branch
      %16 = sbr.rel target = $region3
    $region8: #{tpu_custom_call.1} parent=1 // loop_exit
      _
    %5732 = vsyncpa [#allocation3], 1
    %s5733 = scalar_lea.sflag [#allocation3], 1
    %5734 = vsyncpa %s5733, 1
    %5735 = vsyncpa [#allocation6], 1
    %s5736 = scalar_lea.sflag [#allocation6], 1
    %5737 = vsyncpa %s5736, 1
    %5738 = vsyncpa [#allocation4], 1
    %s5739 = scalar_lea.sflag [#allocation4], 1
    %5740 = vsyncpa %s5739, 1

</llo_original>
